<compile_context>
chip_gen: v7x
topology: tpu7x:2x2x1
jax: 0.10.0
libtpu: 0.0.40
codegen_flags: <defaults>
</compile_context>

<pallas_src>
import jax
import jax.numpy as jnp
from jax.experimental import pallas as pl
from jax.experimental.pallas import tpu as pltpu

# ---------------------------- hyper-params (small, consistent) --------------
V_DIM = 64          # v_dim
L_DIM = 96          # l_dim
EMBED_DIM = 64      # embed_dim
NUM_HEADS = 8       # BiMultiHeadAttention heads -> head_dim 8
HEAD_DIM = EMBED_DIM // NUM_HEADS

NEG_FILL = -9.0e15
CLAMP = 50000.0
LN_EPS = 1e-5


# ---------------------------- in-kernel helpers ------------------------------
def _layernorm(x, g, b, eps):
    mean = jnp.mean(x, axis=-1, keepdims=True)
    var = jnp.mean(jnp.square(x - mean), axis=-1, keepdims=True)
    return (x - mean) * jax.lax.rsqrt(var + eps) * g + b


def _dot_bf16(a, b):
    # MXU matmul: bf16 inputs, f32 accumulate (single-pass full-rate MXU).
    return jnp.dot(a.astype(jnp.bfloat16), b.astype(jnp.bfloat16),
                   preferred_element_type=jnp.float32)


def _dot_nt_bf16(a, b):
    # a: (M, K), b: (N, K) -> (M, N) == a @ b.T without an explicit transpose.
    return jax.lax.dot_general(a.astype(jnp.bfloat16), b.astype(jnp.bfloat16),
                               (((1,), (1,)), ((), ())),
                               preferred_element_type=jnp.float32)


# ---------------------------- fused BiAttentionBlock kernel ------------------
def _bi_attention_block_kernel(
        v_ref, l_ref, m_ref,                      # activations + mask (per batch)
        lnv_g_ref, lnv_b_ref, lnl_g_ref, lnl_b_ref,
        w_vin_ref, b_vin_ref, w_lin_ref, b_lin_ref,
        w_ov_ref, b_ov_ref, w_ol_ref, b_ol_ref,
        gv_ref, gl_ref,
        ov_ref, ol_ref):
    x_v = v_ref[0].astype(jnp.float32)            # (Tv, V_DIM) residual input
    x_l = l_ref[0].astype(jnp.float32)            # (Tl, L_DIM) residual input
    t_l = x_l.shape[0]

    # LayerNorms (eps=1e-5, torch default) -- f32 VPU/EUP math.
    v = _layernorm(x_v, lnv_g_ref[...], lnv_b_ref[...], LN_EPS)
    l = _layernorm(x_l, lnl_g_ref[...], lnl_b_ref[...], LN_EPS)

    # Fused in-projections (lane-dense, 128 wide):
    #   qvv = [query (1/sqrt(Dh) already folded) | value_v]
    #   klv = [key                               | value_l]
    qvv = _dot_bf16(v, w_vin_ref[...]) + b_vin_ref[...]
    klv = _dot_bf16(l, w_lin_ref[...]) + b_lin_ref[...]
    q = qvv[:, :EMBED_DIM]
    vv = qvv[:, EMBED_DIM:]
    k = klv[:, :EMBED_DIM]
    vl = klv[:, EMBED_DIM:]

    # GLIP additive language mask: masked_fill(mask == 0, -9e15); non-zero
    # mask values are added to the visual-branch scores (as in the reference).
    m = m_ref[0].astype(jnp.float32)              # (1, Tl)
    mask_add = jnp.where(m == 0.0, NEG_FILL, m)

    w_ov = w_ov_ref[...]                          # (E, V_DIM)

    # Small-Tl head packing: collapse the 8 per-head AV+out-proj matmuls into
    # one full-contraction (Tv, H*Tl) @ (H*Tl, V_DIM) matmul.
    stacked = (NUM_HEADS * t_l) <= 256

    p_v_blocks, vo_blocks, o_l_blocks = [], [], []
    dv = None if stacked else jnp.zeros_like(x_v)

    # Static unroll over heads; all head state stays resident in vregs/VMEM.
    for h in range(NUM_HEADS):
        sl = slice(h * HEAD_DIM, (h + 1) * HEAD_DIM)
        q_h, k_h = q[:, sl], k[:, sl]             # (Tv, Dh), (Tl, Dh)
        vv_h, vl_h = vv[:, sl], vl[:, sl]

        # visual->language scores (q already scaled), clamp as in reference.
        w = jnp.clip(_dot_nt_bf16(q_h, k_h), -CLAMP, CLAMP)     # (Tv, Tl)

        # ---- language branch (softmax over visual tokens) ----
        if t_l >= 64:
            wl = w.T                              # XLU transpose (MXU has no slack)
        else:
            wl = jnp.clip(_dot_nt_bf16(k_h, q_h), -CLAMP, CLAMP)
        wl = jnp.clip(wl - jnp.max(wl, axis=-1, keepdims=True), -CLAMP, CLAMP)
        e_l = jnp.exp(wl)                         # row max is already 0
        p_l = e_l * (1.0 / jnp.sum(e_l, axis=-1, keepdims=True))
        o_l_blocks.append(_dot_bf16(p_l, vv_h))   # (Tl, Dh)  (keep K=Tv matmul)

        # ---- visual branch (softmax over language tokens) ----
        wv = w + mask_add
        wv = wv - jnp.max(wv, axis=-1, keepdims=True)
        e_v = jnp.exp(wv)
        p_v = e_v * (1.0 / jnp.sum(e_v, axis=-1, keepdims=True))

        # fold out_v_proj into value_l: tiny (Tl, Dh) @ (Dh, V_DIM) matmul
        vo_h = _dot_bf16(vl_h, w_ov[sl, :])       # (Tl, V_DIM)
        if stacked:
            p_v_blocks.append(p_v)
            vo_blocks.append(vo_h)
        else:
            dv = dv + _dot_bf16(p_v, vo_h)        # (Tv, V_DIM), K=Tl

    if stacked:
        p_cat = jnp.concatenate(p_v_blocks, axis=-1)            # (Tv, H*Tl)
        vo_stack = jnp.concatenate(vo_blocks, axis=0)           # (H*Tl, V_DIM)
        dv = _dot_bf16(p_cat, vo_stack)                         # one matmul
    dv = dv + b_ov_ref[...]

    # language head-merge + out_l_proj as ONE K=EMBED matmul
    o_l_cat = jnp.concatenate(o_l_blocks, axis=-1)              # (Tl, E)
    dl = _dot_bf16(o_l_cat, w_ol_ref[...]) + b_ol_ref[...]      # (Tl, L_DIM)

    # gamma-scaled residuals (drop_path = Identity, dropout in eval mode)
    ov_ref[0] = (x_v + gv_ref[...] * dv).astype(ov_ref.dtype)
    ol_ref[0] = (x_l + gl_ref[...] * dl).astype(ol_ref.dtype)


def _fused_bi_attention_block(params, vflat, lang_feats, mask3):
    """vflat: (B, Tv, V_DIM); lang_feats: (B, Tl, L_DIM); mask3: (B, 1, Tl)."""
    B, Tv, _ = vflat.shape
    Tl = lang_feats.shape[1]

    weight_list = [
        params["ln_v_g"], params["ln_v_b"], params["ln_l_g"], params["ln_l_b"],
        params["w_vin"], params["b_vin"], params["w_lin"], params["b_lin"],
        params["w_ov"], params["b_ov"], params["w_ol"], params["b_ol"],
        params["gamma_v"], params["gamma_l"],
    ]

    in_specs = [
        pl.BlockSpec((1, Tv, V_DIM), lambda b: (b, 0, 0)),
        pl.BlockSpec((1, Tl, L_DIM), lambda b: (b, 0, 0)),
        pl.BlockSpec((1, 1, Tl), lambda b: (b, 0, 0)),
    ] + [pl.BlockSpec(w.shape, lambda b: (0, 0)) for w in weight_list]

    out_specs = [
        pl.BlockSpec((1, Tv, V_DIM), lambda b: (b, 0, 0)),
        pl.BlockSpec((1, Tl, L_DIM), lambda b: (b, 0, 0)),
    ]
    out_shape = (jax.ShapeDtypeStruct((B, Tv, V_DIM), jnp.float32),
                 jax.ShapeDtypeStruct((B, Tl, L_DIM), jnp.float32))

    return pl.pallas_call(
        _bi_attention_block_kernel,
        grid=(B,),
        in_specs=in_specs,
        out_specs=out_specs,
        out_shape=out_shape,
        compiler_params=pltpu.CompilerParams(
            dimension_semantics=("parallel",)),
    )(vflat, lang_feats, mask3, *weight_list)


# ---------------------------- module-level forward (layout plumbing only) ----
def bi_attention_block_forward(params, visual_feats, visual_masks,
                               lang_feats, lang_masks):
    # visual_masks are unused by the reference forward; accepted for parity.
    del visual_masks
    B = visual_feats[0].shape[0]
    sizes, flat = [], []
    for f in visual_feats:
        b, c, h, w = f.shape
        sizes.append((h, w))
        flat.append(f.reshape(b, c, h * w).transpose(0, 2, 1))   # (B, hw, C)
    vflat = jnp.concatenate(flat, axis=1)                        # (B, Tv, C)
    Tl = lang_feats.shape[1]
    mask3 = lang_masks.astype(jnp.float32).reshape(B, 1, Tl)

    v_out, l_out = _fused_bi_attention_block(params, vflat, lang_feats, mask3)

    v_out = v_out.transpose(0, 2, 1)                             # (B, C, Tv)
    out_feats, start = [], 0
    for (h, w) in sizes:
        out_feats.append(v_out[:, :, start:start + h * w].reshape(B, V_DIM, h, w))
        start += h * w
    return out_feats, l_out


# ---------------------------- parameter init (deterministic) -----------------
def _xavier_uniform(key, fan_in, fan_out):
    bound = (6.0 / (fan_in + fan_out)) ** 0.5
    return jax.random.uniform(key, (fan_in, fan_out), jnp.float32, -bound, bound)


def init_params(key):
    ks = jax.random.split(key, 6)
    scale = HEAD_DIM ** (-0.5)
    w_q = _xavier_uniform(ks[0], V_DIM, EMBED_DIM)       # v_proj
    w_valv = _xavier_uniform(ks[1], V_DIM, EMBED_DIM)    # values_v_proj
    w_k = _xavier_uniform(ks[2], L_DIM, EMBED_DIM)       # l_proj
    w_vall = _xavier_uniform(ks[3], L_DIM, EMBED_DIM)    # values_l_proj
    w_ov = _xavier_uniform(ks[4], EMBED_DIM, V_DIM)      # out_v_proj
    w_ol = _xavier_uniform(ks[5], EMBED_DIM, L_DIM)      # out_l_proj
    b_q = jnp.zeros((EMBED_DIM,), jnp.float32)
    b_valv = jnp.zeros((EMBED_DIM,), jnp.float32)
    b_k = jnp.zeros((EMBED_DIM,), jnp.float32)
    b_vall = jnp.zeros((EMBED_DIM,), jnp.float32)
    return {
        "ln_v_g": jnp.ones((1, V_DIM), jnp.float32),
        "ln_v_b": jnp.zeros((1, V_DIM), jnp.float32),
        "ln_l_g": jnp.ones((1, L_DIM), jnp.float32),
        "ln_l_b": jnp.zeros((1, L_DIM), jnp.float32),
        # fused in-projections; 1/sqrt(head_dim) folded into the query half
        "w_vin": jnp.concatenate([w_q * scale, w_valv], axis=1),          # (V, 2E)
        "b_vin": jnp.concatenate([b_q * scale, b_valv]).reshape(1, 2 * EMBED_DIM),
        "w_lin": jnp.concatenate([w_k, w_vall], axis=1),                  # (L, 2E)
        "b_lin": jnp.concatenate([b_k, b_vall]).reshape(1, 2 * EMBED_DIM),
        "w_ov": w_ov, "b_ov": jnp.zeros((1, V_DIM), jnp.float32),
        "w_ol": w_ol, "b_ol": jnp.zeros((1, L_DIM), jnp.float32),
        "gamma_v": jnp.full((1, V_DIM), 0.125, jnp.float32),
        "gamma_l": jnp.full((1, L_DIM), 0.125, jnp.float32),
    }


# ---------------------------- main --------------------------------------------
if __name__ == "__main__":
    key = jax.random.PRNGKey(0)
    kp, k1, k2, k3, k4 = jax.random.split(key, 5)
    params = init_params(kp)

    B, Tl = 2, 8
    p3 = jax.random.normal(k1, (B, V_DIM, 8, 8), jnp.float32)
    p4 = jax.random.normal(k2, (B, V_DIM, 4, 4), jnp.float32)
    p5 = jax.random.normal(k3, (B, V_DIM, 2, 2), jnp.float32)
    lang_feats = jax.random.normal(k4, (B, Tl, L_DIM), jnp.float32)
    lang_masks = jnp.array([[1, 1, 1, 1, 1, 1, 0, 0],
                            [1, 1, 1, 1, 0, 0, 0, 0]], jnp.float32)
    visual_masks = [jnp.ones((B, 8, 8), jnp.float32),
                    jnp.ones((B, 4, 4), jnp.float32),
                    jnp.ones((B, 2, 2), jnp.float32)]

    forward = jax.jit(bi_attention_block_forward)
    visu_feat, l_out = forward(params, [p3, p4, p5], visual_masks,
                               lang_feats, lang_masks)
    jax.block_until_ready(l_out)
    for f in visu_feat:
        jax.block_until_ready(f)
    print("KERNEL_OK")
</pallas_src>

<mosaic_0001>
module attributes {stable_mosaic.version = 11 : i64} {
  func.func @_bi_attention_block_kernel(%arg0: i32, %arg1: memref<1x84x64xf32, #tpu.memory_space<vmem>>, %arg2: memref<1x8x96xf32, #tpu.memory_space<vmem>>, %arg3: memref<1x1x8xf32, #tpu.memory_space<vmem>>, %arg4: memref<1x64xf32, #tpu.memory_space<vmem>>, %arg5: memref<1x64xf32, #tpu.memory_space<vmem>>, %arg6: memref<1x96xf32, #tpu.memory_space<vmem>>, %arg7: memref<1x96xf32, #tpu.memory_space<vmem>>, %arg8: memref<64x128xf32, #tpu.memory_space<vmem>>, %arg9: memref<1x128xf32, #tpu.memory_space<vmem>>, %arg10: memref<96x128xf32, #tpu.memory_space<vmem>>, %arg11: memref<1x128xf32, #tpu.memory_space<vmem>>, %arg12: memref<64x64xf32, #tpu.memory_space<vmem>>, %arg13: memref<1x64xf32, #tpu.memory_space<vmem>>, %arg14: memref<64x96xf32, #tpu.memory_space<vmem>>, %arg15: memref<1x96xf32, #tpu.memory_space<vmem>>, %arg16: memref<1x64xf32, #tpu.memory_space<vmem>>, %arg17: memref<1x96xf32, #tpu.memory_space<vmem>>, %arg18: memref<1x84x64xf32, #tpu.memory_space<vmem>>, %arg19: memref<1x8x96xf32, #tpu.memory_space<vmem>>) attributes {dimension_semantics = [#tpu.dimension_semantics<parallel>], iteration_bounds = array<i64: 2>, scalar_prefetch = 0 : i64, scratch_operands = 0 : i64, tpu.core_type = #tpu.core_type<tc>, window_params = [{transform_indices = @transform_0, window_bounds = array<i64: 1, 84, 64>}, {transform_indices = @transform_1, window_bounds = array<i64: 1, 8, 96>}, {transform_indices = @transform_2, window_bounds = array<i64: 1, 1, 8>}, {pipeline_mode = #tpu.pipeline_mode<synchronous>, transform_indices = @transform_3, window_bounds = array<i64: 1, 64>}, {pipeline_mode = #tpu.pipeline_mode<synchronous>, transform_indices = @transform_4, window_bounds = array<i64: 1, 64>}, {pipeline_mode = #tpu.pipeline_mode<synchronous>, transform_indices = @transform_5, window_bounds = array<i64: 1, 96>}, {pipeline_mode = #tpu.pipeline_mode<synchronous>, transform_indices = @transform_6, window_bounds = array<i64: 1, 96>}, {pipeline_mode = #tpu.pipeline_mode<synchronous>, transform_indices = @transform_7, window_bounds = array<i64: 64, 128>}, {pipeline_mode = #tpu.pipeline_mode<synchronous>, transform_indices = @transform_8, window_bounds = array<i64: 1, 128>}, {pipeline_mode = #tpu.pipeline_mode<synchronous>, transform_indices = @transform_9, window_bounds = array<i64: 96, 128>}, {pipeline_mode = #tpu.pipeline_mode<synchronous>, transform_indices = @transform_10, window_bounds = array<i64: 1, 128>}, {pipeline_mode = #tpu.pipeline_mode<synchronous>, transform_indices = @transform_11, window_bounds = array<i64: 64, 64>}, {pipeline_mode = #tpu.pipeline_mode<synchronous>, transform_indices = @transform_12, window_bounds = array<i64: 1, 64>}, {pipeline_mode = #tpu.pipeline_mode<synchronous>, transform_indices = @transform_13, window_bounds = array<i64: 64, 96>}, {pipeline_mode = #tpu.pipeline_mode<synchronous>, transform_indices = @transform_14, window_bounds = array<i64: 1, 96>}, {pipeline_mode = #tpu.pipeline_mode<synchronous>, transform_indices = @transform_15, window_bounds = array<i64: 1, 64>}, {pipeline_mode = #tpu.pipeline_mode<synchronous>, transform_indices = @transform_16, window_bounds = array<i64: 1, 96>}, {transform_indices = @transform_17, window_bounds = array<i64: 1, 84, 64>}, {transform_indices = @transform_18, window_bounds = array<i64: 1, 8, 96>}]} {
    %c0 = arith.constant 0 : index
    %c0_0 = arith.constant 0 : index
    %c0_1 = arith.constant 0 : index
    %0 = vector.load %arg1[%c0, %c0_0, %c0_1] : memref<1x84x64xf32, #tpu.memory_space<vmem>>, vector<1x84x64xf32>
    %1 = vector.shape_cast %0 : vector<1x84x64xf32> to vector<84x64xf32>
    %c0_2 = arith.constant 0 : index
    %c0_3 = arith.constant 0 : index
    %c0_4 = arith.constant 0 : index
    %2 = vector.load %arg2[%c0_2, %c0_3, %c0_4] : memref<1x8x96xf32, #tpu.memory_space<vmem>>, vector<1x8x96xf32>
    %3 = vector.shape_cast %2 : vector<1x8x96xf32> to vector<8x96xf32>
    %c0_5 = arith.constant 0 : index
    %c0_6 = arith.constant 0 : index
    %4 = vector.load %arg4[%c0_5, %c0_6] : memref<1x64xf32, #tpu.memory_space<vmem>>, vector<1x64xf32>
    %c0_7 = arith.constant 0 : index
    %c0_8 = arith.constant 0 : index
    %5 = vector.load %arg5[%c0_7, %c0_8] : memref<1x64xf32, #tpu.memory_space<vmem>>, vector<1x64xf32>
    %cst = arith.constant dense<0.000000e+00> : vector<84xf32>
    %6 = vector.multi_reduction <add>, %1, %cst [1] : vector<84x64xf32> to vector<84xf32>
    %7 = vector.shape_cast %6 : vector<84xf32> to vector<84x1xf32>
    %cst_9 = arith.constant 6.400000e+01 : f32
    %8 = vector.broadcast %cst_9 : f32 to vector<84x1xf32>
    %9 = arith.divf %7, %8 : vector<84x1xf32>
    %10 = vector.broadcast %9 : vector<84x1xf32> to vector<84x64xf32>
    %11 = arith.subf %1, %10 : vector<84x64xf32>
    %12 = arith.mulf %11, %11 : vector<84x64xf32>
    %cst_10 = arith.constant dense<0.000000e+00> : vector<84xf32>
    %13 = vector.multi_reduction <add>, %12, %cst_10 [1] : vector<84x64xf32> to vector<84xf32>
    %14 = vector.shape_cast %13 : vector<84xf32> to vector<84x1xf32>
    %cst_11 = arith.constant 6.400000e+01 : f32
    %15 = vector.broadcast %cst_11 : f32 to vector<84x1xf32>
    %16 = arith.divf %14, %15 : vector<84x1xf32>
    %17 = vector.broadcast %9 : vector<84x1xf32> to vector<84x64xf32>
    %18 = arith.subf %1, %17 : vector<84x64xf32>
    %cst_12 = arith.constant 9.99999974E-6 : f32
    %19 = vector.broadcast %cst_12 : f32 to vector<84x1xf32>
    %20 = arith.addf %16, %19 : vector<84x1xf32>
    %21 = math.rsqrt %20 : vector<84x1xf32>
    %22 = vector.broadcast %21 : vector<84x1xf32> to vector<84x64xf32>
    %23 = arith.mulf %18, %22 : vector<84x64xf32>
    %24 = vector.broadcast %4 : vector<1x64xf32> to vector<84x64xf32>
    %25 = arith.mulf %23, %24 : vector<84x64xf32>
    %26 = vector.broadcast %5 : vector<1x64xf32> to vector<84x64xf32>
    %27 = arith.addf %25, %26 : vector<84x64xf32>
    %c0_13 = arith.constant 0 : index
    %c0_14 = arith.constant 0 : index
    %28 = vector.load %arg6[%c0_13, %c0_14] : memref<1x96xf32, #tpu.memory_space<vmem>>, vector<1x96xf32>
    %c0_15 = arith.constant 0 : index
    %c0_16 = arith.constant 0 : index
    %29 = vector.load %arg7[%c0_15, %c0_16] : memref<1x96xf32, #tpu.memory_space<vmem>>, vector<1x96xf32>
    %cst_17 = arith.constant dense<0.000000e+00> : vector<8xf32>
    %30 = vector.multi_reduction <add>, %3, %cst_17 [1] : vector<8x96xf32> to vector<8xf32>
    %31 = vector.shape_cast %30 : vector<8xf32> to vector<8x1xf32>
    %cst_18 = arith.constant 9.600000e+01 : f32
    %32 = vector.broadcast %cst_18 : f32 to vector<8x1xf32>
    %33 = arith.divf %31, %32 : vector<8x1xf32>
    %34 = vector.broadcast %33 : vector<8x1xf32> to vector<8x96xf32>
    %35 = arith.subf %3, %34 : vector<8x96xf32>
    %36 = arith.mulf %35, %35 : vector<8x96xf32>
    %cst_19 = arith.constant dense<0.000000e+00> : vector<8xf32>
    %37 = vector.multi_reduction <add>, %36, %cst_19 [1] : vector<8x96xf32> to vector<8xf32>
    %38 = vector.shape_cast %37 : vector<8xf32> to vector<8x1xf32>
    %cst_20 = arith.constant 9.600000e+01 : f32
    %39 = vector.broadcast %cst_20 : f32 to vector<8x1xf32>
    %40 = arith.divf %38, %39 : vector<8x1xf32>
    %41 = vector.broadcast %33 : vector<8x1xf32> to vector<8x96xf32>
    %42 = arith.subf %3, %41 : vector<8x96xf32>
    %cst_21 = arith.constant 9.99999974E-6 : f32
    %43 = vector.broadcast %cst_21 : f32 to vector<8x1xf32>
    %44 = arith.addf %40, %43 : vector<8x1xf32>
    %45 = math.rsqrt %44 : vector<8x1xf32>
    %46 = vector.broadcast %45 : vector<8x1xf32> to vector<8x96xf32>
    %47 = arith.mulf %42, %46 : vector<8x96xf32>
    %48 = vector.broadcast %28 : vector<1x96xf32> to vector<8x96xf32>
    %49 = arith.mulf %47, %48 : vector<8x96xf32>
    %50 = vector.broadcast %29 : vector<1x96xf32> to vector<8x96xf32>
    %51 = arith.addf %49, %50 : vector<8x96xf32>
    %c0_22 = arith.constant 0 : index
    %c0_23 = arith.constant 0 : index
    %52 = vector.load %arg8[%c0_22, %c0_23] : memref<64x128xf32, #tpu.memory_space<vmem>>, vector<64x128xf32>
    %53 = arith.truncf %27 : vector<84x64xf32> to vector<84x64xbf16>
    %54 = arith.truncf %52 : vector<64x128xf32> to vector<64x128xbf16>
    %cst_24 = arith.constant dense<0.000000e+00> : vector<84x128xf32>
    %55 = tpu.matmul %53, %54, %cst_24 {dimension_numbers = #tpu.dot_dimension_numbers<[1], [0], [0], [1], [0, 0, 1, 1], [], []>} : vector<84x64xbf16>, vector<64x128xbf16>, vector<84x128xf32> -> vector<84x128xf32>
    %c0_25 = arith.constant 0 : index
    %c0_26 = arith.constant 0 : index
    %56 = vector.load %arg9[%c0_25, %c0_26] : memref<1x128xf32, #tpu.memory_space<vmem>>, vector<1x128xf32>
    %57 = vector.broadcast %56 : vector<1x128xf32> to vector<84x128xf32>
    %58 = arith.addf %55, %57 : vector<84x128xf32>
    %c0_27 = arith.constant 0 : index
    %c0_28 = arith.constant 0 : index
    %59 = vector.load %arg10[%c0_27, %c0_28] : memref<96x128xf32, #tpu.memory_space<vmem>>, vector<96x128xf32>
    %60 = arith.truncf %51 : vector<8x96xf32> to vector<8x96xbf16>
    %61 = arith.truncf %59 : vector<96x128xf32> to vector<96x128xbf16>
    %cst_29 = arith.constant dense<0.000000e+00> : vector<8x128xf32>
    %62 = tpu.matmul %60, %61, %cst_29 {dimension_numbers = #tpu.dot_dimension_numbers<[1], [0], [0], [1], [0, 0, 1, 1], [], []>} : vector<8x96xbf16>, vector<96x128xbf16>, vector<8x128xf32> -> vector<8x128xf32>
    %c0_30 = arith.constant 0 : index
    %c0_31 = arith.constant 0 : index
    %63 = vector.load %arg11[%c0_30, %c0_31] : memref<1x128xf32, #tpu.memory_space<vmem>>, vector<1x128xf32>
    %64 = vector.broadcast %63 : vector<1x128xf32> to vector<8x128xf32>
    %65 = arith.addf %62, %64 : vector<8x128xf32>
    %66 = vector.extract_strided_slice %58 {offsets = [0, 0], sizes = [84, 64], strides = [1, 1]} : vector<84x128xf32> to vector<84x64xf32>
    %67 = vector.extract_strided_slice %58 {offsets = [0, 64], sizes = [84, 64], strides = [1, 1]} : vector<84x128xf32> to vector<84x64xf32>
    %68 = vector.extract_strided_slice %65 {offsets = [0, 0], sizes = [8, 64], strides = [1, 1]} : vector<8x128xf32> to vector<8x64xf32>
    %69 = vector.extract_strided_slice %65 {offsets = [0, 64], sizes = [8, 64], strides = [1, 1]} : vector<8x128xf32> to vector<8x64xf32>
    %c0_32 = arith.constant 0 : index
    %c0_33 = arith.constant 0 : index
    %c0_34 = arith.constant 0 : index
    %70 = vector.load %arg3[%c0_32, %c0_33, %c0_34] : memref<1x1x8xf32, #tpu.memory_space<vmem>>, vector<1x1x8xf32>
    %71 = vector.shape_cast %70 : vector<1x1x8xf32> to vector<1x8xf32>
    %cst_35 = arith.constant 0.000000e+00 : f32
    %72 = vector.broadcast %cst_35 : f32 to vector<1x8xf32>
    %73 = arith.cmpf oeq, %71, %72 : vector<1x8xf32>
    %cst_36 = arith.constant -9.000000e+15 : f32
    %74 = vector.broadcast %cst_36 : f32 to vector<1x8xf32>
    %75 = arith.select %73, %74, %71 : vector<1x8xi1>, vector<1x8xf32>
    %c0_37 = arith.constant 0 : index
    %c0_38 = arith.constant 0 : index
    %76 = vector.load %arg12[%c0_37, %c0_38] : memref<64x64xf32, #tpu.memory_space<vmem>>, vector<64x64xf32>
    %77 = vector.extract_strided_slice %66 {offsets = [0, 0], sizes = [84, 8], strides = [1, 1]} : vector<84x64xf32> to vector<84x8xf32>
    %78 = vector.extract_strided_slice %68 {offsets = [0, 0], sizes = [8, 8], strides = [1, 1]} : vector<8x64xf32> to vector<8x8xf32>
    %79 = vector.extract_strided_slice %67 {offsets = [0, 0], sizes = [84, 8], strides = [1, 1]} : vector<84x64xf32> to vector<84x8xf32>
    %80 = vector.extract_strided_slice %69 {offsets = [0, 0], sizes = [8, 8], strides = [1, 1]} : vector<8x64xf32> to vector<8x8xf32>
    %81 = arith.truncf %77 : vector<84x8xf32> to vector<84x8xbf16>
    %82 = arith.truncf %78 : vector<8x8xf32> to vector<8x8xbf16>
    %cst_39 = arith.constant dense<0.000000e+00> : vector<84x8xf32>
    %83 = tpu.matmul %81, %82, %cst_39 {dimension_numbers = #tpu.dot_dimension_numbers<[1], [1], [0], [0], [0, 0, 1, 0], [], []>} : vector<84x8xbf16>, vector<8x8xbf16>, vector<84x8xf32> -> vector<84x8xf32>
    %cst_40 = arith.constant -5.000000e+04 : f32
    %cst_41 = arith.constant 5.000000e+04 : f32
    %84 = vector.broadcast %cst_40 : f32 to vector<84x8xf32>
    %85 = arith.maximumf %84, %83 : vector<84x8xf32>
    %86 = vector.broadcast %cst_41 : f32 to vector<84x8xf32>
    %87 = arith.minimumf %86, %85 : vector<84x8xf32>
    %88 = arith.truncf %78 : vector<8x8xf32> to vector<8x8xbf16>
    %89 = arith.truncf %77 : vector<84x8xf32> to vector<84x8xbf16>
    %cst_42 = arith.constant dense<0.000000e+00> : vector<8x84xf32>
    %90 = tpu.matmul %88, %89, %cst_42 {dimension_numbers = #tpu.dot_dimension_numbers<[1], [1], [0], [0], [0, 0, 1, 0], [], []>} : vector<8x8xbf16>, vector<84x8xbf16>, vector<8x84xf32> -> vector<8x84xf32>
    %cst_43 = arith.constant -5.000000e+04 : f32
    %cst_44 = arith.constant 5.000000e+04 : f32
    %91 = vector.broadcast %cst_43 : f32 to vector<8x84xf32>
    %92 = arith.maximumf %91, %90 : vector<8x84xf32>
    %93 = vector.broadcast %cst_44 : f32 to vector<8x84xf32>
    %94 = arith.minimumf %93, %92 : vector<8x84xf32>
    %cst_45 = arith.constant dense<0xFF800000> : vector<8xf32>
    %95 = vector.multi_reduction <maximumf>, %94, %cst_45 [1] : vector<8x84xf32> to vector<8xf32>
    %96 = vector.shape_cast %95 : vector<8xf32> to vector<8x1xf32>
    %97 = vector.broadcast %96 : vector<8x1xf32> to vector<8x84xf32>
    %98 = arith.subf %94, %97 : vector<8x84xf32>
    %cst_46 = arith.constant -5.000000e+04 : f32
    %cst_47 = arith.constant 5.000000e+04 : f32
    %99 = vector.broadcast %cst_46 : f32 to vector<8x84xf32>
    %100 = arith.maximumf %99, %98 : vector<8x84xf32>
    %101 = vector.broadcast %cst_47 : f32 to vector<8x84xf32>
    %102 = arith.minimumf %101, %100 : vector<8x84xf32>
    %103 = math.exp %102 : vector<8x84xf32>
    %cst_48 = arith.constant dense<0.000000e+00> : vector<8xf32>
    %104 = vector.multi_reduction <add>, %103, %cst_48 [1] : vector<8x84xf32> to vector<8xf32>
    %105 = vector.shape_cast %104 : vector<8xf32> to vector<8x1xf32>
    %cst_49 = arith.constant 1.000000e+00 : f32
    %106 = vector.broadcast %cst_49 : f32 to vector<8x1xf32>
    %107 = arith.divf %106, %105 : vector<8x1xf32>
    %108 = vector.broadcast %107 : vector<8x1xf32> to vector<8x84xf32>
    %109 = arith.mulf %103, %108 : vector<8x84xf32>
    %110 = arith.truncf %109 : vector<8x84xf32> to vector<8x84xbf16>
    %111 = arith.truncf %79 : vector<84x8xf32> to vector<84x8xbf16>
    %cst_50 = arith.constant dense<0.000000e+00> : vector<8x8xf32>
    %112 = tpu.matmul %110, %111, %cst_50 {dimension_numbers = #tpu.dot_dimension_numbers<[1], [0], [0], [1], [0, 0, 1, 1], [], []>} : vector<8x84xbf16>, vector<84x8xbf16>, vector<8x8xf32> -> vector<8x8xf32>
    %113 = vector.broadcast %75 : vector<1x8xf32> to vector<84x8xf32>
    %114 = arith.addf %87, %113 : vector<84x8xf32>
    %cst_51 = arith.constant dense<0xFF800000> : vector<84xf32>
    %115 = vector.multi_reduction <maximumf>, %114, %cst_51 [1] : vector<84x8xf32> to vector<84xf32>
    %116 = vector.shape_cast %115 : vector<84xf32> to vector<84x1xf32>
    %117 = vector.broadcast %116 : vector<84x1xf32> to vector<84x8xf32>
    %118 = arith.subf %114, %117 : vector<84x8xf32>
    %119 = math.exp %118 : vector<84x8xf32>
    %cst_52 = arith.constant dense<0.000000e+00> : vector<84xf32>
    %120 = vector.multi_reduction <add>, %119, %cst_52 [1] : vector<84x8xf32> to vector<84xf32>
    %121 = vector.shape_cast %120 : vector<84xf32> to vector<84x1xf32>
    %cst_53 = arith.constant 1.000000e+00 : f32
    %122 = vector.broadcast %cst_53 : f32 to vector<84x1xf32>
    %123 = arith.divf %122, %121 : vector<84x1xf32>
    %124 = vector.broadcast %123 : vector<84x1xf32> to vector<84x8xf32>
    %125 = arith.mulf %119, %124 : vector<84x8xf32>
    %126 = vector.extract_strided_slice %76 {offsets = [0, 0], sizes = [8, 64], strides = [1, 1]} : vector<64x64xf32> to vector<8x64xf32>
    %127 = arith.truncf %80 : vector<8x8xf32> to vector<8x8xbf16>
    %128 = arith.truncf %126 : vector<8x64xf32> to vector<8x64xbf16>
    %cst_54 = arith.constant dense<0.000000e+00> : vector<8x64xf32>
    %129 = tpu.matmul %127, %128, %cst_54 {dimension_numbers = #tpu.dot_dimension_numbers<[1], [0], [0], [1], [0, 0, 1, 1], [], []>} : vector<8x8xbf16>, vector<8x64xbf16>, vector<8x64xf32> -> vector<8x64xf32>
    %130 = vector.extract_strided_slice %66 {offsets = [0, 8], sizes = [84, 8], strides = [1, 1]} : vector<84x64xf32> to vector<84x8xf32>
    %131 = vector.extract_strided_slice %68 {offsets = [0, 8], sizes = [8, 8], strides = [1, 1]} : vector<8x64xf32> to vector<8x8xf32>
    %132 = vector.extract_strided_slice %67 {offsets = [0, 8], sizes = [84, 8], strides = [1, 1]} : vector<84x64xf32> to vector<84x8xf32>
    %133 = vector.extract_strided_slice %69 {offsets = [0, 8], sizes = [8, 8], strides = [1, 1]} : vector<8x64xf32> to vector<8x8xf32>
    %134 = arith.truncf %130 : vector<84x8xf32> to vector<84x8xbf16>
    %135 = arith.truncf %131 : vector<8x8xf32> to vector<8x8xbf16>
    %cst_55 = arith.constant dense<0.000000e+00> : vector<84x8xf32>
    %136 = tpu.matmul %134, %135, %cst_55 {dimension_numbers = #tpu.dot_dimension_numbers<[1], [1], [0], [0], [0, 0, 1, 0], [], []>} : vector<84x8xbf16>, vector<8x8xbf16>, vector<84x8xf32> -> vector<84x8xf32>
    %cst_56 = arith.constant -5.000000e+04 : f32
    %cst_57 = arith.constant 5.000000e+04 : f32
    %137 = vector.broadcast %cst_56 : f32 to vector<84x8xf32>
    %138 = arith.maximumf %137, %136 : vector<84x8xf32>
    %139 = vector.broadcast %cst_57 : f32 to vector<84x8xf32>
    %140 = arith.minimumf %139, %138 : vector<84x8xf32>
    %141 = arith.truncf %131 : vector<8x8xf32> to vector<8x8xbf16>
    %142 = arith.truncf %130 : vector<84x8xf32> to vector<84x8xbf16>
    %cst_58 = arith.constant dense<0.000000e+00> : vector<8x84xf32>
    %143 = tpu.matmul %141, %142, %cst_58 {dimension_numbers = #tpu.dot_dimension_numbers<[1], [1], [0], [0], [0, 0, 1, 0], [], []>} : vector<8x8xbf16>, vector<84x8xbf16>, vector<8x84xf32> -> vector<8x84xf32>
    %cst_59 = arith.constant -5.000000e+04 : f32
    %cst_60 = arith.constant 5.000000e+04 : f32
    %144 = vector.broadcast %cst_59 : f32 to vector<8x84xf32>
    %145 = arith.maximumf %144, %143 : vector<8x84xf32>
    %146 = vector.broadcast %cst_60 : f32 to vector<8x84xf32>
    %147 = arith.minimumf %146, %145 : vector<8x84xf32>
    %cst_61 = arith.constant dense<0xFF800000> : vector<8xf32>
    %148 = vector.multi_reduction <maximumf>, %147, %cst_61 [1] : vector<8x84xf32> to vector<8xf32>
    %149 = vector.shape_cast %148 : vector<8xf32> to vector<8x1xf32>
    %150 = vector.broadcast %149 : vector<8x1xf32> to vector<8x84xf32>
    %151 = arith.subf %147, %150 : vector<8x84xf32>
    %cst_62 = arith.constant -5.000000e+04 : f32
    %cst_63 = arith.constant 5.000000e+04 : f32
    %152 = vector.broadcast %cst_62 : f32 to vector<8x84xf32>
    %153 = arith.maximumf %152, %151 : vector<8x84xf32>
    %154 = vector.broadcast %cst_63 : f32 to vector<8x84xf32>
    %155 = arith.minimumf %154, %153 : vector<8x84xf32>
    %156 = math.exp %155 : vector<8x84xf32>
    %cst_64 = arith.constant dense<0.000000e+00> : vector<8xf32>
    %157 = vector.multi_reduction <add>, %156, %cst_64 [1] : vector<8x84xf32> to vector<8xf32>
    %158 = vector.shape_cast %157 : vector<8xf32> to vector<8x1xf32>
    %cst_65 = arith.constant 1.000000e+00 : f32
    %159 = vector.broadcast %cst_65 : f32 to vector<8x1xf32>
    %160 = arith.divf %159, %158 : vector<8x1xf32>
    %161 = vector.broadcast %160 : vector<8x1xf32> to vector<8x84xf32>
    %162 = arith.mulf %156, %161 : vector<8x84xf32>
    %163 = arith.truncf %162 : vector<8x84xf32> to vector<8x84xbf16>
    %164 = arith.truncf %132 : vector<84x8xf32> to vector<84x8xbf16>
    %cst_66 = arith.constant dense<0.000000e+00> : vector<8x8xf32>
    %165 = tpu.matmul %163, %164, %cst_66 {dimension_numbers = #tpu.dot_dimension_numbers<[1], [0], [0], [1], [0, 0, 1, 1], [], []>} : vector<8x84xbf16>, vector<84x8xbf16>, vector<8x8xf32> -> vector<8x8xf32>
    %166 = vector.broadcast %75 : vector<1x8xf32> to vector<84x8xf32>
    %167 = arith.addf %140, %166 : vector<84x8xf32>
    %cst_67 = arith.constant dense<0xFF800000> : vector<84xf32>
    %168 = vector.multi_reduction <maximumf>, %167, %cst_67 [1] : vector<84x8xf32> to vector<84xf32>
    %169 = vector.shape_cast %168 : vector<84xf32> to vector<84x1xf32>
    %170 = vector.broadcast %169 : vector<84x1xf32> to vector<84x8xf32>
    %171 = arith.subf %167, %170 : vector<84x8xf32>
    %172 = math.exp %171 : vector<84x8xf32>
    %cst_68 = arith.constant dense<0.000000e+00> : vector<84xf32>
    %173 = vector.multi_reduction <add>, %172, %cst_68 [1] : vector<84x8xf32> to vector<84xf32>
    %174 = vector.shape_cast %173 : vector<84xf32> to vector<84x1xf32>
    %cst_69 = arith.constant 1.000000e+00 : f32
    %175 = vector.broadcast %cst_69 : f32 to vector<84x1xf32>
    %176 = arith.divf %175, %174 : vector<84x1xf32>
    %177 = vector.broadcast %176 : vector<84x1xf32> to vector<84x8xf32>
    %178 = arith.mulf %172, %177 : vector<84x8xf32>
    %179 = vector.extract_strided_slice %76 {offsets = [8, 0], sizes = [8, 64], strides = [1, 1]} : vector<64x64xf32> to vector<8x64xf32>
    %180 = arith.truncf %133 : vector<8x8xf32> to vector<8x8xbf16>
    %181 = arith.truncf %179 : vector<8x64xf32> to vector<8x64xbf16>
    %cst_70 = arith.constant dense<0.000000e+00> : vector<8x64xf32>
    %182 = tpu.matmul %180, %181, %cst_70 {dimension_numbers = #tpu.dot_dimension_numbers<[1], [0], [0], [1], [0, 0, 1, 1], [], []>} : vector<8x8xbf16>, vector<8x64xbf16>, vector<8x64xf32> -> vector<8x64xf32>
    %183 = vector.extract_strided_slice %66 {offsets = [0, 16], sizes = [84, 8], strides = [1, 1]} : vector<84x64xf32> to vector<84x8xf32>
    %184 = vector.extract_strided_slice %68 {offsets = [0, 16], sizes = [8, 8], strides = [1, 1]} : vector<8x64xf32> to vector<8x8xf32>
    %185 = vector.extract_strided_slice %67 {offsets = [0, 16], sizes = [84, 8], strides = [1, 1]} : vector<84x64xf32> to vector<84x8xf32>
    %186 = vector.extract_strided_slice %69 {offsets = [0, 16], sizes = [8, 8], strides = [1, 1]} : vector<8x64xf32> to vector<8x8xf32>
    %187 = arith.truncf %183 : vector<84x8xf32> to vector<84x8xbf16>
    %188 = arith.truncf %184 : vector<8x8xf32> to vector<8x8xbf16>
    %cst_71 = arith.constant dense<0.000000e+00> : vector<84x8xf32>
    %189 = tpu.matmul %187, %188, %cst_71 {dimension_numbers = #tpu.dot_dimension_numbers<[1], [1], [0], [0], [0, 0, 1, 0], [], []>} : vector<84x8xbf16>, vector<8x8xbf16>, vector<84x8xf32> -> vector<84x8xf32>
    %cst_72 = arith.constant -5.000000e+04 : f32
    %cst_73 = arith.constant 5.000000e+04 : f32
    %190 = vector.broadcast %cst_72 : f32 to vector<84x8xf32>
    %191 = arith.maximumf %190, %189 : vector<84x8xf32>
    %192 = vector.broadcast %cst_73 : f32 to vector<84x8xf32>
    %193 = arith.minimumf %192, %191 : vector<84x8xf32>
    %194 = arith.truncf %184 : vector<8x8xf32> to vector<8x8xbf16>
    %195 = arith.truncf %183 : vector<84x8xf32> to vector<84x8xbf16>
    %cst_74 = arith.constant dense<0.000000e+00> : vector<8x84xf32>
    %196 = tpu.matmul %194, %195, %cst_74 {dimension_numbers = #tpu.dot_dimension_numbers<[1], [1], [0], [0], [0, 0, 1, 0], [], []>} : vector<8x8xbf16>, vector<84x8xbf16>, vector<8x84xf32> -> vector<8x84xf32>
    %cst_75 = arith.constant -5.000000e+04 : f32
    %cst_76 = arith.constant 5.000000e+04 : f32
    %197 = vector.broadcast %cst_75 : f32 to vector<8x84xf32>
    %198 = arith.maximumf %197, %196 : vector<8x84xf32>
    %199 = vector.broadcast %cst_76 : f32 to vector<8x84xf32>
    %200 = arith.minimumf %199, %198 : vector<8x84xf32>
    %cst_77 = arith.constant dense<0xFF800000> : vector<8xf32>
    %201 = vector.multi_reduction <maximumf>, %200, %cst_77 [1] : vector<8x84xf32> to vector<8xf32>
    %202 = vector.shape_cast %201 : vector<8xf32> to vector<8x1xf32>
    %203 = vector.broadcast %202 : vector<8x1xf32> to vector<8x84xf32>
    %204 = arith.subf %200, %203 : vector<8x84xf32>
    %cst_78 = arith.constant -5.000000e+04 : f32
    %cst_79 = arith.constant 5.000000e+04 : f32
    %205 = vector.broadcast %cst_78 : f32 to vector<8x84xf32>
    %206 = arith.maximumf %205, %204 : vector<8x84xf32>
    %207 = vector.broadcast %cst_79 : f32 to vector<8x84xf32>
    %208 = arith.minimumf %207, %206 : vector<8x84xf32>
    %209 = math.exp %208 : vector<8x84xf32>
    %cst_80 = arith.constant dense<0.000000e+00> : vector<8xf32>
    %210 = vector.multi_reduction <add>, %209, %cst_80 [1] : vector<8x84xf32> to vector<8xf32>
    %211 = vector.shape_cast %210 : vector<8xf32> to vector<8x1xf32>
    %cst_81 = arith.constant 1.000000e+00 : f32
    %212 = vector.broadcast %cst_81 : f32 to vector<8x1xf32>
    %213 = arith.divf %212, %211 : vector<8x1xf32>
    %214 = vector.broadcast %213 : vector<8x1xf32> to vector<8x84xf32>
    %215 = arith.mulf %209, %214 : vector<8x84xf32>
    %216 = arith.truncf %215 : vector<8x84xf32> to vector<8x84xbf16>
    %217 = arith.truncf %185 : vector<84x8xf32> to vector<84x8xbf16>
    %cst_82 = arith.constant dense<0.000000e+00> : vector<8x8xf32>
    %218 = tpu.matmul %216, %217, %cst_82 {dimension_numbers = #tpu.dot_dimension_numbers<[1], [0], [0], [1], [0, 0, 1, 1], [], []>} : vector<8x84xbf16>, vector<84x8xbf16>, vector<8x8xf32> -> vector<8x8xf32>
    %219 = vector.broadcast %75 : vector<1x8xf32> to vector<84x8xf32>
    %220 = arith.addf %193, %219 : vector<84x8xf32>
    %cst_83 = arith.constant dense<0xFF800000> : vector<84xf32>
    %221 = vector.multi_reduction <maximumf>, %220, %cst_83 [1] : vector<84x8xf32> to vector<84xf32>
    %222 = vector.shape_cast %221 : vector<84xf32> to vector<84x1xf32>
    %223 = vector.broadcast %222 : vector<84x1xf32> to vector<84x8xf32>
    %224 = arith.subf %220, %223 : vector<84x8xf32>
    %225 = math.exp %224 : vector<84x8xf32>
    %cst_84 = arith.constant dense<0.000000e+00> : vector<84xf32>
    %226 = vector.multi_reduction <add>, %225, %cst_84 [1] : vector<84x8xf32> to vector<84xf32>
    %227 = vector.shape_cast %226 : vector<84xf32> to vector<84x1xf32>
    %cst_85 = arith.constant 1.000000e+00 : f32
    %228 = vector.broadcast %cst_85 : f32 to vector<84x1xf32>
    %229 = arith.divf %228, %227 : vector<84x1xf32>
    %230 = vector.broadcast %229 : vector<84x1xf32> to vector<84x8xf32>
    %231 = arith.mulf %225, %230 : vector<84x8xf32>
    %232 = vector.extract_strided_slice %76 {offsets = [16, 0], sizes = [8, 64], strides = [1, 1]} : vector<64x64xf32> to vector<8x64xf32>
    %233 = arith.truncf %186 : vector<8x8xf32> to vector<8x8xbf16>
    %234 = arith.truncf %232 : vector<8x64xf32> to vector<8x64xbf16>
    %cst_86 = arith.constant dense<0.000000e+00> : vector<8x64xf32>
    %235 = tpu.matmul %233, %234, %cst_86 {dimension_numbers = #tpu.dot_dimension_numbers<[1], [0], [0], [1], [0, 0, 1, 1], [], []>} : vector<8x8xbf16>, vector<8x64xbf16>, vector<8x64xf32> -> vector<8x64xf32>
    %236 = vector.extract_strided_slice %66 {offsets = [0, 24], sizes = [84, 8], strides = [1, 1]} : vector<84x64xf32> to vector<84x8xf32>
    %237 = vector.extract_strided_slice %68 {offsets = [0, 24], sizes = [8, 8], strides = [1, 1]} : vector<8x64xf32> to vector<8x8xf32>
    %238 = vector.extract_strided_slice %67 {offsets = [0, 24], sizes = [84, 8], strides = [1, 1]} : vector<84x64xf32> to vector<84x8xf32>
    %239 = vector.extract_strided_slice %69 {offsets = [0, 24], sizes = [8, 8], strides = [1, 1]} : vector<8x64xf32> to vector<8x8xf32>
    %240 = arith.truncf %236 : vector<84x8xf32> to vector<84x8xbf16>
    %241 = arith.truncf %237 : vector<8x8xf32> to vector<8x8xbf16>
    %cst_87 = arith.constant dense<0.000000e+00> : vector<84x8xf32>
    %242 = tpu.matmul %240, %241, %cst_87 {dimension_numbers = #tpu.dot_dimension_numbers<[1], [1], [0], [0], [0, 0, 1, 0], [], []>} : vector<84x8xbf16>, vector<8x8xbf16>, vector<84x8xf32> -> vector<84x8xf32>
    %cst_88 = arith.constant -5.000000e+04 : f32
    %cst_89 = arith.constant 5.000000e+04 : f32
    %243 = vector.broadcast %cst_88 : f32 to vector<84x8xf32>
    %244 = arith.maximumf %243, %242 : vector<84x8xf32>
    %245 = vector.broadcast %cst_89 : f32 to vector<84x8xf32>
    %246 = arith.minimumf %245, %244 : vector<84x8xf32>
    %247 = arith.truncf %237 : vector<8x8xf32> to vector<8x8xbf16>
    %248 = arith.truncf %236 : vector<84x8xf32> to vector<84x8xbf16>
    %cst_90 = arith.constant dense<0.000000e+00> : vector<8x84xf32>
    %249 = tpu.matmul %247, %248, %cst_90 {dimension_numbers = #tpu.dot_dimension_numbers<[1], [1], [0], [0], [0, 0, 1, 0], [], []>} : vector<8x8xbf16>, vector<84x8xbf16>, vector<8x84xf32> -> vector<8x84xf32>
    %cst_91 = arith.constant -5.000000e+04 : f32
    %cst_92 = arith.constant 5.000000e+04 : f32
    %250 = vector.broadcast %cst_91 : f32 to vector<8x84xf32>
    %251 = arith.maximumf %250, %249 : vector<8x84xf32>
    %252 = vector.broadcast %cst_92 : f32 to vector<8x84xf32>
    %253 = arith.minimumf %252, %251 : vector<8x84xf32>
    %cst_93 = arith.constant dense<0xFF800000> : vector<8xf32>
    %254 = vector.multi_reduction <maximumf>, %253, %cst_93 [1] : vector<8x84xf32> to vector<8xf32>
    %255 = vector.shape_cast %254 : vector<8xf32> to vector<8x1xf32>
    %256 = vector.broadcast %255 : vector<8x1xf32> to vector<8x84xf32>
    %257 = arith.subf %253, %256 : vector<8x84xf32>
    %cst_94 = arith.constant -5.000000e+04 : f32
    %cst_95 = arith.constant 5.000000e+04 : f32
    %258 = vector.broadcast %cst_94 : f32 to vector<8x84xf32>
    %259 = arith.maximumf %258, %257 : vector<8x84xf32>
    %260 = vector.broadcast %cst_95 : f32 to vector<8x84xf32>
    %261 = arith.minimumf %260, %259 : vector<8x84xf32>
    %262 = math.exp %261 : vector<8x84xf32>
    %cst_96 = arith.constant dense<0.000000e+00> : vector<8xf32>
    %263 = vector.multi_reduction <add>, %262, %cst_96 [1] : vector<8x84xf32> to vector<8xf32>
    %264 = vector.shape_cast %263 : vector<8xf32> to vector<8x1xf32>
    %cst_97 = arith.constant 1.000000e+00 : f32
    %265 = vector.broadcast %cst_97 : f32 to vector<8x1xf32>
    %266 = arith.divf %265, %264 : vector<8x1xf32>
    %267 = vector.broadcast %266 : vector<8x1xf32> to vector<8x84xf32>
    %268 = arith.mulf %262, %267 : vector<8x84xf32>
    %269 = arith.truncf %268 : vector<8x84xf32> to vector<8x84xbf16>
    %270 = arith.truncf %238 : vector<84x8xf32> to vector<84x8xbf16>
    %cst_98 = arith.constant dense<0.000000e+00> : vector<8x8xf32>
    %271 = tpu.matmul %269, %270, %cst_98 {dimension_numbers = #tpu.dot_dimension_numbers<[1], [0], [0], [1], [0, 0, 1, 1], [], []>} : vector<8x84xbf16>, vector<84x8xbf16>, vector<8x8xf32> -> vector<8x8xf32>
    %272 = vector.broadcast %75 : vector<1x8xf32> to vector<84x8xf32>
    %273 = arith.addf %246, %272 : vector<84x8xf32>
    %cst_99 = arith.constant dense<0xFF800000> : vector<84xf32>
    %274 = vector.multi_reduction <maximumf>, %273, %cst_99 [1] : vector<84x8xf32> to vector<84xf32>
    %275 = vector.shape_cast %274 : vector<84xf32> to vector<84x1xf32>
    %276 = vector.broadcast %275 : vector<84x1xf32> to vector<84x8xf32>
    %277 = arith.subf %273, %276 : vector<84x8xf32>
    %278 = math.exp %277 : vector<84x8xf32>
    %cst_100 = arith.constant dense<0.000000e+00> : vector<84xf32>
    %279 = vector.multi_reduction <add>, %278, %cst_100 [1] : vector<84x8xf32> to vector<84xf32>
    %280 = vector.shape_cast %279 : vector<84xf32> to vector<84x1xf32>
    %cst_101 = arith.constant 1.000000e+00 : f32
    %281 = vector.broadcast %cst_101 : f32 to vector<84x1xf32>
    %282 = arith.divf %281, %280 : vector<84x1xf32>
    %283 = vector.broadcast %282 : vector<84x1xf32> to vector<84x8xf32>
    %284 = arith.mulf %278, %283 : vector<84x8xf32>
    %285 = vector.extract_strided_slice %76 {offsets = [24, 0], sizes = [8, 64], strides = [1, 1]} : vector<64x64xf32> to vector<8x64xf32>
    %286 = arith.truncf %239 : vector<8x8xf32> to vector<8x8xbf16>
    %287 = arith.truncf %285 : vector<8x64xf32> to vector<8x64xbf16>
    %cst_102 = arith.constant dense<0.000000e+00> : vector<8x64xf32>
    %288 = tpu.matmul %286, %287, %cst_102 {dimension_numbers = #tpu.dot_dimension_numbers<[1], [0], [0], [1], [0, 0, 1, 1], [], []>} : vector<8x8xbf16>, vector<8x64xbf16>, vector<8x64xf32> -> vector<8x64xf32>
    %289 = vector.extract_strided_slice %66 {offsets = [0, 32], sizes = [84, 8], strides = [1, 1]} : vector<84x64xf32> to vector<84x8xf32>
    %290 = vector.extract_strided_slice %68 {offsets = [0, 32], sizes = [8, 8], strides = [1, 1]} : vector<8x64xf32> to vector<8x8xf32>
    %291 = vector.extract_strided_slice %67 {offsets = [0, 32], sizes = [84, 8], strides = [1, 1]} : vector<84x64xf32> to vector<84x8xf32>
    %292 = vector.extract_strided_slice %69 {offsets = [0, 32], sizes = [8, 8], strides = [1, 1]} : vector<8x64xf32> to vector<8x8xf32>
    %293 = arith.truncf %289 : vector<84x8xf32> to vector<84x8xbf16>
    %294 = arith.truncf %290 : vector<8x8xf32> to vector<8x8xbf16>
    %cst_103 = arith.constant dense<0.000000e+00> : vector<84x8xf32>
    %295 = tpu.matmul %293, %294, %cst_103 {dimension_numbers = #tpu.dot_dimension_numbers<[1], [1], [0], [0], [0, 0, 1, 0], [], []>} : vector<84x8xbf16>, vector<8x8xbf16>, vector<84x8xf32> -> vector<84x8xf32>
    %cst_104 = arith.constant -5.000000e+04 : f32
    %cst_105 = arith.constant 5.000000e+04 : f32
    %296 = vector.broadcast %cst_104 : f32 to vector<84x8xf32>
    %297 = arith.maximumf %296, %295 : vector<84x8xf32>
    %298 = vector.broadcast %cst_105 : f32 to vector<84x8xf32>
    %299 = arith.minimumf %298, %297 : vector<84x8xf32>
    %300 = arith.truncf %290 : vector<8x8xf32> to vector<8x8xbf16>
    %301 = arith.truncf %289 : vector<84x8xf32> to vector<84x8xbf16>
    %cst_106 = arith.constant dense<0.000000e+00> : vector<8x84xf32>
    %302 = tpu.matmul %300, %301, %cst_106 {dimension_numbers = #tpu.dot_dimension_numbers<[1], [1], [0], [0], [0, 0, 1, 0], [], []>} : vector<8x8xbf16>, vector<84x8xbf16>, vector<8x84xf32> -> vector<8x84xf32>
    %cst_107 = arith.constant -5.000000e+04 : f32
    %cst_108 = arith.constant 5.000000e+04 : f32
    %303 = vector.broadcast %cst_107 : f32 to vector<8x84xf32>
    %304 = arith.maximumf %303, %302 : vector<8x84xf32>
    %305 = vector.broadcast %cst_108 : f32 to vector<8x84xf32>
    %306 = arith.minimumf %305, %304 : vector<8x84xf32>
    %cst_109 = arith.constant dense<0xFF800000> : vector<8xf32>
    %307 = vector.multi_reduction <maximumf>, %306, %cst_109 [1] : vector<8x84xf32> to vector<8xf32>
    %308 = vector.shape_cast %307 : vector<8xf32> to vector<8x1xf32>
    %309 = vector.broadcast %308 : vector<8x1xf32> to vector<8x84xf32>
    %310 = arith.subf %306, %309 : vector<8x84xf32>
    %cst_110 = arith.constant -5.000000e+04 : f32
    %cst_111 = arith.constant 5.000000e+04 : f32
    %311 = vector.broadcast %cst_110 : f32 to vector<8x84xf32>
    %312 = arith.maximumf %311, %310 : vector<8x84xf32>
    %313 = vector.broadcast %cst_111 : f32 to vector<8x84xf32>
    %314 = arith.minimumf %313, %312 : vector<8x84xf32>
    %315 = math.exp %314 : vector<8x84xf32>
    %cst_112 = arith.constant dense<0.000000e+00> : vector<8xf32>
    %316 = vector.multi_reduction <add>, %315, %cst_112 [1] : vector<8x84xf32> to vector<8xf32>
    %317 = vector.shape_cast %316 : vector<8xf32> to vector<8x1xf32>
    %cst_113 = arith.constant 1.000000e+00 : f32
    %318 = vector.broadcast %cst_113 : f32 to vector<8x1xf32>
    %319 = arith.divf %318, %317 : vector<8x1xf32>
    %320 = vector.broadcast %319 : vector<8x1xf32> to vector<8x84xf32>
    %321 = arith.mulf %315, %320 : vector<8x84xf32>
    %322 = arith.truncf %321 : vector<8x84xf32> to vector<8x84xbf16>
    %323 = arith.truncf %291 : vector<84x8xf32> to vector<84x8xbf16>
    %cst_114 = arith.constant dense<0.000000e+00> : vector<8x8xf32>
    %324 = tpu.matmul %322, %323, %cst_114 {dimension_numbers = #tpu.dot_dimension_numbers<[1], [0], [0], [1], [0, 0, 1, 1], [], []>} : vector<8x84xbf16>, vector<84x8xbf16>, vector<8x8xf32> -> vector<8x8xf32>
    %325 = vector.broadcast %75 : vector<1x8xf32> to vector<84x8xf32>
    %326 = arith.addf %299, %325 : vector<84x8xf32>
    %cst_115 = arith.constant dense<0xFF800000> : vector<84xf32>
    %327 = vector.multi_reduction <maximumf>, %326, %cst_115 [1] : vector<84x8xf32> to vector<84xf32>
    %328 = vector.shape_cast %327 : vector<84xf32> to vector<84x1xf32>
    %329 = vector.broadcast %328 : vector<84x1xf32> to vector<84x8xf32>
    %330 = arith.subf %326, %329 : vector<84x8xf32>
    %331 = math.exp %330 : vector<84x8xf32>
    %cst_116 = arith.constant dense<0.000000e+00> : vector<84xf32>
    %332 = vector.multi_reduction <add>, %331, %cst_116 [1] : vector<84x8xf32> to vector<84xf32>
    %333 = vector.shape_cast %332 : vector<84xf32> to vector<84x1xf32>
    %cst_117 = arith.constant 1.000000e+00 : f32
    %334 = vector.broadcast %cst_117 : f32 to vector<84x1xf32>
    %335 = arith.divf %334, %333 : vector<84x1xf32>
    %336 = vector.broadcast %335 : vector<84x1xf32> to vector<84x8xf32>
    %337 = arith.mulf %331, %336 : vector<84x8xf32>
    %338 = vector.extract_strided_slice %76 {offsets = [32, 0], sizes = [8, 64], strides = [1, 1]} : vector<64x64xf32> to vector<8x64xf32>
    %339 = arith.truncf %292 : vector<8x8xf32> to vector<8x8xbf16>
    %340 = arith.truncf %338 : vector<8x64xf32> to vector<8x64xbf16>
    %cst_118 = arith.constant dense<0.000000e+00> : vector<8x64xf32>
    %341 = tpu.matmul %339, %340, %cst_118 {dimension_numbers = #tpu.dot_dimension_numbers<[1], [0], [0], [1], [0, 0, 1, 1], [], []>} : vector<8x8xbf16>, vector<8x64xbf16>, vector<8x64xf32> -> vector<8x64xf32>
    %342 = vector.extract_strided_slice %66 {offsets = [0, 40], sizes = [84, 8], strides = [1, 1]} : vector<84x64xf32> to vector<84x8xf32>
    %343 = vector.extract_strided_slice %68 {offsets = [0, 40], sizes = [8, 8], strides = [1, 1]} : vector<8x64xf32> to vector<8x8xf32>
    %344 = vector.extract_strided_slice %67 {offsets = [0, 40], sizes = [84, 8], strides = [1, 1]} : vector<84x64xf32> to vector<84x8xf32>
    %345 = vector.extract_strided_slice %69 {offsets = [0, 40], sizes = [8, 8], strides = [1, 1]} : vector<8x64xf32> to vector<8x8xf32>
    %346 = arith.truncf %342 : vector<84x8xf32> to vector<84x8xbf16>
    %347 = arith.truncf %343 : vector<8x8xf32> to vector<8x8xbf16>
    %cst_119 = arith.constant dense<0.000000e+00> : vector<84x8xf32>
    %348 = tpu.matmul %346, %347, %cst_119 {dimension_numbers = #tpu.dot_dimension_numbers<[1], [1], [0], [0], [0, 0, 1, 0], [], []>} : vector<84x8xbf16>, vector<8x8xbf16>, vector<84x8xf32> -> vector<84x8xf32>
    %cst_120 = arith.constant -5.000000e+04 : f32
    %cst_121 = arith.constant 5.000000e+04 : f32
    %349 = vector.broadcast %cst_120 : f32 to vector<84x8xf32>
    %350 = arith.maximumf %349, %348 : vector<84x8xf32>
    %351 = vector.broadcast %cst_121 : f32 to vector<84x8xf32>
    %352 = arith.minimumf %351, %350 : vector<84x8xf32>
    %353 = arith.truncf %343 : vector<8x8xf32> to vector<8x8xbf16>
    %354 = arith.truncf %342 : vector<84x8xf32> to vector<84x8xbf16>
    %cst_122 = arith.constant dense<0.000000e+00> : vector<8x84xf32>
    %355 = tpu.matmul %353, %354, %cst_122 {dimension_numbers = #tpu.dot_dimension_numbers<[1], [1], [0], [0], [0, 0, 1, 0], [], []>} : vector<8x8xbf16>, vector<84x8xbf16>, vector<8x84xf32> -> vector<8x84xf32>
    %cst_123 = arith.constant -5.000000e+04 : f32
    %cst_124 = arith.constant 5.000000e+04 : f32
    %356 = vector.broadcast %cst_123 : f32 to vector<8x84xf32>
    %357 = arith.maximumf %356, %355 : vector<8x84xf32>
    %358 = vector.broadcast %cst_124 : f32 to vector<8x84xf32>
    %359 = arith.minimumf %358, %357 : vector<8x84xf32>
    %cst_125 = arith.constant dense<0xFF800000> : vector<8xf32>
    %360 = vector.multi_reduction <maximumf>, %359, %cst_125 [1] : vector<8x84xf32> to vector<8xf32>
    %361 = vector.shape_cast %360 : vector<8xf32> to vector<8x1xf32>
    %362 = vector.broadcast %361 : vector<8x1xf32> to vector<8x84xf32>
    %363 = arith.subf %359, %362 : vector<8x84xf32>
    %cst_126 = arith.constant -5.000000e+04 : f32
    %cst_127 = arith.constant 5.000000e+04 : f32
    %364 = vector.broadcast %cst_126 : f32 to vector<8x84xf32>
    %365 = arith.maximumf %364, %363 : vector<8x84xf32>
    %366 = vector.broadcast %cst_127 : f32 to vector<8x84xf32>
    %367 = arith.minimumf %366, %365 : vector<8x84xf32>
    %368 = math.exp %367 : vector<8x84xf32>
    %cst_128 = arith.constant dense<0.000000e+00> : vector<8xf32>
    %369 = vector.multi_reduction <add>, %368, %cst_128 [1] : vector<8x84xf32> to vector<8xf32>
    %370 = vector.shape_cast %369 : vector<8xf32> to vector<8x1xf32>
    %cst_129 = arith.constant 1.000000e+00 : f32
    %371 = vector.broadcast %cst_129 : f32 to vector<8x1xf32>
    %372 = arith.divf %371, %370 : vector<8x1xf32>
    %373 = vector.broadcast %372 : vector<8x1xf32> to vector<8x84xf32>
    %374 = arith.mulf %368, %373 : vector<8x84xf32>
    %375 = arith.truncf %374 : vector<8x84xf32> to vector<8x84xbf16>
    %376 = arith.truncf %344 : vector<84x8xf32> to vector<84x8xbf16>
    %cst_130 = arith.constant dense<0.000000e+00> : vector<8x8xf32>
    %377 = tpu.matmul %375, %376, %cst_130 {dimension_numbers = #tpu.dot_dimension_numbers<[1], [0], [0], [1], [0, 0, 1, 1], [], []>} : vector<8x84xbf16>, vector<84x8xbf16>, vector<8x8xf32> -> vector<8x8xf32>
    %378 = vector.broadcast %75 : vector<1x8xf32> to vector<84x8xf32>
    %379 = arith.addf %352, %378 : vector<84x8xf32>
    %cst_131 = arith.constant dense<0xFF800000> : vector<84xf32>
    %380 = vector.multi_reduction <maximumf>, %379, %cst_131 [1] : vector<84x8xf32> to vector<84xf32>
    %381 = vector.shape_cast %380 : vector<84xf32> to vector<84x1xf32>
    %382 = vector.broadcast %381 : vector<84x1xf32> to vector<84x8xf32>
    %383 = arith.subf %379, %382 : vector<84x8xf32>
    %384 = math.exp %383 : vector<84x8xf32>
    %cst_132 = arith.constant dense<0.000000e+00> : vector<84xf32>
    %385 = vector.multi_reduction <add>, %384, %cst_132 [1] : vector<84x8xf32> to vector<84xf32>
    %386 = vector.shape_cast %385 : vector<84xf32> to vector<84x1xf32>
    %cst_133 = arith.constant 1.000000e+00 : f32
    %387 = vector.broadcast %cst_133 : f32 to vector<84x1xf32>
    %388 = arith.divf %387, %386 : vector<84x1xf32>
    %389 = vector.broadcast %388 : vector<84x1xf32> to vector<84x8xf32>
    %390 = arith.mulf %384, %389 : vector<84x8xf32>
    %391 = vector.extract_strided_slice %76 {offsets = [40, 0], sizes = [8, 64], strides = [1, 1]} : vector<64x64xf32> to vector<8x64xf32>
    %392 = arith.truncf %345 : vector<8x8xf32> to vector<8x8xbf16>
    %393 = arith.truncf %391 : vector<8x64xf32> to vector<8x64xbf16>
    %cst_134 = arith.constant dense<0.000000e+00> : vector<8x64xf32>
    %394 = tpu.matmul %392, %393, %cst_134 {dimension_numbers = #tpu.dot_dimension_numbers<[1], [0], [0], [1], [0, 0, 1, 1], [], []>} : vector<8x8xbf16>, vector<8x64xbf16>, vector<8x64xf32> -> vector<8x64xf32>
    %395 = vector.extract_strided_slice %66 {offsets = [0, 48], sizes = [84, 8], strides = [1, 1]} : vector<84x64xf32> to vector<84x8xf32>
    %396 = vector.extract_strided_slice %68 {offsets = [0, 48], sizes = [8, 8], strides = [1, 1]} : vector<8x64xf32> to vector<8x8xf32>
    %397 = vector.extract_strided_slice %67 {offsets = [0, 48], sizes = [84, 8], strides = [1, 1]} : vector<84x64xf32> to vector<84x8xf32>
    %398 = vector.extract_strided_slice %69 {offsets = [0, 48], sizes = [8, 8], strides = [1, 1]} : vector<8x64xf32> to vector<8x8xf32>
    %399 = arith.truncf %395 : vector<84x8xf32> to vector<84x8xbf16>
    %400 = arith.truncf %396 : vector<8x8xf32> to vector<8x8xbf16>
    %cst_135 = arith.constant dense<0.000000e+00> : vector<84x8xf32>
    %401 = tpu.matmul %399, %400, %cst_135 {dimension_numbers = #tpu.dot_dimension_numbers<[1], [1], [0], [0], [0, 0, 1, 0], [], []>} : vector<84x8xbf16>, vector<8x8xbf16>, vector<84x8xf32> -> vector<84x8xf32>
    %cst_136 = arith.constant -5.000000e+04 : f32
    %cst_137 = arith.constant 5.000000e+04 : f32
    %402 = vector.broadcast %cst_136 : f32 to vector<84x8xf32>
    %403 = arith.maximumf %402, %401 : vector<84x8xf32>
    %404 = vector.broadcast %cst_137 : f32 to vector<84x8xf32>
    %405 = arith.minimumf %404, %403 : vector<84x8xf32>
    %406 = arith.truncf %396 : vector<8x8xf32> to vector<8x8xbf16>
    %407 = arith.truncf %395 : vector<84x8xf32> to vector<84x8xbf16>
    %cst_138 = arith.constant dense<0.000000e+00> : vector<8x84xf32>
    %408 = tpu.matmul %406, %407, %cst_138 {dimension_numbers = #tpu.dot_dimension_numbers<[1], [1], [0], [0], [0, 0, 1, 0], [], []>} : vector<8x8xbf16>, vector<84x8xbf16>, vector<8x84xf32> -> vector<8x84xf32>
    %cst_139 = arith.constant -5.000000e+04 : f32
    %cst_140 = arith.constant 5.000000e+04 : f32
    %409 = vector.broadcast %cst_139 : f32 to vector<8x84xf32>
    %410 = arith.maximumf %409, %408 : vector<8x84xf32>
    %411 = vector.broadcast %cst_140 : f32 to vector<8x84xf32>
    %412 = arith.minimumf %411, %410 : vector<8x84xf32>
    %cst_141 = arith.constant dense<0xFF800000> : vector<8xf32>
    %413 = vector.multi_reduction <maximumf>, %412, %cst_141 [1] : vector<8x84xf32> to vector<8xf32>
    %414 = vector.shape_cast %413 : vector<8xf32> to vector<8x1xf32>
    %415 = vector.broadcast %414 : vector<8x1xf32> to vector<8x84xf32>
    %416 = arith.subf %412, %415 : vector<8x84xf32>
    %cst_142 = arith.constant -5.000000e+04 : f32
    %cst_143 = arith.constant 5.000000e+04 : f32
    %417 = vector.broadcast %cst_142 : f32 to vector<8x84xf32>
    %418 = arith.maximumf %417, %416 : vector<8x84xf32>
    %419 = vector.broadcast %cst_143 : f32 to vector<8x84xf32>
    %420 = arith.minimumf %419, %418 : vector<8x84xf32>
    %421 = math.exp %420 : vector<8x84xf32>
    %cst_144 = arith.constant dense<0.000000e+00> : vector<8xf32>
    %422 = vector.multi_reduction <add>, %421, %cst_144 [1] : vector<8x84xf32> to vector<8xf32>
    %423 = vector.shape_cast %422 : vector<8xf32> to vector<8x1xf32>
    %cst_145 = arith.constant 1.000000e+00 : f32
    %424 = vector.broadcast %cst_145 : f32 to vector<8x1xf32>
    %425 = arith.divf %424, %423 : vector<8x1xf32>
    %426 = vector.broadcast %425 : vector<8x1xf32> to vector<8x84xf32>
    %427 = arith.mulf %421, %426 : vector<8x84xf32>
    %428 = arith.truncf %427 : vector<8x84xf32> to vector<8x84xbf16>
    %429 = arith.truncf %397 : vector<84x8xf32> to vector<84x8xbf16>
    %cst_146 = arith.constant dense<0.000000e+00> : vector<8x8xf32>
    %430 = tpu.matmul %428, %429, %cst_146 {dimension_numbers = #tpu.dot_dimension_numbers<[1], [0], [0], [1], [0, 0, 1, 1], [], []>} : vector<8x84xbf16>, vector<84x8xbf16>, vector<8x8xf32> -> vector<8x8xf32>
    %431 = vector.broadcast %75 : vector<1x8xf32> to vector<84x8xf32>
    %432 = arith.addf %405, %431 : vector<84x8xf32>
    %cst_147 = arith.constant dense<0xFF800000> : vector<84xf32>
    %433 = vector.multi_reduction <maximumf>, %432, %cst_147 [1] : vector<84x8xf32> to vector<84xf32>
    %434 = vector.shape_cast %433 : vector<84xf32> to vector<84x1xf32>
    %435 = vector.broadcast %434 : vector<84x1xf32> to vector<84x8xf32>
    %436 = arith.subf %432, %435 : vector<84x8xf32>
    %437 = math.exp %436 : vector<84x8xf32>
    %cst_148 = arith.constant dense<0.000000e+00> : vector<84xf32>
    %438 = vector.multi_reduction <add>, %437, %cst_148 [1] : vector<84x8xf32> to vector<84xf32>
    %439 = vector.shape_cast %438 : vector<84xf32> to vector<84x1xf32>
    %cst_149 = arith.constant 1.000000e+00 : f32
    %440 = vector.broadcast %cst_149 : f32 to vector<84x1xf32>
    %441 = arith.divf %440, %439 : vector<84x1xf32>
    %442 = vector.broadcast %441 : vector<84x1xf32> to vector<84x8xf32>
    %443 = arith.mulf %437, %442 : vector<84x8xf32>
    %444 = vector.extract_strided_slice %76 {offsets = [48, 0], sizes = [8, 64], strides = [1, 1]} : vector<64x64xf32> to vector<8x64xf32>
    %445 = arith.truncf %398 : vector<8x8xf32> to vector<8x8xbf16>
    %446 = arith.truncf %444 : vector<8x64xf32> to vector<8x64xbf16>
    %cst_150 = arith.constant dense<0.000000e+00> : vector<8x64xf32>
    %447 = tpu.matmul %445, %446, %cst_150 {dimension_numbers = #tpu.dot_dimension_numbers<[1], [0], [0], [1], [0, 0, 1, 1], [], []>} : vector<8x8xbf16>, vector<8x64xbf16>, vector<8x64xf32> -> vector<8x64xf32>
    %448 = vector.extract_strided_slice %66 {offsets = [0, 56], sizes = [84, 8], strides = [1, 1]} : vector<84x64xf32> to vector<84x8xf32>
    %449 = vector.extract_strided_slice %68 {offsets = [0, 56], sizes = [8, 8], strides = [1, 1]} : vector<8x64xf32> to vector<8x8xf32>
    %450 = vector.extract_strided_slice %67 {offsets = [0, 56], sizes = [84, 8], strides = [1, 1]} : vector<84x64xf32> to vector<84x8xf32>
    %451 = vector.extract_strided_slice %69 {offsets = [0, 56], sizes = [8, 8], strides = [1, 1]} : vector<8x64xf32> to vector<8x8xf32>
    %452 = arith.truncf %448 : vector<84x8xf32> to vector<84x8xbf16>
    %453 = arith.truncf %449 : vector<8x8xf32> to vector<8x8xbf16>
    %cst_151 = arith.constant dense<0.000000e+00> : vector<84x8xf32>
    %454 = tpu.matmul %452, %453, %cst_151 {dimension_numbers = #tpu.dot_dimension_numbers<[1], [1], [0], [0], [0, 0, 1, 0], [], []>} : vector<84x8xbf16>, vector<8x8xbf16>, vector<84x8xf32> -> vector<84x8xf32>
    %cst_152 = arith.constant -5.000000e+04 : f32
    %cst_153 = arith.constant 5.000000e+04 : f32
    %455 = vector.broadcast %cst_152 : f32 to vector<84x8xf32>
    %456 = arith.maximumf %455, %454 : vector<84x8xf32>
    %457 = vector.broadcast %cst_153 : f32 to vector<84x8xf32>
    %458 = arith.minimumf %457, %456 : vector<84x8xf32>
    %459 = arith.truncf %449 : vector<8x8xf32> to vector<8x8xbf16>
    %460 = arith.truncf %448 : vector<84x8xf32> to vector<84x8xbf16>
    %cst_154 = arith.constant dense<0.000000e+00> : vector<8x84xf32>
    %461 = tpu.matmul %459, %460, %cst_154 {dimension_numbers = #tpu.dot_dimension_numbers<[1], [1], [0], [0], [0, 0, 1, 0], [], []>} : vector<8x8xbf16>, vector<84x8xbf16>, vector<8x84xf32> -> vector<8x84xf32>
    %cst_155 = arith.constant -5.000000e+04 : f32
    %cst_156 = arith.constant 5.000000e+04 : f32
    %462 = vector.broadcast %cst_155 : f32 to vector<8x84xf32>
    %463 = arith.maximumf %462, %461 : vector<8x84xf32>
    %464 = vector.broadcast %cst_156 : f32 to vector<8x84xf32>
    %465 = arith.minimumf %464, %463 : vector<8x84xf32>
    %cst_157 = arith.constant dense<0xFF800000> : vector<8xf32>
    %466 = vector.multi_reduction <maximumf>, %465, %cst_157 [1] : vector<8x84xf32> to vector<8xf32>
    %467 = vector.shape_cast %466 : vector<8xf32> to vector<8x1xf32>
    %468 = vector.broadcast %467 : vector<8x1xf32> to vector<8x84xf32>
    %469 = arith.subf %465, %468 : vector<8x84xf32>
    %cst_158 = arith.constant -5.000000e+04 : f32
    %cst_159 = arith.constant 5.000000e+04 : f32
    %470 = vector.broadcast %cst_158 : f32 to vector<8x84xf32>
    %471 = arith.maximumf %470, %469 : vector<8x84xf32>
    %472 = vector.broadcast %cst_159 : f32 to vector<8x84xf32>
    %473 = arith.minimumf %472, %471 : vector<8x84xf32>
    %474 = math.exp %473 : vector<8x84xf32>
    %cst_160 = arith.constant dense<0.000000e+00> : vector<8xf32>
    %475 = vector.multi_reduction <add>, %474, %cst_160 [1] : vector<8x84xf32> to vector<8xf32>
    %476 = vector.shape_cast %475 : vector<8xf32> to vector<8x1xf32>
    %cst_161 = arith.constant 1.000000e+00 : f32
    %477 = vector.broadcast %cst_161 : f32 to vector<8x1xf32>
    %478 = arith.divf %477, %476 : vector<8x1xf32>
    %479 = vector.broadcast %478 : vector<8x1xf32> to vector<8x84xf32>
    %480 = arith.mulf %474, %479 : vector<8x84xf32>
    %481 = arith.truncf %480 : vector<8x84xf32> to vector<8x84xbf16>
    %482 = arith.truncf %450 : vector<84x8xf32> to vector<84x8xbf16>
    %cst_162 = arith.constant dense<0.000000e+00> : vector<8x8xf32>
    %483 = tpu.matmul %481, %482, %cst_162 {dimension_numbers = #tpu.dot_dimension_numbers<[1], [0], [0], [1], [0, 0, 1, 1], [], []>} : vector<8x84xbf16>, vector<84x8xbf16>, vector<8x8xf32> -> vector<8x8xf32>
    %484 = vector.broadcast %75 : vector<1x8xf32> to vector<84x8xf32>
    %485 = arith.addf %458, %484 : vector<84x8xf32>
    %cst_163 = arith.constant dense<0xFF800000> : vector<84xf32>
    %486 = vector.multi_reduction <maximumf>, %485, %cst_163 [1] : vector<84x8xf32> to vector<84xf32>
    %487 = vector.shape_cast %486 : vector<84xf32> to vector<84x1xf32>
    %488 = vector.broadcast %487 : vector<84x1xf32> to vector<84x8xf32>
    %489 = arith.subf %485, %488 : vector<84x8xf32>
    %490 = math.exp %489 : vector<84x8xf32>
    %cst_164 = arith.constant dense<0.000000e+00> : vector<84xf32>
    %491 = vector.multi_reduction <add>, %490, %cst_164 [1] : vector<84x8xf32> to vector<84xf32>
    %492 = vector.shape_cast %491 : vector<84xf32> to vector<84x1xf32>
    %cst_165 = arith.constant 1.000000e+00 : f32
    %493 = vector.broadcast %cst_165 : f32 to vector<84x1xf32>
    %494 = arith.divf %493, %492 : vector<84x1xf32>
    %495 = vector.broadcast %494 : vector<84x1xf32> to vector<84x8xf32>
    %496 = arith.mulf %490, %495 : vector<84x8xf32>
    %497 = vector.extract_strided_slice %76 {offsets = [56, 0], sizes = [8, 64], strides = [1, 1]} : vector<64x64xf32> to vector<8x64xf32>
    %498 = arith.truncf %451 : vector<8x8xf32> to vector<8x8xbf16>
    %499 = arith.truncf %497 : vector<8x64xf32> to vector<8x64xbf16>
    %cst_166 = arith.constant dense<0.000000e+00> : vector<8x64xf32>
    %500 = tpu.matmul %498, %499, %cst_166 {dimension_numbers = #tpu.dot_dimension_numbers<[1], [0], [0], [1], [0, 0, 1, 1], [], []>} : vector<8x8xbf16>, vector<8x64xbf16>, vector<8x64xf32> -> vector<8x64xf32>
    %501 = tpu.concatenate %125, %178, %231, %284, %337, %390, %443, %496 in 1 : vector<84x8xf32>, vector<84x8xf32>, vector<84x8xf32>, vector<84x8xf32>, vector<84x8xf32>, vector<84x8xf32>, vector<84x8xf32>, vector<84x8xf32> -> vector<84x64xf32>
    %502 = tpu.concatenate %129, %182, %235, %288, %341, %394, %447, %500 in 0 : vector<8x64xf32>, vector<8x64xf32>, vector<8x64xf32>, vector<8x64xf32>, vector<8x64xf32>, vector<8x64xf32>, vector<8x64xf32>, vector<8x64xf32> -> vector<64x64xf32>
    %503 = arith.truncf %501 : vector<84x64xf32> to vector<84x64xbf16>
    %504 = arith.truncf %502 : vector<64x64xf32> to vector<64x64xbf16>
    %cst_167 = arith.constant dense<0.000000e+00> : vector<84x64xf32>
    %505 = tpu.matmul %503, %504, %cst_167 {dimension_numbers = #tpu.dot_dimension_numbers<[1], [0], [0], [1], [0, 0, 1, 1], [], []>} : vector<84x64xbf16>, vector<64x64xbf16>, vector<84x64xf32> -> vector<84x64xf32>
    %c0_168 = arith.constant 0 : index
    %c0_169 = arith.constant 0 : index
    %506 = vector.load %arg13[%c0_168, %c0_169] : memref<1x64xf32, #tpu.memory_space<vmem>>, vector<1x64xf32>
    %507 = vector.broadcast %506 : vector<1x64xf32> to vector<84x64xf32>
    %508 = arith.addf %505, %507 : vector<84x64xf32>
    %509 = tpu.concatenate %112, %165, %218, %271, %324, %377, %430, %483 in 1 : vector<8x8xf32>, vector<8x8xf32>, vector<8x8xf32>, vector<8x8xf32>, vector<8x8xf32>, vector<8x8xf32>, vector<8x8xf32>, vector<8x8xf32> -> vector<8x64xf32>
    %c0_170 = arith.constant 0 : index
    %c0_171 = arith.constant 0 : index
    %510 = vector.load %arg14[%c0_170, %c0_171] : memref<64x96xf32, #tpu.memory_space<vmem>>, vector<64x96xf32>
    %511 = arith.truncf %509 : vector<8x64xf32> to vector<8x64xbf16>
    %512 = arith.truncf %510 : vector<64x96xf32> to vector<64x96xbf16>
    %cst_172 = arith.constant dense<0.000000e+00> : vector<8x96xf32>
    %513 = tpu.matmul %511, %512, %cst_172 {dimension_numbers = #tpu.dot_dimension_numbers<[1], [0], [0], [1], [0, 0, 1, 1], [], []>} : vector<8x64xbf16>, vector<64x96xbf16>, vector<8x96xf32> -> vector<8x96xf32>
    %c0_173 = arith.constant 0 : index
    %c0_174 = arith.constant 0 : index
    %514 = vector.load %arg15[%c0_173, %c0_174] : memref<1x96xf32, #tpu.memory_space<vmem>>, vector<1x96xf32>
    %515 = vector.broadcast %514 : vector<1x96xf32> to vector<8x96xf32>
    %516 = arith.addf %513, %515 : vector<8x96xf32>
    %c0_175 = arith.constant 0 : index
    %c0_176 = arith.constant 0 : index
    %517 = vector.load %arg16[%c0_175, %c0_176] : memref<1x64xf32, #tpu.memory_space<vmem>>, vector<1x64xf32>
    %518 = vector.broadcast %517 : vector<1x64xf32> to vector<84x64xf32>
    %519 = arith.mulf %518, %508 : vector<84x64xf32>
    %520 = arith.addf %1, %519 : vector<84x64xf32>
    %c0_177 = arith.constant 0 : index
    %c0_178 = arith.constant 0 : index
    %c0_179 = arith.constant 0 : index
    %521 = vector.load %arg18[%c0_177, %c0_178, %c0_179] : memref<1x84x64xf32, #tpu.memory_space<vmem>>, vector<1x84x64xf32>
    %522 = vector.shape_cast %521 : vector<1x84x64xf32> to vector<84x64xf32>
    %523 = vector.shape_cast %520 : vector<84x64xf32> to vector<1x84x64xf32>
    tpu.vector_store %arg18[%c0_177, %c0_178, %c0_179], %523 {strides = array<i32>} : memref<1x84x64xf32, #tpu.memory_space<vmem>>, vector<1x84x64xf32>,
    %c0_180 = arith.constant 0 : index
    %c0_181 = arith.constant 0 : index
    %524 = vector.load %arg17[%c0_180, %c0_181] : memref<1x96xf32, #tpu.memory_space<vmem>>, vector<1x96xf32>
    %525 = vector.broadcast %524 : vector<1x96xf32> to vector<8x96xf32>
    %526 = arith.mulf %525, %516 : vector<8x96xf32>
    %527 = arith.addf %3, %526 : vector<8x96xf32>
    %c0_182 = arith.constant 0 : index
    %c0_183 = arith.constant 0 : index
    %c0_184 = arith.constant 0 : index
    %528 = vector.load %arg19[%c0_182, %c0_183, %c0_184] : memref<1x8x96xf32, #tpu.memory_space<vmem>>, vector<1x8x96xf32>
    %529 = vector.shape_cast %528 : vector<1x8x96xf32> to vector<8x96xf32>
    %530 = vector.shape_cast %527 : vector<8x96xf32> to vector<1x8x96xf32>
    tpu.vector_store %arg19[%c0_182, %c0_183, %c0_184], %530 {strides = array<i32>} : memref<1x8x96xf32, #tpu.memory_space<vmem>>, vector<1x8x96xf32>,
    return
  }
  func.func @transform_0(%arg0: i32) -> (i32, i32, i32) {
    %c0_i32 = arith.constant 0 : i32
    %c0_i32_0 = arith.constant 0 : i32
    %c0_i32_1 = arith.constant 0 : i32
    return %arg0, %c0_i32, %c0_i32_0 : i32, i32, i32
  }
  func.func @transform_1(%arg0: i32) -> (i32, i32, i32) {
    %c0_i32 = arith.constant 0 : i32
    %c0_i32_0 = arith.constant 0 : i32
    %c0_i32_1 = arith.constant 0 : i32
    return %arg0, %c0_i32, %c0_i32_0 : i32, i32, i32
  }
  func.func @transform_2(%arg0: i32) -> (i32, i32, i32) {
    %c0_i32 = arith.constant 0 : i32
    %c0_i32_0 = arith.constant 0 : i32
    %c0_i32_1 = arith.constant 0 : i32
    return %arg0, %c0_i32, %c0_i32_0 : i32, i32, i32
  }
  func.func @transform_3(%arg0: i32) -> (i32, i32) {
    %c0_i32 = arith.constant 0 : i32
    %c0_i32_0 = arith.constant 0 : i32
    %c0_i32_1 = arith.constant 0 : i32
    return %c0_i32, %c0_i32_0 : i32, i32
  }
  func.func @transform_4(%arg0: i32) -> (i32, i32) {
    %c0_i32 = arith.constant 0 : i32
    %c0_i32_0 = arith.constant 0 : i32
    %c0_i32_1 = arith.constant 0 : i32
    return %c0_i32, %c0_i32_0 : i32, i32
  }
  func.func @transform_5(%arg0: i32) -> (i32, i32) {
    %c0_i32 = arith.constant 0 : i32
    %c0_i32_0 = arith.constant 0 : i32
    %c0_i32_1 = arith.constant 0 : i32
    return %c0_i32, %c0_i32_0 : i32, i32
  }
  func.func @transform_6(%arg0: i32) -> (i32, i32) {
    %c0_i32 = arith.constant 0 : i32
    %c0_i32_0 = arith.constant 0 : i32
    %c0_i32_1 = arith.constant 0 : i32
    return %c0_i32, %c0_i32_0 : i32, i32
  }
  func.func @transform_7(%arg0: i32) -> (i32, i32) {
    %c0_i32 = arith.constant 0 : i32
    %c0_i32_0 = arith.constant 0 : i32
    %c0_i32_1 = arith.constant 0 : i32
    return %c0_i32, %c0_i32_0 : i32, i32
  }
  func.func @transform_8(%arg0: i32) -> (i32, i32) {
    %c0_i32 = arith.constant 0 : i32
    %c0_i32_0 = arith.constant 0 : i32
    %c0_i32_1 = arith.constant 0 : i32
    return %c0_i32, %c0_i32_0 : i32, i32
  }
  func.func @transform_9(%arg0: i32) -> (i32, i32) {
    %c0_i32 = arith.constant 0 : i32
    %c0_i32_0 = arith.constant 0 : i32
    %c0_i32_1 = arith.constant 0 : i32
    return %c0_i32, %c0_i32_0 : i32, i32
  }
  func.func @transform_10(%arg0: i32) -> (i32, i32) {
    %c0_i32 = arith.constant 0 : i32
    %c0_i32_0 = arith.constant 0 : i32
    %c0_i32_1 = arith.constant 0 : i32
    return %c0_i32, %c0_i32_0 : i32, i32
  }
  func.func @transform_11(%arg0: i32) -> (i32, i32) {
    %c0_i32 = arith.constant 0 : i32
    %c0_i32_0 = arith.constant 0 : i32
    %c0_i32_1 = arith.constant 0 : i32
    return %c0_i32, %c0_i32_0 : i32, i32
  }
  func.func @transform_12(%arg0: i32) -> (i32, i32) {
    %c0_i32 = arith.constant 0 : i32
    %c0_i32_0 = arith.constant 0 : i32
    %c0_i32_1 = arith.constant 0 : i32
    return %c0_i32, %c0_i32_0 : i32, i32
  }
  func.func @transform_13(%arg0: i32) -> (i32, i32) {
    %c0_i32 = arith.constant 0 : i32
    %c0_i32_0 = arith.constant 0 : i32
    %c0_i32_1 = arith.constant 0 : i32
    return %c0_i32, %c0_i32_0 : i32, i32
  }
  func.func @transform_14(%arg0: i32) -> (i32, i32) {
    %c0_i32 = arith.constant 0 : i32
    %c0_i32_0 = arith.constant 0 : i32
    %c0_i32_1 = arith.constant 0 : i32
    return %c0_i32, %c0_i32_0 : i32, i32
  }
  func.func @transform_15(%arg0: i32) -> (i32, i32) {
    %c0_i32 = arith.constant 0 : i32
    %c0_i32_0 = arith.constant 0 : i32
    %c0_i32_1 = arith.constant 0 : i32
    return %c0_i32, %c0_i32_0 : i32, i32
  }
  func.func @transform_16(%arg0: i32) -> (i32, i32) {
    %c0_i32 = arith.constant 0 : i32
    %c0_i32_0 = arith.constant 0 : i32
    %c0_i32_1 = arith.constant 0 : i32
    return %c0_i32, %c0_i32_0 : i32, i32
  }
  func.func @transform_17(%arg0: i32) -> (i32, i32, i32) {
    %c0_i32 = arith.constant 0 : i32
    %c0_i32_0 = arith.constant 0 : i32
    %c0_i32_1 = arith.constant 0 : i32
    return %arg0, %c0_i32, %c0_i32_0 : i32, i32, i32
  }
  func.func @transform_18(%arg0: i32) -> (i32, i32, i32) {
    %c0_i32 = arith.constant 0 : i32
    %c0_i32_0 = arith.constant 0 : i32
    %c0_i32_1 = arith.constant 0 : i32
    return %arg0, %c0_i32, %c0_i32_0 : i32, i32, i32
  }
}

</mosaic_0001>

<llo_original>
// kernel: bi_attention_block_forward.1
$region0: #{bi_attention_block_forward.1}
  #allocation0 [shape = 'u32[]', space=smem, size = 0x4, offset = 0x4, fixed_abs, tag = 'smem constant byte address 0x4 - core index']
  #allocation1 [shape = 'u32[144,128]{1,0:T(1,128)}', space=vmem, size = 0x12000, scoped, tag = 'internal scratch']
  %s0 = inlined_call_operand.vmem [shape: f32[2,84,64], index: 0, kind: input, shape index: {}]
  %s1 = inlined_call_operand.vmem [shape: f32[2,8,96], index: 1, kind: input, shape index: {}]
  %s2 = inlined_call_operand.vmem [shape: f32[2,1,8], index: 2, kind: input, shape index: {}]
  %s3 = inlined_call_operand.vmem [shape: f32[1,64], index: 3, kind: input, shape index: {}]
  %s4 = inlined_call_operand.vmem [shape: f32[1,64], index: 4, kind: input, shape index: {}]
  %s5 = inlined_call_operand.vmem [shape: f32[1,96], index: 5, kind: input, shape index: {}]
  %s6 = inlined_call_operand.vmem [shape: f32[1,96], index: 6, kind: input, shape index: {}]
  %s7 = inlined_call_operand.vmem [shape: f32[64,128], index: 7, kind: input, shape index: {}]
  %s8 = inlined_call_operand.vmem [shape: f32[1,128], index: 8, kind: input, shape index: {}]
  %s9 = inlined_call_operand.vmem [shape: f32[96,128], index: 9, kind: input, shape index: {}]
  %s10 = inlined_call_operand.vmem [shape: f32[1,128], index: 10, kind: input, shape index: {}]
  %s11 = inlined_call_operand.vmem [shape: f32[64,64], index: 11, kind: input, shape index: {}]
  %s12 = inlined_call_operand.vmem [shape: f32[1,64], index: 12, kind: input, shape index: {}]
  %s13 = inlined_call_operand.vmem [shape: f32[64,96], index: 13, kind: input, shape index: {}]
  %s14 = inlined_call_operand.vmem [shape: f32[1,96], index: 14, kind: input, shape index: {}]
  %s15 = inlined_call_operand.vmem [shape: f32[1,64], index: 15, kind: input, shape index: {}]
  %s16 = inlined_call_operand.vmem [shape: f32[1,96], index: 16, kind: input, shape index: {}]
  %s17 = inlined_call_operand.vmem [shape: f32[2,84,64], index: 17, kind: output, shape index: {0}]
  %s18 = inlined_call_operand.hbm [shape: f32[2,8,96], index: 18, kind: output, shape index: {1}]
  %19 = xla_tuple %s17, %s18
  %s20 = sld [smem:[#allocation0]]
  $region109: #{bi_attention_block_forward.1} parent=0
    _
  %s22 = ssub.s32 1, %s20
  %s23 = scalar_select 0, %s22, %s20
  $region1: #{bi_attention_block_forward.1} parent=0
    #allocation2 [shape = 'u8[8192]{0}', space=vmem, size = 0x2000, scoped, tag = 'output window, operand 1']
    #allocation3 [shape = 's32[2]{0}', space=sflag, size = 0x8, scoped, tag = 'scoped memory for bi_attention_block_forward.1']
    %24 = vsyncpa [#allocation3], 0
    %s25 = scalar_lea.sflag [#allocation3], 1
    %26 = vsyncpa %s25, 0
    loop: start=0, step=1, limit=4
    $region2: #{bi_attention_block_forward.1} parent=1 // loop_pre_header
      _
    $region3: #{bi_attention_block_forward.1} parent=1 // loop_header
      %s28 = sphi 0, %s32
      %p29 = scmp.ge.s32.totalorder %s28, 4
      %s38 = sphi 0, %s40
      %s41 = sphi 0, %s38
      %s42 = sphi 0, %s41
      %s58 = sphi 0, %s42
      %s64 = sphi 0, %s66
      %s67 = sphi 0, %s64
      %s68 = sphi 0, %s67
      %s84 = sphi 0, %s68
      %s90 = sphi 0, %s92
      %s93 = sphi 0, %s90
      %s94 = sphi 0, %s93
      %s110 = sphi 0, %s94
      %s114 = sphi 0, %s114
      %s116 = sphi 0, %s114
      %s117 = sphi 0, %s116
      %s131 = sphi 0, %s117
      %s135 = sphi 0, %s135
      %s137 = sphi 0, %s135
      %s138 = sphi 0, %s137
      %s152 = sphi 0, %s138
      %s156 = sphi 0, %s156
      %s158 = sphi 0, %s156
      %s159 = sphi 0, %s158
      %s173 = sphi 0, %s159
      %s177 = sphi 0, %s177
      %s179 = sphi 0, %s177
      %s180 = sphi 0, %s179
      %s194 = sphi 0, %s180
      %s198 = sphi 0, %s198
      %s200 = sphi 0, %s198
      %s201 = sphi 0, %s200
      %s215 = sphi 0, %s201
      %s219 = sphi 0, %s219
      %s221 = sphi 0, %s219
      %s222 = sphi 0, %s221
      %s236 = sphi 0, %s222
      %s240 = sphi 0, %s240
      %s242 = sphi 0, %s240
      %s243 = sphi 0, %s242
      %s257 = sphi 0, %s243
      %s261 = sphi 0, %s261
      %s263 = sphi 0, %s261
      %s264 = sphi 0, %s263
      %s278 = sphi 0, %s264
      %s282 = sphi 0, %s282
      %s284 = sphi 0, %s282
      %s285 = sphi 0, %s284
      %s299 = sphi 0, %s285
      %s303 = sphi 0, %s303
      %s305 = sphi 0, %s303
      %s306 = sphi 0, %s305
      %s320 = sphi 0, %s306
      %s324 = sphi 0, %s324
      %s326 = sphi 0, %s324
      %s327 = sphi 0, %s326
      %s341 = sphi 0, %s327
      %s345 = sphi 0, %s345
      %s347 = sphi 0, %s345
      %s348 = sphi 0, %s347
      %s362 = sphi 0, %s348
      %s366 = sphi 0, %s366
      %s368 = sphi 0, %s366
      %s369 = sphi 0, %s368
      %s383 = sphi 0, %s369
      %s387 = sphi 0, %s387
      %s389 = sphi 0, %s387
      %s390 = sphi 0, %s389
      %s404 = sphi 0, %s390
      %s410 = sphi 0, %s412
      %s413 = sphi 0, %s410
      %s414 = sphi 0, %s413
      %s430 = sphi 0, %s414
      %s436 = sphi 0, %s438
      %s439 = sphi 0, %s436
      %s440 = sphi 0, %s439
      %s456 = sphi 0, %s440
    $region4: #{bi_attention_block_forward.1} parent=1 // loop_header_branch
      %31 = sbr.rel (%p29) target = $region8
    $region5: #{bi_attention_block_forward.1} parent=1 // loop_body
      %s33 = ssub.s32 %s28, 1
      %s34 = ssub.s32 %s28, 2
      %s35 = sadd.s32 %s28, 1
      %s36 = ssub.s32 %s28, %s35
      %p37 = scmp.eq.s32.totalorder %s36, 0
      %s39 = sadd.s32 %s38, 1
      %s40 = scalar_select %p37, %s38, %s39
      %p43 = pneg %p37
      %p44 = scmp.eq.s32.totalorder %s28, 1
      %p45 = por %p43, %p44
      %p46 = scmp.ne.s32.totalorder %s38, %s41
      %p47 = scmp.eq.s32.totalorder %s28, 0
      %p48 = por %p46, %p47
      %p49 = scmp.ne.s32.totalorder %s38, %s41
      %p50 = scmp.eq.s32.totalorder %s33, 1
      %p51 = por %p49, %p50
      %p52 = scmp.ne.s32.totalorder %s41, %s42
      %p53 = scmp.eq.s32.totalorder %s33, 0
      %p54 = por %p52, %p53
      %p55 = scmp.ne.s32.totalorder %s41, %s42
      %p56 = scmp.eq.s32.totalorder %s34, 1
      %p57 = por %p55, %p56
      %p59 = scmp.ne.s32.totalorder %s42, %s58
      %p60 = scmp.eq.s32.totalorder %s34, 0
      %p61 = por %p59, %p60
      %s62 = ssub.s32 %s28, %s35
      %p63 = scmp.eq.s32.totalorder %s62, 0
      %s65 = sadd.s32 %s64, 1
      %s66 = scalar_select %p63, %s64, %s65
      %p69 = pneg %p63
      %p70 = scmp.eq.s32.totalorder %s28, 1
      %p71 = por %p69, %p70
      %p72 = scmp.ne.s32.totalorder %s64, %s67
      %p73 = scmp.eq.s32.totalorder %s28, 0
      %p74 = por %p72, %p73
      %p75 = scmp.ne.s32.totalorder %s64, %s67
      %p76 = scmp.eq.s32.totalorder %s33, 1
      %p77 = por %p75, %p76
      %p78 = scmp.ne.s32.totalorder %s67, %s68
      %p79 = scmp.eq.s32.totalorder %s33, 0
      %p80 = por %p78, %p79
      %p81 = scmp.ne.s32.totalorder %s67, %s68
      %p82 = scmp.eq.s32.totalorder %s34, 1
      %p83 = por %p81, %p82
      %p85 = scmp.ne.s32.totalorder %s68, %s84
      %p86 = scmp.eq.s32.totalorder %s34, 0
      %p87 = por %p85, %p86
      %s88 = ssub.s32 %s28, %s35
      %p89 = scmp.eq.s32.totalorder %s88, 0
      %s91 = sadd.s32 %s90, 1
      %s92 = scalar_select %p89, %s90, %s91
      %p95 = pneg %p89
      %p96 = scmp.eq.s32.totalorder %s28, 1
      %p97 = por %p95, %p96
      %p98 = scmp.ne.s32.totalorder %s90, %s93
      %p99 = scmp.eq.s32.totalorder %s28, 0
      %p100 = por %p98, %p99
      %p101 = scmp.ne.s32.totalorder %s90, %s93
      %p102 = scmp.eq.s32.totalorder %s33, 1
      %p103 = por %p101, %p102
      %p104 = scmp.ne.s32.totalorder %s93, %s94
      %p105 = scmp.eq.s32.totalorder %s33, 0
      %p106 = por %p104, %p105
      %p107 = scmp.ne.s32.totalorder %s93, %s94
      %p108 = scmp.eq.s32.totalorder %s34, 1
      %p109 = por %p107, %p108
      %p111 = scmp.ne.s32.totalorder %s94, %s110
      %p112 = scmp.eq.s32.totalorder %s34, 0
      %p113 = por %p111, %p112
      %s115 = sadd.s32 %s114, 1
      %p118 = scmp.eq.s32.totalorder %s28, 1
      %p119 = scmp.ne.s32.totalorder %s114, %s116
      %p120 = scmp.eq.s32.totalorder %s28, 0
      %p121 = por %p119, %p120
      %p122 = scmp.ne.s32.totalorder %s114, %s116
      %p123 = scmp.eq.s32.totalorder %s33, 1
      %p124 = por %p122, %p123
      %p125 = scmp.ne.s32.totalorder %s116, %s117
      %p126 = scmp.eq.s32.totalorder %s33, 0
      %p127 = por %p125, %p126
      %p128 = scmp.ne.s32.totalorder %s116, %s117
      %p129 = scmp.eq.s32.totalorder %s34, 1
      %p130 = por %p128, %p129
      %p132 = scmp.ne.s32.totalorder %s117, %s131
      %p133 = scmp.eq.s32.totalorder %s34, 0
      %p134 = por %p132, %p133
      %s136 = sadd.s32 %s135, 1
      %p139 = scmp.eq.s32.totalorder %s28, 1
      %p140 = scmp.ne.s32.totalorder %s135, %s137
      %p141 = scmp.eq.s32.totalorder %s28, 0
      %p142 = por %p140, %p141
      %p143 = scmp.ne.s32.totalorder %s135, %s137
      %p144 = scmp.eq.s32.totalorder %s33, 1
      %p145 = por %p143, %p144
      %p146 = scmp.ne.s32.totalorder %s137, %s138
      %p147 = scmp.eq.s32.totalorder %s33, 0
      %p148 = por %p146, %p147
      %p149 = scmp.ne.s32.totalorder %s137, %s138
      %p150 = scmp.eq.s32.totalorder %s34, 1
      %p151 = por %p149, %p150
      %p153 = scmp.ne.s32.totalorder %s138, %s152
      %p154 = scmp.eq.s32.totalorder %s34, 0
      %p155 = por %p153, %p154
      %s157 = sadd.s32 %s156, 1
      %p160 = scmp.eq.s32.totalorder %s28, 1
      %p161 = scmp.ne.s32.totalorder %s156, %s158
      %p162 = scmp.eq.s32.totalorder %s28, 0
      %p163 = por %p161, %p162
      %p164 = scmp.ne.s32.totalorder %s156, %s158
      %p165 = scmp.eq.s32.totalorder %s33, 1
      %p166 = por %p164, %p165
      %p167 = scmp.ne.s32.totalorder %s158, %s159
      %p168 = scmp.eq.s32.totalorder %s33, 0
      %p169 = por %p167, %p168
      %p170 = scmp.ne.s32.totalorder %s158, %s159
      %p171 = scmp.eq.s32.totalorder %s34, 1
      %p172 = por %p170, %p171
      %p174 = scmp.ne.s32.totalorder %s159, %s173
      %p175 = scmp.eq.s32.totalorder %s34, 0
      %p176 = por %p174, %p175
      %s178 = sadd.s32 %s177, 1
      %p181 = scmp.eq.s32.totalorder %s28, 1
      %p182 = scmp.ne.s32.totalorder %s177, %s179
      %p183 = scmp.eq.s32.totalorder %s28, 0
      %p184 = por %p182, %p183
      %p185 = scmp.ne.s32.totalorder %s177, %s179
      %p186 = scmp.eq.s32.totalorder %s33, 1
      %p187 = por %p185, %p186
      %p188 = scmp.ne.s32.totalorder %s179, %s180
      %p189 = scmp.eq.s32.totalorder %s33, 0
      %p190 = por %p188, %p189
      %p191 = scmp.ne.s32.totalorder %s179, %s180
      %p192 = scmp.eq.s32.totalorder %s34, 1
      %p193 = por %p191, %p192
      %p195 = scmp.ne.s32.totalorder %s180, %s194
      %p196 = scmp.eq.s32.totalorder %s34, 0
      %p197 = por %p195, %p196
      %s199 = sadd.s32 %s198, 1
      %p202 = scmp.eq.s32.totalorder %s28, 1
      %p203 = scmp.ne.s32.totalorder %s198, %s200
      %p204 = scmp.eq.s32.totalorder %s28, 0
      %p205 = por %p203, %p204
      %p206 = scmp.ne.s32.totalorder %s198, %s200
      %p207 = scmp.eq.s32.totalorder %s33, 1
      %p208 = por %p206, %p207
      %p209 = scmp.ne.s32.totalorder %s200, %s201
      %p210 = scmp.eq.s32.totalorder %s33, 0
      %p211 = por %p209, %p210
      %p212 = scmp.ne.s32.totalorder %s200, %s201
      %p213 = scmp.eq.s32.totalorder %s34, 1
      %p214 = por %p212, %p213
      %p216 = scmp.ne.s32.totalorder %s201, %s215
      %p217 = scmp.eq.s32.totalorder %s34, 0
      %p218 = por %p216, %p217
      %s220 = sadd.s32 %s219, 1
      %p223 = scmp.eq.s32.totalorder %s28, 1
      %p224 = scmp.ne.s32.totalorder %s219, %s221
      %p225 = scmp.eq.s32.totalorder %s28, 0
      %p226 = por %p224, %p225
      %p227 = scmp.ne.s32.totalorder %s219, %s221
      %p228 = scmp.eq.s32.totalorder %s33, 1
      %p229 = por %p227, %p228
      %p230 = scmp.ne.s32.totalorder %s221, %s222
      %p231 = scmp.eq.s32.totalorder %s33, 0
      %p232 = por %p230, %p231
      %p233 = scmp.ne.s32.totalorder %s221, %s222
      %p234 = scmp.eq.s32.totalorder %s34, 1
      %p235 = por %p233, %p234
      %p237 = scmp.ne.s32.totalorder %s222, %s236
      %p238 = scmp.eq.s32.totalorder %s34, 0
      %p239 = por %p237, %p238
      %s241 = sadd.s32 %s240, 1
      %p244 = scmp.eq.s32.totalorder %s28, 1
      %p245 = scmp.ne.s32.totalorder %s240, %s242
      %p246 = scmp.eq.s32.totalorder %s28, 0
      %p247 = por %p245, %p246
      %p248 = scmp.ne.s32.totalorder %s240, %s242
      %p249 = scmp.eq.s32.totalorder %s33, 1
      %p250 = por %p248, %p249
      %p251 = scmp.ne.s32.totalorder %s242, %s243
      %p252 = scmp.eq.s32.totalorder %s33, 0
      %p253 = por %p251, %p252
      %p254 = scmp.ne.s32.totalorder %s242, %s243
      %p255 = scmp.eq.s32.totalorder %s34, 1
      %p256 = por %p254, %p255
      %p258 = scmp.ne.s32.totalorder %s243, %s257
      %p259 = scmp.eq.s32.totalorder %s34, 0
      %p260 = por %p258, %p259
      %s262 = sadd.s32 %s261, 1
      %p265 = scmp.eq.s32.totalorder %s28, 1
      %p266 = scmp.ne.s32.totalorder %s261, %s263
      %p267 = scmp.eq.s32.totalorder %s28, 0
      %p268 = por %p266, %p267
      %p269 = scmp.ne.s32.totalorder %s261, %s263
      %p270 = scmp.eq.s32.totalorder %s33, 1
      %p271 = por %p269, %p270
      %p272 = scmp.ne.s32.totalorder %s263, %s264
      %p273 = scmp.eq.s32.totalorder %s33, 0
      %p274 = por %p272, %p273
      %p275 = scmp.ne.s32.totalorder %s263, %s264
      %p276 = scmp.eq.s32.totalorder %s34, 1
      %p277 = por %p275, %p276
      %p279 = scmp.ne.s32.totalorder %s264, %s278
      %p280 = scmp.eq.s32.totalorder %s34, 0
      %p281 = por %p279, %p280
      %s283 = sadd.s32 %s282, 1
      %p286 = scmp.eq.s32.totalorder %s28, 1
      %p287 = scmp.ne.s32.totalorder %s282, %s284
      %p288 = scmp.eq.s32.totalorder %s28, 0
      %p289 = por %p287, %p288
      %p290 = scmp.ne.s32.totalorder %s282, %s284
      %p291 = scmp.eq.s32.totalorder %s33, 1
      %p292 = por %p290, %p291
      %p293 = scmp.ne.s32.totalorder %s284, %s285
      %p294 = scmp.eq.s32.totalorder %s33, 0
      %p295 = por %p293, %p294
      %p296 = scmp.ne.s32.totalorder %s284, %s285
      %p297 = scmp.eq.s32.totalorder %s34, 1
      %p298 = por %p296, %p297
      %p300 = scmp.ne.s32.totalorder %s285, %s299
      %p301 = scmp.eq.s32.totalorder %s34, 0
      %p302 = por %p300, %p301
      %s304 = sadd.s32 %s303, 1
      %p307 = scmp.eq.s32.totalorder %s28, 1
      %p308 = scmp.ne.s32.totalorder %s303, %s305
      %p309 = scmp.eq.s32.totalorder %s28, 0
      %p310 = por %p308, %p309
      %p311 = scmp.ne.s32.totalorder %s303, %s305
      %p312 = scmp.eq.s32.totalorder %s33, 1
      %p313 = por %p311, %p312
      %p314 = scmp.ne.s32.totalorder %s305, %s306
      %p315 = scmp.eq.s32.totalorder %s33, 0
      %p316 = por %p314, %p315
      %p317 = scmp.ne.s32.totalorder %s305, %s306
      %p318 = scmp.eq.s32.totalorder %s34, 1
      %p319 = por %p317, %p318
      %p321 = scmp.ne.s32.totalorder %s306, %s320
      %p322 = scmp.eq.s32.totalorder %s34, 0
      %p323 = por %p321, %p322
      %s325 = sadd.s32 %s324, 1
      %p328 = scmp.eq.s32.totalorder %s28, 1
      %p329 = scmp.ne.s32.totalorder %s324, %s326
      %p330 = scmp.eq.s32.totalorder %s28, 0
      %p331 = por %p329, %p330
      %p332 = scmp.ne.s32.totalorder %s324, %s326
      %p333 = scmp.eq.s32.totalorder %s33, 1
      %p334 = por %p332, %p333
      %p335 = scmp.ne.s32.totalorder %s326, %s327
      %p336 = scmp.eq.s32.totalorder %s33, 0
      %p337 = por %p335, %p336
      %p338 = scmp.ne.s32.totalorder %s326, %s327
      %p339 = scmp.eq.s32.totalorder %s34, 1
      %p340 = por %p338, %p339
      %p342 = scmp.ne.s32.totalorder %s327, %s341
      %p343 = scmp.eq.s32.totalorder %s34, 0
      %p344 = por %p342, %p343
      %s346 = sadd.s32 %s345, 1
      %p349 = scmp.eq.s32.totalorder %s28, 1
      %p350 = scmp.ne.s32.totalorder %s345, %s347
      %p351 = scmp.eq.s32.totalorder %s28, 0
      %p352 = por %p350, %p351
      %p353 = scmp.ne.s32.totalorder %s345, %s347
      %p354 = scmp.eq.s32.totalorder %s33, 1
      %p355 = por %p353, %p354
      %p356 = scmp.ne.s32.totalorder %s347, %s348
      %p357 = scmp.eq.s32.totalorder %s33, 0
      %p358 = por %p356, %p357
      %p359 = scmp.ne.s32.totalorder %s347, %s348
      %p360 = scmp.eq.s32.totalorder %s34, 1
      %p361 = por %p359, %p360
      %p363 = scmp.ne.s32.totalorder %s348, %s362
      %p364 = scmp.eq.s32.totalorder %s34, 0
      %p365 = por %p363, %p364
      %s367 = sadd.s32 %s366, 1
      %p370 = scmp.eq.s32.totalorder %s28, 1
      %p371 = scmp.ne.s32.totalorder %s366, %s368
      %p372 = scmp.eq.s32.totalorder %s28, 0
      %p373 = por %p371, %p372
      %p374 = scmp.ne.s32.totalorder %s366, %s368
      %p375 = scmp.eq.s32.totalorder %s33, 1
      %p376 = por %p374, %p375
      %p377 = scmp.ne.s32.totalorder %s368, %s369
      %p378 = scmp.eq.s32.totalorder %s33, 0
      %p379 = por %p377, %p378
      %p380 = scmp.ne.s32.totalorder %s368, %s369
      %p381 = scmp.eq.s32.totalorder %s34, 1
      %p382 = por %p380, %p381
      %p384 = scmp.ne.s32.totalorder %s369, %s383
      %p385 = scmp.eq.s32.totalorder %s34, 0
      %p386 = por %p384, %p385
      %s388 = sadd.s32 %s387, 1
      %p391 = scmp.eq.s32.totalorder %s28, 1
      %p392 = scmp.ne.s32.totalorder %s387, %s389
      %p393 = scmp.eq.s32.totalorder %s28, 0
      %p394 = por %p392, %p393
      %p395 = scmp.ne.s32.totalorder %s387, %s389
      %p396 = scmp.eq.s32.totalorder %s33, 1
      %p397 = por %p395, %p396
      %p398 = scmp.ne.s32.totalorder %s389, %s390
      %p399 = scmp.eq.s32.totalorder %s33, 0
      %p400 = por %p398, %p399
      %p401 = scmp.ne.s32.totalorder %s389, %s390
      %p402 = scmp.eq.s32.totalorder %s34, 1
      %p403 = por %p401, %p402
      %p405 = scmp.ne.s32.totalorder %s390, %s404
      %p406 = scmp.eq.s32.totalorder %s34, 0
      %p407 = por %p405, %p406
      %s408 = ssub.s32 %s28, %s35
      %p409 = scmp.eq.s32.totalorder %s408, 0
      %s411 = sadd.s32 %s410, 1
      %s412 = scalar_select %p409, %s410, %s411
      %p415 = pneg %p409
      %p416 = scmp.eq.s32.totalorder %s28, 1
      %p417 = por %p415, %p416
      %p418 = scmp.ne.s32.totalorder %s410, %s413
      %p419 = scmp.eq.s32.totalorder %s28, 0
      %p420 = por %p418, %p419
      %p421 = scmp.ne.s32.totalorder %s410, %s413
      %p422 = scmp.eq.s32.totalorder %s33, 1
      %p423 = por %p421, %p422
      %p424 = scmp.ne.s32.totalorder %s413, %s414
      %p425 = scmp.eq.s32.totalorder %s33, 0
      %p426 = por %p424, %p425
      %p427 = scmp.ne.s32.totalorder %s413, %s414
      %p428 = scmp.eq.s32.totalorder %s34, 1
      %p429 = por %p427, %p428
      %p431 = scmp.ne.s32.totalorder %s414, %s430
      %p432 = scmp.eq.s32.totalorder %s34, 0
      %p433 = por %p431, %p432
      %s434 = ssub.s32 %s28, %s35
      %p435 = scmp.eq.s32.totalorder %s434, 0
      %s437 = sadd.s32 %s436, 1
      %s438 = scalar_select %p435, %s436, %s437
      %p441 = pneg %p435
      %p442 = scmp.eq.s32.totalorder %s28, 1
      %p443 = por %p441, %p442
      %p444 = scmp.ne.s32.totalorder %s436, %s439
      %p445 = scmp.eq.s32.totalorder %s28, 0
      %p446 = por %p444, %p445
      %p447 = scmp.ne.s32.totalorder %s436, %s439
      %p448 = scmp.eq.s32.totalorder %s33, 1
      %p449 = por %p447, %p448
      %p450 = scmp.ne.s32.totalorder %s439, %s440
      %p451 = scmp.eq.s32.totalorder %s33, 0
      %p452 = por %p450, %p451
      %p453 = scmp.ne.s32.totalorder %s439, %s440
      %p454 = scmp.eq.s32.totalorder %s34, 1
      %p455 = por %p453, %p454
      %p457 = scmp.ne.s32.totalorder %s440, %s456
      %p458 = scmp.eq.s32.totalorder %s34, 0
      %p459 = por %p457, %p458
      %p460 = scmp.le.s32.totalorder 1, %s28
      %p461 = scmp.lt.s32.totalorder %s28, 3
      %p462 = pnand %p460, %p461
      %p463 = pneg %p462
      // Predicated region
      $region9: #{bi_attention_block_forward.1} parent=5 // pred_check
        _
      $region10: #{bi_attention_block_forward.1} parent=5 // pred_check_branch
        %465 = sbr.rel (%p462) target = $region12
      $region11: #{bi_attention_block_forward.1} parent=5 // pred_region
        %s466 = ssub.s32 %s28, 1
        // Predicated region
        $region13: #{bi_attention_block_forward.1} parent=11 // pred_check
          %p467 = pneg %p127
        $region14: #{bi_attention_block_forward.1} parent=11 // pred_check_branch
          %469 = sbr.rel (%p467) target = $region16
        $region15: #{bi_attention_block_forward.1} parent=11 // pred_region
          _
        $region16: #{bi_attention_block_forward.1} parent=11 // pred_fallthru
          _
        // Predicated region
        $region17: #{bi_attention_block_forward.1} parent=11 // pred_check
          %p470 = pneg %p148
        $region18: #{bi_attention_block_forward.1} parent=11 // pred_check_branch
          %472 = sbr.rel (%p470) target = $region20
        $region19: #{bi_attention_block_forward.1} parent=11 // pred_region
          _
        $region20: #{bi_attention_block_forward.1} parent=11 // pred_fallthru
          _
        // Predicated region
        $region21: #{bi_attention_block_forward.1} parent=11 // pred_check
          %p473 = pneg %p169
        $region22: #{bi_attention_block_forward.1} parent=11 // pred_check_branch
          %475 = sbr.rel (%p473) target = $region24
        $region23: #{bi_attention_block_forward.1} parent=11 // pred_region
          _
        $region24: #{bi_attention_block_forward.1} parent=11 // pred_fallthru
          _
        // Predicated region
        $region25: #{bi_attention_block_forward.1} parent=11 // pred_check
          %p476 = pneg %p190
        $region26: #{bi_attention_block_forward.1} parent=11 // pred_check_branch
          %478 = sbr.rel (%p476) target = $region28
        $region27: #{bi_attention_block_forward.1} parent=11 // pred_region
          _
        $region28: #{bi_attention_block_forward.1} parent=11 // pred_fallthru
          _
        // Predicated region
        $region29: #{bi_attention_block_forward.1} parent=11 // pred_check
          %p479 = pneg %p211
        $region30: #{bi_attention_block_forward.1} parent=11 // pred_check_branch
          %481 = sbr.rel (%p479) target = $region32
        $region31: #{bi_attention_block_forward.1} parent=11 // pred_region
          _
        $region32: #{bi_attention_block_forward.1} parent=11 // pred_fallthru
          _
        // Predicated region
        $region33: #{bi_attention_block_forward.1} parent=11 // pred_check
          %p482 = pneg %p232
        $region34: #{bi_attention_block_forward.1} parent=11 // pred_check_branch
          %484 = sbr.rel (%p482) target = $region36
        $region35: #{bi_attention_block_forward.1} parent=11 // pred_region
          _
        $region36: #{bi_attention_block_forward.1} parent=11 // pred_fallthru
          _
        // Predicated region
        $region37: #{bi_attention_block_forward.1} parent=11 // pred_check
          %p485 = pneg %p253
        $region38: #{bi_attention_block_forward.1} parent=11 // pred_check_branch
          %487 = sbr.rel (%p485) target = $region40
        $region39: #{bi_attention_block_forward.1} parent=11 // pred_region
          _
        $region40: #{bi_attention_block_forward.1} parent=11 // pred_fallthru
          _
        // Predicated region
        $region41: #{bi_attention_block_forward.1} parent=11 // pred_check
          %p488 = pneg %p274
        $region42: #{bi_attention_block_forward.1} parent=11 // pred_check_branch
          %490 = sbr.rel (%p488) target = $region44
        $region43: #{bi_attention_block_forward.1} parent=11 // pred_region
          _
        $region44: #{bi_attention_block_forward.1} parent=11 // pred_fallthru
          _
        // Predicated region
        $region45: #{bi_attention_block_forward.1} parent=11 // pred_check
          %p491 = pneg %p295
        $region46: #{bi_attention_block_forward.1} parent=11 // pred_check_branch
          %493 = sbr.rel (%p491) target = $region48
        $region47: #{bi_attention_block_forward.1} parent=11 // pred_region
          _
        $region48: #{bi_attention_block_forward.1} parent=11 // pred_fallthru
          _
        // Predicated region
        $region49: #{bi_attention_block_forward.1} parent=11 // pred_check
          %p494 = pneg %p316
        $region50: #{bi_attention_block_forward.1} parent=11 // pred_check_branch
          %496 = sbr.rel (%p494) target = $region52
        $region51: #{bi_attention_block_forward.1} parent=11 // pred_region
          _
        $region52: #{bi_attention_block_forward.1} parent=11 // pred_fallthru
          _
        // Predicated region
        $region53: #{bi_attention_block_forward.1} parent=11 // pred_check
          %p497 = pneg %p337
        $region54: #{bi_attention_block_forward.1} parent=11 // pred_check_branch
          %499 = sbr.rel (%p497) target = $region56
        $region55: #{bi_attention_block_forward.1} parent=11 // pred_region
          _
        $region56: #{bi_attention_block_forward.1} parent=11 // pred_fallthru
          _
        // Predicated region
        $region57: #{bi_attention_block_forward.1} parent=11 // pred_check
          %p500 = pneg %p358
        $region58: #{bi_attention_block_forward.1} parent=11 // pred_check_branch
          %502 = sbr.rel (%p500) target = $region60
        $region59: #{bi_attention_block_forward.1} parent=11 // pred_region
          _
        $region60: #{bi_attention_block_forward.1} parent=11 // pred_fallthru
          _
        // Predicated region
        $region61: #{bi_attention_block_forward.1} parent=11 // pred_check
          %p503 = pneg %p379
        $region62: #{bi_attention_block_forward.1} parent=11 // pred_check_branch
          %505 = sbr.rel (%p503) target = $region64
        $region63: #{bi_attention_block_forward.1} parent=11 // pred_region
          _
        $region64: #{bi_attention_block_forward.1} parent=11 // pred_fallthru
          _
        // Predicated region
        $region65: #{bi_attention_block_forward.1} parent=11 // pred_check
          %p506 = pneg %p400
        $region66: #{bi_attention_block_forward.1} parent=11 // pred_check_branch
          %508 = sbr.rel (%p506) target = $region68
        $region67: #{bi_attention_block_forward.1} parent=11 // pred_region
          _
        $region68: #{bi_attention_block_forward.1} parent=11 // pred_fallthru
          _
      $region12: #{bi_attention_block_forward.1} parent=5 // pred_fallthru
        _
      %p509 = scmp.lt.s32.totalorder %s28, 2
      // Predicated region
      $region69: #{bi_attention_block_forward.1} parent=5 // pred_check
        %p510 = pneg %p509
      $region70: #{bi_attention_block_forward.1} parent=5 // pred_check_branch
        %512 = sbr.rel (%p510) target = $region72
      $region71: #{bi_attention_block_forward.1} parent=5 // pred_region
        // Predicated region
        $region73: #{bi_attention_block_forward.1} parent=71 // pred_check
          %p513 = pneg %p48
        $region74: #{bi_attention_block_forward.1} parent=71 // pred_check_branch
          %515 = sbr.rel (%p513) target = $region76
        $region75: #{bi_attention_block_forward.1} parent=71 // pred_region
          %p516 = scmp.lt.s32.totalorder %s28, 1
          %s517 = scalar_select %p516, %s28, 1
          %s518 = smul.addr %s517, 11
          %s519 = smul.addr %s518, 8
          %s520 = scalar_lea.vmem %s0, %s519
        $region76: #{bi_attention_block_forward.1} parent=71 // pred_fallthru
          _
        // Predicated region
        $region77: #{bi_attention_block_forward.1} parent=71 // pred_check
          %p521 = pneg %p74
        $region78: #{bi_attention_block_forward.1} parent=71 // pred_check_branch
          %523 = sbr.rel (%p521) target = $region80
        $region79: #{bi_attention_block_forward.1} parent=71 // pred_region
          %p524 = scmp.lt.s32.totalorder %s28, 1
          %s525 = scalar_select %p524, %s28, 1
          %s526 = smul.addr %s525, 8
          %s527 = scalar_lea.vmem %s1, %s526
        $region80: #{bi_attention_block_forward.1} parent=71 // pred_fallthru
          _
        // Predicated region
        $region81: #{bi_attention_block_forward.1} parent=71 // pred_check
          %p528 = pneg %p100
        $region82: #{bi_attention_block_forward.1} parent=71 // pred_check_branch
          %530 = sbr.rel (%p528) target = $region84
        $region83: #{bi_attention_block_forward.1} parent=71 // pred_region
          %p531 = scmp.lt.s32.totalorder %s28, 1
          %s532 = scalar_select %p531, %s28, 1
          %s533 = scalar_lea.vmem %s2, %s532
        $region84: #{bi_attention_block_forward.1} parent=71 // pred_fallthru
          _
      $region72: #{bi_attention_block_forward.1} parent=5 // pred_fallthru
        _
      %p534 = scmp.le.s32.totalorder 1, %s28
      %p535 = scmp.lt.s32.totalorder %s28, 3
      %p536 = pnand %p534, %p535
      %p537 = pneg %p536
      // Predicated region
      $region85: #{bi_attention_block_forward.1} parent=5 // pred_check
        _
      $region86: #{bi_attention_block_forward.1} parent=5 // pred_check_branch
        %539 = sbr.rel (%p536) target = $region88
      $region87: #{bi_attention_block_forward.1} parent=5 // pred_region
        %s540 = ssub.s32 %s28, 1
        %p541 = scmp.lt.s32.totalorder %s33, 1
        %s542 = scalar_select %p541, %s33, 1
        %s543 = smul.addr %s542, 11
        %s544 = smul.addr %s543, 8
        %s545 = scalar_lea.vmem %s0, %s544
        %p546 = pneg %p54
        %p547 = pneg %p51
        %p548 = scmp.lt.s32.totalorder %s33, 1
        %s549 = scalar_select %p548, %s33, 1
        %s550 = smul.addr %s549, 8
        %s551 = scalar_lea.vmem %s1, %s550
        %p552 = pneg %p80
        %p553 = pneg %p77
        %p554 = scmp.lt.s32.totalorder %s33, 1
        %s555 = scalar_select %p554, %s33, 1
        %s556 = scalar_lea.vmem %s2, %s555
        %p557 = pneg %p106
        %p558 = pneg %p103
        %p559 = pneg %p127
        %p560 = pneg %p124
        %p561 = pneg %p148
        %p562 = pneg %p145
        %p563 = pneg %p169
        %p564 = pneg %p166
        %p565 = pneg %p190
        %p566 = pneg %p187
        %p567 = pneg %p211
        %p568 = pneg %p208
        %p569 = pneg %p232
        %p570 = pneg %p229
        %p571 = pneg %p253
        %p572 = pneg %p250
        %p573 = pneg %p274
        %p574 = pneg %p271
        %p575 = pneg %p295
        %p576 = pneg %p292
        %p577 = pneg %p316
        %p578 = pneg %p313
        %p579 = pneg %p337
        %p580 = pneg %p334
        %p581 = pneg %p358
        %p582 = pneg %p355
        %p583 = pneg %p379
        %p584 = pneg %p376
        %p585 = pneg %p400
        %p586 = pneg %p397
        %p587 = pneg %p426
        %p588 = pneg %p423
        %p589 = scmp.lt.s32.totalorder %s33, 1
        %s590 = scalar_select %p589, %s33, 1
        %s591 = smul.addr %s590, 11
        %s592 = smul.addr %s591, 8
        %s593 = scalar_lea.vmem %s17, %s592
        %p594 = pneg %p452
        %p595 = pneg %p449
        %s596 = sand.u32 %s439, 1
        %s597 = scalar_lea.sflag [#allocation3], %s596
        %s598 = sand.u32 %s439, 1
        %s599 = smul.addr %s598, 8
        %s600 = scalar_lea.vmem [#allocation2], %s599
        %p601 = scmp.lt.s32.totalorder %s33, 1
        %s602 = scalar_select %p601, %s33, 1
        %s603 = smul.addr %s602, 11
        %s604 = smul.addr %s603, 8
        %s605 = scalar_lea.vmem %s0, %s604
        %p606 = scmp.lt.s32.totalorder %s33, 1
        %s607 = scalar_select %p606, %s33, 1
        %s608 = smul.addr %s607, 8
        %s609 = scalar_lea.vmem %s1, %s608
        %p610 = scmp.lt.s32.totalorder %s33, 1
        %s611 = scalar_select %p610, %s33, 1
        %s612 = scalar_lea.vmem %s2, %s611
        %p613 = scmp.lt.s32.totalorder %s33, 1
        %s614 = scalar_select %p613, %s33, 1
        %s615 = smul.addr %s614, 11
        %s616 = smul.addr %s615, 8
        %s617 = scalar_lea.vmem %s17, %s616
        %v619 = vld [vmem:[%s605] sm:$0xff]
        %v620 = vld [vmem:[%s605 + $0x8] sm:$0xff]
        %v621 = vld [vmem:[%s605 + $0x10] sm:$0xff]
        %v622 = vld [vmem:[%s605 + $0x18] sm:$0xff]
        %v623 = vld [vmem:[%s605 + $0x20] sm:$0xff]
        %v624 = vld [vmem:[%s605 + $0x28] sm:$0xff]
        %v625 = vld [vmem:[%s605 + $0x30] sm:$0xff]
        %v626 = vld [vmem:[%s605 + $0x38] sm:$0xff]
        %v627 = vld [vmem:[%s605 + $0x40] sm:$0xff]
        %v628 = vld [vmem:[%s605 + $0x48] sm:$0xff]
        %v629 = vld [vmem:[%s605 + $0x50] sm:$0xf]
        %v630 = vld [vmem:[%s609] sm:$0xff]
        %v631 = vld [vmem:[%s3] sm:$0x1]
        %v632 = vld [vmem:[%s4] sm:$0x1]
        %vm633 = vcmask 523264
        %v634 = vsel %vm633, %v619, 0.0
        %635 = vadd.xlane.f32.xlu0 %v634
        %v636 = vpop.xlane.xlu0 %635
        %v637 = vsel %vm633, %v620, 0.0
        %638 = vadd.xlane.f32.xlu0 %v637
        %v639 = vpop.xlane.xlu0 %638
        %v640 = vsel %vm633, %v621, 0.0
        %641 = vadd.xlane.f32.xlu0 %v640
        %v642 = vpop.xlane.xlu0 %641
        %v643 = vsel %vm633, %v622, 0.0
        %644 = vadd.xlane.f32.xlu0 %v643
        %v645 = vpop.xlane.xlu0 %644
        %v646 = vsel %vm633, %v623, 0.0
        %647 = vadd.xlane.f32.xlu0 %v646
        %v648 = vpop.xlane.xlu0 %647
        %v649 = vsel %vm633, %v624, 0.0
        %650 = vadd.xlane.f32.xlu0 %v649
        %v651 = vpop.xlane.xlu0 %650
        %v652 = vsel %vm633, %v625, 0.0
        %653 = vadd.xlane.f32.xlu0 %v652
        %v654 = vpop.xlane.xlu0 %653
        %v655 = vsel %vm633, %v626, 0.0
        %656 = vadd.xlane.f32.xlu0 %v655
        %v657 = vpop.xlane.xlu0 %656
        %v658 = vsel %vm633, %v627, 0.0
        %659 = vadd.xlane.f32.xlu0 %v658
        %v660 = vpop.xlane.xlu0 %659
        %v661 = vsel %vm633, %v628, 0.0
        %662 = vadd.xlane.f32.xlu0 %v661
        %v663 = vpop.xlane.xlu0 %662
        %vm664 = vcmask 519168
        %v665 = vsel %vm664, %v629, 0.0
        %666 = vadd.xlane.f32.xlu0 %v665
        %v667 = vpop.xlane.xlu0 %666
        %v668 = vrcp.pop 64.0
        %v669 = vmul.f32 %v636, %v668
        %v670 = vmul.f32 %v639, %v668
        %v671 = vmul.f32 %v642, %v668
        %v672 = vmul.f32 %v645, %v668
        %v673 = vmul.f32 %v648, %v668
        %v674 = vmul.f32 %v651, %v668
        %v675 = vmul.f32 %v654, %v668
        %v676 = vmul.f32 %v657, %v668
        %v677 = vmul.f32 %v660, %v668
        %v678 = vmul.f32 %v663, %v668
        %v679 = vmul.f32 %v667, %v668
        %v680 = vsub.f32 %v619, %v669
        %v681 = vsub.f32 %v620, %v670
        %v682 = vsub.f32 %v621, %v671
        %v683 = vsub.f32 %v622, %v672
        %v684 = vsub.f32 %v623, %v673
        %v685 = vsub.f32 %v624, %v674
        %v686 = vsub.f32 %v625, %v675
        %v687 = vsub.f32 %v626, %v676
        %v688 = vsub.f32 %v627, %v677
        %v689 = vsub.f32 %v628, %v678
        %v690 = vsub.f32 %v629, %v679
        %v691 = vmul.f32 %v680, %v680
        %v692 = vmul.f32 %v681, %v681
        %v693 = vmul.f32 %v682, %v682
        %v694 = vmul.f32 %v683, %v683
        %v695 = vmul.f32 %v684, %v684
        %v696 = vmul.f32 %v685, %v685
        %v697 = vmul.f32 %v686, %v686
        %v698 = vmul.f32 %v687, %v687
        %v699 = vmul.f32 %v688, %v688
        %v700 = vmul.f32 %v689, %v689
        %v701 = vmul.f32 %v690, %v690
        %v702 = vsel %vm633, %v691, 0.0
        %703 = vadd.xlane.f32.xlu0 %v702
        %v704 = vpop.xlane.xlu0 %703
        %v705 = vsel %vm633, %v692, 0.0
        %706 = vadd.xlane.f32.xlu0 %v705
        %v707 = vpop.xlane.xlu0 %706
        %v708 = vsel %vm633, %v693, 0.0
        %709 = vadd.xlane.f32.xlu0 %v708
        %v710 = vpop.xlane.xlu0 %709
        %v711 = vsel %vm633, %v694, 0.0
        %712 = vadd.xlane.f32.xlu0 %v711
        %v713 = vpop.xlane.xlu0 %712
        %v714 = vsel %vm633, %v695, 0.0
        %715 = vadd.xlane.f32.xlu0 %v714
        %v716 = vpop.xlane.xlu0 %715
        %v717 = vsel %vm633, %v696, 0.0
        %718 = vadd.xlane.f32.xlu0 %v717
        %v719 = vpop.xlane.xlu0 %718
        %v720 = vsel %vm633, %v697, 0.0
        %721 = vadd.xlane.f32.xlu0 %v720
        %v722 = vpop.xlane.xlu0 %721
        %v723 = vsel %vm633, %v698, 0.0
        %724 = vadd.xlane.f32.xlu0 %v723
        %v725 = vpop.xlane.xlu0 %724
        %v726 = vsel %vm633, %v699, 0.0
        %727 = vadd.xlane.f32.xlu0 %v726
        %v728 = vpop.xlane.xlu0 %727
        %v729 = vsel %vm633, %v700, 0.0
        %730 = vadd.xlane.f32.xlu0 %v729
        %v731 = vpop.xlane.xlu0 %730
        %v732 = vsel %vm664, %v701, 0.0
        %733 = vadd.xlane.f32.xlu0 %v732
        %v734 = vpop.xlane.xlu0 %733
        %v735 = vmul.f32 %v704, %v668
        %v736 = vmul.f32 %v707, %v668
        %v737 = vmul.f32 %v710, %v668
        %v738 = vmul.f32 %v713, %v668
        %v739 = vmul.f32 %v716, %v668
        %v740 = vmul.f32 %v719, %v668
        %v741 = vmul.f32 %v722, %v668
        %v742 = vmul.f32 %v725, %v668
        %v743 = vmul.f32 %v728, %v668
        %v744 = vmul.f32 %v731, %v668
        %v745 = vmul.f32 %v734, %v668
        %v746 = vadd.f32 %v735, 1e-05
        %v747 = vadd.f32 %v736, 1e-05
        %v748 = vadd.f32 %v737, 1e-05
        %v749 = vadd.f32 %v738, 1e-05
        %v750 = vadd.f32 %v739, 1e-05
        %v751 = vadd.f32 %v740, 1e-05
        %v752 = vadd.f32 %v741, 1e-05
        %v753 = vadd.f32 %v742, 1e-05
        %v754 = vadd.f32 %v743, 1e-05
        %v755 = vadd.f32 %v744, 1e-05
        %v756 = vadd.f32 %v745, 1e-05
        %v757 = vrsqrt.pop %v746
        %v758 = vrsqrt.pop %v747
        %v759 = vrsqrt.pop %v748
        %v760 = vrsqrt.pop %v749
        %v761 = vrsqrt.pop %v750
        %v762 = vrsqrt.pop %v751
        %v763 = vrsqrt.pop %v752
        %v764 = vrsqrt.pop %v753
        %v765 = vrsqrt.pop %v754
        %v766 = vrsqrt.pop %v755
        %v767 = vrsqrt.pop %v756
        %v768 = vmul.f32 %v680, %v757
        %v769 = vmul.f32 %v681, %v758
        %v770 = vmul.f32 %v682, %v759
        %v771 = vmul.f32 %v683, %v760
        %v772 = vmul.f32 %v684, %v761
        %v773 = vmul.f32 %v685, %v762
        %v774 = vmul.f32 %v686, %v763
        %v775 = vmul.f32 %v687, %v764
        %v776 = vmul.f32 %v688, %v765
        %v777 = vmul.f32 %v689, %v766
        %v778 = vmul.f32 %v690, %v767
        %v780 = vlaneseq
        %v781 = vshrl.u32 %v780, 7
        %v782 = vsub.s32 0, %v781
        %v783 = vrot.slane %v631, %v782
        %v785 = vmul.f32 %v768, %v783
        %v786 = vmul.f32 %v769, %v783
        %v787 = vmul.f32 %v770, %v783
        %v788 = vmul.f32 %v771, %v783
        %v789 = vmul.f32 %v772, %v783
        %v790 = vmul.f32 %v773, %v783
        %v791 = vmul.f32 %v774, %v783
        %v792 = vmul.f32 %v775, %v783
        %v793 = vmul.f32 %v776, %v783
        %v794 = vmul.f32 %v777, %v783
        %v795 = vmul.f32 %v778, %v783
        %v797 = vlaneseq
        %v798 = vshrl.u32 %v797, 7
        %v799 = vsub.s32 0, %v798
        %v800 = vrot.slane %v632, %v799
        %v802 = vadd.f32 %v785, %v800
        %v803 = vadd.f32 %v786, %v800
        %v804 = vadd.f32 %v787, %v800
        %v805 = vadd.f32 %v788, %v800
        %v806 = vadd.f32 %v789, %v800
        %v807 = vadd.f32 %v790, %v800
        %v808 = vadd.f32 %v791, %v800
        %v809 = vadd.f32 %v792, %v800
        %v810 = vadd.f32 %v793, %v800
        %v811 = vadd.f32 %v794, %v800
        %v812 = vadd.f32 %v795, %v800
        %v813 = vld [vmem:[%s5] sm:$0x1]
        %v814 = vld [vmem:[%s6] sm:$0x1]
        %vm815 = vcmask 785408
        %v816 = vsel %vm815, %v630, 0.0
        %817 = vadd.xlane.f32.xlu0 %v816
        %v818 = vpop.xlane.xlu0 %817
        %v819 = vrcp.pop 96.0
        %v820 = vmul.f32 %v818, %v819
        %v821 = vsub.f32 %v630, %v820
        %v822 = vmul.f32 %v821, %v821
        %v823 = vsel %vm815, %v822, 0.0
        %824 = vadd.xlane.f32.xlu0 %v823
        %v825 = vpop.xlane.xlu0 %824
        %v826 = vmul.f32 %v825, %v819
        %v827 = vadd.f32 %v826, 1e-05
        %v828 = vrsqrt.pop %v827
        %v829 = vmul.f32 %v821, %v828
        %v831 = vlaneseq
        %v832 = vshrl.u32 %v831, 7
        %v833 = vsub.s32 0, %v832
        %v834 = vrot.slane %v813, %v833
        %v836 = vmul.f32 %v829, %v834
        %v838 = vlaneseq
        %v839 = vshrl.u32 %v838, 7
        %v840 = vsub.s32 0, %v839
        %v841 = vrot.slane %v814, %v840
        %v843 = vadd.f32 %v836, %v841
        %v844 = vld [vmem:[%s7] sm:$0xff]
        %v845 = vld [vmem:[%s7 + $0x8] sm:$0xff]
        %v846 = vld [vmem:[%s7 + $0x10] sm:$0xff]
        %v847 = vld [vmem:[%s7 + $0x18] sm:$0xff]
        %v848 = vld [vmem:[%s7 + $0x20] sm:$0xff]
        %v849 = vld [vmem:[%s7 + $0x28] sm:$0xff]
        %v850 = vld [vmem:[%s7 + $0x30] sm:$0xff]
        %v851 = vld [vmem:[%s7 + $0x38] sm:$0xff]
        %v852 = vpack.c.bf16 %v803, %v802
        %v853 = vpack.c.bf16 %v805, %v804
        %v854 = vpack.c.bf16 %v807, %v806
        %v855 = vpack.c.bf16 %v809, %v808
        %v856 = vpack.c.bf16 %v811, %v810
        %v857 = vpack.c.bf16 %v812, %v812
        %v858 = vpack.c.bf16 %v845, %v844
        %v859 = vpack.c.bf16 %v847, %v846
        %v860 = vpack.c.bf16 %v849, %v848
        %v861 = vpack.c.bf16 %v851, %v850
        %v862 = vld [vmem:[%s8] sm:$0x1]
        %v864 = vlaneseq
        %v865 = vshrl.u32 %v864, 7
        %v866 = vsub.s32 0, %v865
        %v867 = vrot.slane %v862, %v866
        %v870 = vsel %vm633, %v852, 0
        %v873 = vsel %vm633, %v853, 0
        %v876 = vsel %vm633, %v854, 0
        %v879 = vsel %vm633, %v855, 0
        %v882 = vsel %vm633, %v856, 0
        %v885 = vsel %vm633, %v857, 0
        %887 = vmatprep.subr.bf16.mxu0 0
        %888 = vmatpush1.bf16.msra.mxu0 %v858
        %889 = vmatprep.subr.bf16.mxu0 0
        %890 = vmatpush1.bf16.msra.mxu0 %v859
        %891 = vmatprep.subr.bf16.mxu0 0
        %892 = vmatpush1.bf16.msra.mxu0 %v860
        %893 = vmatprep.subr.bf16.mxu0 0
        %894 = vmatpush1.bf16.msra.mxu0 %v861
        %895 = vmatprep.subr.bf16.mxu0 0
        %896 = vmatpush1.bf16.msra.mxu0 0
        %897 = vmatprep.subr.bf16.mxu0 0
        %898 = vmatpush1.bf16.msra.mxu0 0
        %899 = vmatprep.subr.bf16.mxu0 0
        %900 = vmatpush1.bf16.msra.mxu0 0
        %901 = vmatprep.subr.bf16.mxu0 0
        %902 = vmatpush1.bf16.msra.mxu0 0
        %903 = vmatprep.subr.bf16.mxu0 0
        %904 = vmatpush1.bf16.msra.mxu0 0
        %905 = vmatprep.subr.bf16.mxu0 0
        %906 = vmatpush1.bf16.msra.mxu0 0
        %907 = vmatprep.subr.bf16.mxu0 0
        %908 = vmatpush1.bf16.msra.mxu0 0
        %909 = vmatprep.subr.bf16.mxu0 0
        %910 = vmatpush1.bf16.msra.mxu0 0
        %911 = vmatprep.subr.bf16.mxu0 0
        %912 = vmatpush1.bf16.msra.mxu0 0
        %913 = vmatprep.subr.bf16.mxu0 0
        %914 = vmatpush1.bf16.msra.mxu0 0
        %915 = vmatprep.subr.bf16.mxu0 0
        %916 = vmatpush1.bf16.msra.mxu0 0
        %917 = vmatprep.subr.bf16.mxu0 0
        %918 = vmatpush1.bf16.msra.mxu0 0
        %919 = vmatprep.mubr.bf16.mxu0 0
        %920 = vmatmul.mubr.bf16.gmra.mrb[0].mxu0 %v870
        %v921 = vpop.f32.mrb[0].mxu0
        %v922 = vadd.f32 %v867, %v921
        %v923 = vpop.f32.mrb[0].mxu0
        %v924 = vpop.f32.mrb[0].mxu0
        %v925 = vadd.f32 %v867, %v924
        %v926 = vpop.f32.mrb[0].mxu0
        %927 = vmatprep.mubr.bf16.mxu0 0
        %928 = vmatmul.mubr.bf16.gmra.mrb[0].mxu0 %v873
        %v929 = vpop.f32.mrb[0].mxu0
        %v930 = vadd.f32 %v867, %v929
        %v931 = vpop.f32.mrb[0].mxu0
        %v932 = vpop.f32.mrb[0].mxu0
        %v933 = vadd.f32 %v867, %v932
        %v934 = vpop.f32.mrb[0].mxu0
        %935 = vmatprep.mubr.bf16.mxu0 0
        %936 = vmatmul.mubr.bf16.gmra.mrb[0].mxu0 %v876
        %v937 = vpop.f32.mrb[0].mxu0
        %v938 = vadd.f32 %v867, %v937
        %v939 = vpop.f32.mrb[0].mxu0
        %v940 = vpop.f32.mrb[0].mxu0
        %v941 = vadd.f32 %v867, %v940
        %v942 = vpop.f32.mrb[0].mxu0
        %943 = vmatprep.mubr.bf16.mxu0 0
        %944 = vmatmul.mubr.bf16.gmra.mrb[0].mxu0 %v879
        %v945 = vpop.f32.mrb[0].mxu0
        %v946 = vadd.f32 %v867, %v945
        %v947 = vpop.f32.mrb[0].mxu0
        %v948 = vpop.f32.mrb[0].mxu0
        %v949 = vadd.f32 %v867, %v948
        %v950 = vpop.f32.mrb[0].mxu0
        %951 = vmatprep.mubr.bf16.mxu0 0
        %952 = vmatmul.mubr.bf16.gmra.mrb[0].mxu0 %v882
        %v953 = vpop.f32.mrb[0].mxu0
        %v954 = vadd.f32 %v867, %v953
        %v955 = vpop.f32.mrb[0].mxu0
        %v956 = vpop.f32.mrb[0].mxu0
        %v957 = vadd.f32 %v867, %v956
        %v958 = vpop.f32.mrb[0].mxu0
        %959 = vmatprep.mubr.bf16.mxu0 0
        %960 = vmatmul.mubr.bf16.gmra.mrb[0].mxu0 %v885
        %v961 = vpop.f32.mrb[0].mxu0
        %v962 = vadd.f32 %v867, %v961
        %v963 = vpop.f32.mrb[0].mxu0
        %v964 = vpop.f32.mrb[0].mxu0
        %v965 = vpop.f32.mrb[0].mxu0
        %966 = vdwg.mxu0
        %v967 = vld [vmem:[%s9] sm:$0xff]
        %v968 = vld [vmem:[%s9 + $0x8] sm:$0xff]
        %v969 = vld [vmem:[%s9 + $0x10] sm:$0xff]
        %v970 = vld [vmem:[%s9 + $0x18] sm:$0xff]
        %v971 = vld [vmem:[%s9 + $0x20] sm:$0xff]
        %v972 = vld [vmem:[%s9 + $0x28] sm:$0xff]
        %v973 = vld [vmem:[%s9 + $0x30] sm:$0xff]
        %v974 = vld [vmem:[%s9 + $0x38] sm:$0xff]
        %v975 = vld [vmem:[%s9 + $0x40] sm:$0xff]
        %v976 = vld [vmem:[%s9 + $0x48] sm:$0xff]
        %v977 = vld [vmem:[%s9 + $0x50] sm:$0xff]
        %v978 = vld [vmem:[%s9 + $0x58] sm:$0xff]
        %v979 = vpack.c.bf16 %v843, %v843
        %v980 = vpack.c.bf16 %v968, %v967
        %v981 = vpack.c.bf16 %v970, %v969
        %v982 = vpack.c.bf16 %v972, %v971
        %v983 = vpack.c.bf16 %v974, %v973
        %v984 = vpack.c.bf16 %v976, %v975
        %v985 = vpack.c.bf16 %v978, %v977
        %v986 = vld [vmem:[%s10] sm:$0x1]
        %v988 = vlaneseq
        %v989 = vshrl.u32 %v988, 7
        %v990 = vsub.s32 0, %v989
        %v991 = vrot.slane %v986, %v990
        %v994 = vsel %vm815, %v979, 0
        %996 = vmatprep.subr.bf16.mxu0 0
        %997 = vmatpush1.bf16.msra.mxu0 %v980
        %998 = vmatprep.subr.bf16.mxu0 0
        %999 = vmatpush1.bf16.msra.mxu0 %v981
        %1000 = vmatprep.subr.bf16.mxu0 0
        %1001 = vmatpush1.bf16.msra.mxu0 %v982
        %1002 = vmatprep.subr.bf16.mxu0 0
        %1003 = vmatpush1.bf16.msra.mxu0 %v983
        %1004 = vmatprep.subr.bf16.mxu0 0
        %1005 = vmatpush1.bf16.msra.mxu0 %v984
        %1006 = vmatprep.subr.bf16.mxu0 0
        %1007 = vmatpush1.bf16.msra.mxu0 %v985
        %1008 = vmatprep.subr.bf16.mxu0 0
        %1009 = vmatpush1.bf16.msra.mxu0 0
        %1010 = vmatprep.subr.bf16.mxu0 0
        %1011 = vmatpush1.bf16.msra.mxu0 0
        %1012 = vmatprep.subr.bf16.mxu0 0
        %1013 = vmatpush1.bf16.msra.mxu0 0
        %1014 = vmatprep.subr.bf16.mxu0 0
        %1015 = vmatpush1.bf16.msra.mxu0 0
        %1016 = vmatprep.subr.bf16.mxu0 0
        %1017 = vmatpush1.bf16.msra.mxu0 0
        %1018 = vmatprep.subr.bf16.mxu0 0
        %1019 = vmatpush1.bf16.msra.mxu0 0
        %1020 = vmatprep.subr.bf16.mxu0 0
        %1021 = vmatpush1.bf16.msra.mxu0 0
        %1022 = vmatprep.subr.bf16.mxu0 0
        %1023 = vmatpush1.bf16.msra.mxu0 0
        %1024 = vmatprep.subr.bf16.mxu0 0
        %1025 = vmatpush1.bf16.msra.mxu0 0
        %1026 = vmatprep.subr.bf16.mxu0 0
        %1027 = vmatpush1.bf16.msra.mxu0 0
        %1028 = vmatprep.mubr.bf16.mxu0 0
        %1029 = vmatmul.mubr.bf16.gmra.mrb[0].mxu0 %v994
        %v1030 = vpop.f32.mrb[0].mxu0
        %v1031 = vadd.f32 %v991, %v1030
        %v1032 = vpop.f32.mrb[0].mxu0
        %v1033 = vpop.f32.mrb[0].mxu0
        %v1034 = vpop.f32.mrb[0].mxu0
        %1035 = vdwg.mxu0
        %v1036 = vld [vmem:[%s612] sm:$0x1]
        %vm1037 = vcmp.eq.f32.partialorder %v1036, 0.0
        %v1038 = vsel %vm1037, -9e+15, %v1036
        %v1039 = vld [vmem:[%s11] sm:$0xff]
        %v1040 = vld [vmem:[%s11 + $0x8] sm:$0xff]
        %v1041 = vld [vmem:[%s11 + $0x10] sm:$0xff]
        %v1042 = vld [vmem:[%s11 + $0x18] sm:$0xff]
        %v1043 = vld [vmem:[%s11 + $0x20] sm:$0xff]
        %v1044 = vld [vmem:[%s11 + $0x28] sm:$0xff]
        %v1045 = vld [vmem:[%s11 + $0x30] sm:$0xff]
        %v1046 = vld [vmem:[%s11 + $0x38] sm:$0xff]
        %v1047 = vpack.c.bf16 %v925, %v922
        %v1048 = vpack.c.bf16 %v933, %v930
        %v1049 = vpack.c.bf16 %v941, %v938
        %v1050 = vpack.c.bf16 %v949, %v946
        %v1051 = vpack.c.bf16 %v957, %v954
        %v1052 = vpack.c.bf16 %v962, %v962
        %v1053 = vpack.c.bf16 %v1031, %v1031
        %vm1054 = vcmask 64512
        %v1056 = vsel %vm1054, %v1047, 0
        %v1059 = vsel %vm1054, %v1048, 0
        %v1062 = vsel %vm1054, %v1049, 0
        %v1065 = vsel %vm1054, %v1050, 0
        %v1068 = vsel %vm1054, %v1051, 0
        %v1071 = vsel %vm1054, %v1052, 0
        %v1074 = vsel %vm1054, %v1053, 0
        %1076 = vmatprep.subr.bf16.mxu0 0
        %1077 = vmatpush1.bf16.xpose.msra.mxu0 %v1074
        %1078 = vmatprep.subr.bf16.mxu0 0
        %1079 = vmatpush1.bf16.xpose.msra.mxu0 0
        %1080 = vmatprep.subr.bf16.mxu0 0
        %1081 = vmatpush1.bf16.xpose.msra.mxu0 0
        %1082 = vmatprep.subr.bf16.mxu0 0
        %1083 = vmatpush1.bf16.xpose.msra.mxu0 0
        %1084 = vmatprep.subr.bf16.mxu0 0
        %1085 = vmatpush1.bf16.xpose.msra.mxu0 0
        %1086 = vmatprep.subr.bf16.mxu0 0
        %1087 = vmatpush1.bf16.xpose.msra.mxu0 0
        %1088 = vmatprep.subr.bf16.mxu0 0
        %1089 = vmatpush1.bf16.xpose.msra.mxu0 0
        %1090 = vmatprep.subr.bf16.mxu0 0
        %1091 = vmatpush1.bf16.xpose.msra.mxu0 0
        %1092 = vmatprep.subr.bf16.mxu0 0
        %1093 = vmatpush1.bf16.xpose.msra.mxu0 0
        %1094 = vmatprep.subr.bf16.mxu0 0
        %1095 = vmatpush1.bf16.xpose.msra.mxu0 0
        %1096 = vmatprep.subr.bf16.mxu0 0
        %1097 = vmatpush1.bf16.xpose.msra.mxu0 0
        %1098 = vmatprep.subr.bf16.mxu0 0
        %1099 = vmatpush1.bf16.xpose.msra.mxu0 0
        %1100 = vmatprep.subr.bf16.mxu0 0
        %1101 = vmatpush1.bf16.xpose.msra.mxu0 0
        %1102 = vmatprep.subr.bf16.mxu0 0
        %1103 = vmatpush1.bf16.xpose.msra.mxu0 0
        %1104 = vmatprep.subr.bf16.mxu0 0
        %1105 = vmatpush1.bf16.xpose.msra.mxu0 0
        %1106 = vmatprep.subr.bf16.mxu0 0
        %1107 = vmatpush1.bf16.xpose.msra.mxu0 0
        %1108 = vmatprep.mubr.bf16.mxu0 0
        %1109 = vmatmul.mubr.bf16.gmra.mrb[0].mxu0 %v1056
        %v1110 = vpop.f32.mrb[0].mxu0
        %v1111 = vadd.f32 0.0, %v1110
        %v1112 = vpop.f32.mrb[0].mxu0
        %v1113 = vpop.f32.mrb[0].mxu0
        %v1114 = vadd.f32 0.0, %v1113
        %v1115 = vpop.f32.mrb[0].mxu0
        %1116 = vmatprep.mubr.bf16.mxu0 0
        %1117 = vmatmul.mubr.bf16.gmra.mrb[0].mxu0 %v1059
        %v1118 = vpop.f32.mrb[0].mxu0
        %v1119 = vadd.f32 0.0, %v1118
        %v1120 = vpop.f32.mrb[0].mxu0
        %v1121 = vpop.f32.mrb[0].mxu0
        %v1122 = vadd.f32 0.0, %v1121
        %v1123 = vpop.f32.mrb[0].mxu0
        %1124 = vmatprep.mubr.bf16.mxu0 0
        %1125 = vmatmul.mubr.bf16.gmra.mrb[0].mxu0 %v1062
        %v1126 = vpop.f32.mrb[0].mxu0
        %v1127 = vadd.f32 0.0, %v1126
        %v1128 = vpop.f32.mrb[0].mxu0
        %v1129 = vpop.f32.mrb[0].mxu0
        %v1130 = vadd.f32 0.0, %v1129
        %v1131 = vpop.f32.mrb[0].mxu0
        %1132 = vmatprep.mubr.bf16.mxu0 0
        %1133 = vmatmul.mubr.bf16.gmra.mrb[0].mxu0 %v1065
        %v1134 = vpop.f32.mrb[0].mxu0
        %v1135 = vadd.f32 0.0, %v1134
        %v1136 = vpop.f32.mrb[0].mxu0
        %v1137 = vpop.f32.mrb[0].mxu0
        %v1138 = vadd.f32 0.0, %v1137
        %v1139 = vpop.f32.mrb[0].mxu0
        %1140 = vmatprep.mubr.bf16.mxu0 0
        %1141 = vmatmul.mubr.bf16.gmra.mrb[0].mxu0 %v1068
        %v1142 = vpop.f32.mrb[0].mxu0
        %v1143 = vadd.f32 0.0, %v1142
        %v1144 = vpop.f32.mrb[0].mxu0
        %v1145 = vpop.f32.mrb[0].mxu0
        %v1146 = vadd.f32 0.0, %v1145
        %v1147 = vpop.f32.mrb[0].mxu0
        %1148 = vmatprep.mubr.bf16.mxu0 0
        %1149 = vmatmul.mubr.bf16.gmra.mrb[0].mxu0 %v1071
        %v1150 = vpop.f32.mrb[0].mxu0
        %v1151 = vadd.f32 0.0, %v1150
        %v1152 = vpop.f32.mrb[0].mxu0
        %v1153 = vpop.f32.mrb[0].mxu0
        %v1154 = vpop.f32.mrb[0].mxu0
        %1155 = vdwg.mxu0
        %v1156 = vmax.f32 %v1111, -50000.0
        %v1157 = vmax.f32 %v1114, -50000.0
        %v1158 = vmax.f32 %v1119, -50000.0
        %v1159 = vmax.f32 %v1122, -50000.0
        %v1160 = vmax.f32 %v1127, -50000.0
        %v1161 = vmax.f32 %v1130, -50000.0
        %v1162 = vmax.f32 %v1135, -50000.0
        %v1163 = vmax.f32 %v1138, -50000.0
        %v1164 = vmax.f32 %v1143, -50000.0
        %v1165 = vmax.f32 %v1146, -50000.0
        %v1166 = vmax.f32 %v1151, -50000.0
        %v1167 = vmin.f32 %v1156, 50000.0
        %v1168 = vmin.f32 %v1157, 50000.0
        %v1169 = vmin.f32 %v1158, 50000.0
        %v1170 = vmin.f32 %v1159, 50000.0
        %v1171 = vmin.f32 %v1160, 50000.0
        %v1172 = vmin.f32 %v1161, 50000.0
        %v1173 = vmin.f32 %v1162, 50000.0
        %v1174 = vmin.f32 %v1163, 50000.0
        %v1175 = vmin.f32 %v1164, 50000.0
        %v1176 = vmin.f32 %v1165, 50000.0
        %v1177 = vmin.f32 %v1166, 50000.0
        %1178 = vmatprep.subr.bf16.mxu0 0
        %1179 = vmatpush1.bf16.xpose.msra.mxu0 %v1056
        %1180 = vmatprep.subr.bf16.mxu0 0
        %1181 = vmatpush1.bf16.xpose.msra.mxu0 %v1059
        %1182 = vmatprep.subr.bf16.mxu0 0
        %1183 = vmatpush1.bf16.xpose.msra.mxu0 %v1062
        %1184 = vmatprep.subr.bf16.mxu0 0
        %1185 = vmatpush1.bf16.xpose.msra.mxu0 %v1065
        %1186 = vmatprep.subr.bf16.mxu0 0
        %1187 = vmatpush1.bf16.xpose.msra.mxu0 %v1068
        %1188 = vmatprep.subr.bf16.mxu0 0
        %1189 = vmatpush1.bf16.xpose.msra.mxu0 %v1071
        %1190 = vmatprep.subr.bf16.mxu0 0
        %1191 = vmatpush1.bf16.xpose.msra.mxu0 0
        %1192 = vmatprep.subr.bf16.mxu0 0
        %1193 = vmatpush1.bf16.xpose.msra.mxu0 0
        %1194 = vmatprep.subr.bf16.mxu0 0
        %1195 = vmatpush1.bf16.xpose.msra.mxu0 0
        %1196 = vmatprep.subr.bf16.mxu0 0
        %1197 = vmatpush1.bf16.xpose.msra.mxu0 0
        %1198 = vmatprep.subr.bf16.mxu0 0
        %1199 = vmatpush1.bf16.xpose.msra.mxu0 0
        %1200 = vmatprep.subr.bf16.mxu0 0
        %1201 = vmatpush1.bf16.xpose.msra.mxu0 0
        %1202 = vmatprep.subr.bf16.mxu0 0
        %1203 = vmatpush1.bf16.xpose.msra.mxu0 0
        %1204 = vmatprep.subr.bf16.mxu0 0
        %1205 = vmatpush1.bf16.xpose.msra.mxu0 0
        %1206 = vmatprep.subr.bf16.mxu0 0
        %1207 = vmatpush1.bf16.xpose.msra.mxu0 0
        %1208 = vmatprep.subr.bf16.mxu0 0
        %1209 = vmatpush1.bf16.xpose.msra.mxu0 0
        %1210 = vmatprep.mubr.bf16.mxu0 0
        %1211 = vmatmul.mubr.bf16.gmra.mrb[0].mxu0 %v1074
        %v1212 = vpop.f32.mrb[0].mxu0
        %v1213 = vadd.f32 0.0, %v1212
        %v1214 = vpop.f32.mrb[0].mxu0
        %v1215 = vpop.f32.mrb[0].mxu0
        %v1216 = vpop.f32.mrb[0].mxu0
        %1217 = vdwg.mxu0
        %v1218 = vmax.f32 %v1213, -50000.0
        %v1219 = vmin.f32 %v1218, 50000.0
        %vm1220 = vcmask 687104
        %v1221 = vsel %vm1220, %v1219, -inf
        %1222 = vmax.xlane.f32.xlu0 %v1221
        %v1223 = vpop.xlane.xlu0 %1222
        %v1224 = vsub.f32 %v1219, %v1223
        %v1225 = vmax.f32 %v1224, -50000.0
        %v1226 = vmin.f32 %v1225, 50000.0
        %v1227 = vmul.f32 %v1226, 1.442695
        %v1228 = vpow.pop %v1227
        %v1229 = vsel %vm1220, %v1228, 0.0
        %1230 = vadd.xlane.f32.xlu0 %v1229
        %v1231 = vpop.xlane.xlu0 %1230
        %v1232 = vrcp.pop %v1231
        %v1233 = vmul.f32 1.0, %v1232
        %v1234 = vmul.f32 %v1228, %v1233
        %v1235 = vpack.c.bf16 %v1234, %v1234
        %1242 = vrot.lane.b32.xlu0 %v1047, 64
        %v1243 = vpop.permute.xlu0 %1242
        %1244 = vrot.lane.b32.xlu0 %v1048, 64
        %v1245 = vpop.permute.xlu0 %1244
        %1246 = vrot.lane.b32.xlu0 %v1049, 64
        %v1247 = vpop.permute.xlu0 %1246
        %1248 = vrot.lane.b32.xlu0 %v1050, 64
        %v1249 = vpop.permute.xlu0 %1248
        %1250 = vrot.lane.b32.xlu0 %v1051, 64
        %v1251 = vpop.permute.xlu0 %1250
        %1252 = vrot.lane.b32.xlu0 %v1052, 64
        %v1253 = vpop.permute.xlu0 %1252
        %v1260 = vsel %vm1220, %v1235, 0
        %vm1262 = vcmask 1041408
        %v1264 = vsel %vm1262, %v1253, 0
        %1266 = vmatprep.subr.bf16.mxu0 0
        %1267 = vmatpush1.bf16.msra.mxu0 %v1243
        %1268 = vmatprep.subr.bf16.mxu0 0
        %1269 = vmatpush1.bf16.msra.mxu0 %v1245
        %1270 = vmatprep.subr.bf16.mxu0 0
        %1271 = vmatpush1.bf16.msra.mxu0 %v1247
        %1272 = vmatprep.subr.bf16.mxu0 0
        %1273 = vmatpush1.bf16.msra.mxu0 %v1249
        %1274 = vmatprep.subr.bf16.mxu0 0
        %1275 = vmatpush1.bf16.msra.mxu0 %v1251
        %1276 = vmatprep.subr.bf16.mxu0 0
        %1277 = vmatpush1.bf16.msra.mxu0 %v1264
        %1278 = vmatprep.subr.bf16.mxu0 0
        %1279 = vmatpush1.bf16.msra.mxu0 0
        %1280 = vmatprep.subr.bf16.mxu0 0
        %1281 = vmatpush1.bf16.msra.mxu0 0
        %1282 = vmatprep.subr.bf16.mxu0 0
        %1283 = vmatpush1.bf16.msra.mxu0 0
        %1284 = vmatprep.subr.bf16.mxu0 0
        %1285 = vmatpush1.bf16.msra.mxu0 0
        %1286 = vmatprep.subr.bf16.mxu0 0
        %1287 = vmatpush1.bf16.msra.mxu0 0
        %1288 = vmatprep.subr.bf16.mxu0 0
        %1289 = vmatpush1.bf16.msra.mxu0 0
        %1290 = vmatprep.subr.bf16.mxu0 0
        %1291 = vmatpush1.bf16.msra.mxu0 0
        %1292 = vmatprep.subr.bf16.mxu0 0
        %1293 = vmatpush1.bf16.msra.mxu0 0
        %1294 = vmatprep.subr.bf16.mxu0 0
        %1295 = vmatpush1.bf16.msra.mxu0 0
        %1296 = vmatprep.subr.bf16.mxu0 0
        %1297 = vmatpush1.bf16.msra.mxu0 0
        %1298 = vmatprep.mubr.bf16.mxu0 0
        %1299 = vmatmul.mubr.bf16.gmra.mrb[0].mxu0 %v1260
        %v1300 = vpop.f32.mrb[0].mxu0
        %v1301 = vadd.f32 0.0, %v1300
        %v1302 = vpop.f32.mrb[0].mxu0
        %v1303 = vpop.f32.mrb[0].mxu0
        %v1304 = vpop.f32.mrb[0].mxu0
        %1305 = vdwg.mxu0
        %v1307 = vlaneseq
        %v1308 = vshrl.u32 %v1307, 7
        %v1309 = vsub.s32 0, %v1308
        %v1310 = vrot.slane %v1038, %v1309
        %v1312 = vadd.f32 %v1167, %v1310
        %v1313 = vadd.f32 %v1168, %v1310
        %v1314 = vadd.f32 %v1169, %v1310
        %v1315 = vadd.f32 %v1170, %v1310
        %v1316 = vadd.f32 %v1171, %v1310
        %v1317 = vadd.f32 %v1172, %v1310
        %v1318 = vadd.f32 %v1173, %v1310
        %v1319 = vadd.f32 %v1174, %v1310
        %v1320 = vadd.f32 %v1175, %v1310
        %v1321 = vadd.f32 %v1176, %v1310
        %v1322 = vadd.f32 %v1177, %v1310
        %v1323 = vsel %vm1054, %v1312, -inf
        %1324 = vmax.xlane.f32.xlu0 %v1323
        %v1325 = vpop.xlane.xlu0 %1324
        %v1326 = vsel %vm1054, %v1313, -inf
        %1327 = vmax.xlane.f32.xlu0 %v1326
        %v1328 = vpop.xlane.xlu0 %1327
        %v1329 = vsel %vm1054, %v1314, -inf
        %1330 = vmax.xlane.f32.xlu0 %v1329
        %v1331 = vpop.xlane.xlu0 %1330
        %v1332 = vsel %vm1054, %v1315, -inf
        %1333 = vmax.xlane.f32.xlu0 %v1332
        %v1334 = vpop.xlane.xlu0 %1333
        %v1335 = vsel %vm1054, %v1316, -inf
        %1336 = vmax.xlane.f32.xlu0 %v1335
        %v1337 = vpop.xlane.xlu0 %1336
        %v1338 = vsel %vm1054, %v1317, -inf
        %1339 = vmax.xlane.f32.xlu0 %v1338
        %v1340 = vpop.xlane.xlu0 %1339
        %v1341 = vsel %vm1054, %v1318, -inf
        %1342 = vmax.xlane.f32.xlu0 %v1341
        %v1343 = vpop.xlane.xlu0 %1342
        %v1344 = vsel %vm1054, %v1319, -inf
        %1345 = vmax.xlane.f32.xlu0 %v1344
        %v1346 = vpop.xlane.xlu0 %1345
        %v1347 = vsel %vm1054, %v1320, -inf
        %1348 = vmax.xlane.f32.xlu0 %v1347
        %v1349 = vpop.xlane.xlu0 %1348
        %v1350 = vsel %vm1054, %v1321, -inf
        %1351 = vmax.xlane.f32.xlu0 %v1350
        %v1352 = vpop.xlane.xlu0 %1351
        %vm1353 = vcmask 60416
        %v1354 = vsel %vm1353, %v1322, -inf
        %1355 = vmax.xlane.f32.xlu0 %v1354
        %v1356 = vpop.xlane.xlu0 %1355
        %v1357 = vsub.f32 %v1312, %v1325
        %v1358 = vsub.f32 %v1313, %v1328
        %v1359 = vsub.f32 %v1314, %v1331
        %v1360 = vsub.f32 %v1315, %v1334
        %v1361 = vsub.f32 %v1316, %v1337
        %v1362 = vsub.f32 %v1317, %v1340
        %v1363 = vsub.f32 %v1318, %v1343
        %v1364 = vsub.f32 %v1319, %v1346
        %v1365 = vsub.f32 %v1320, %v1349
        %v1366 = vsub.f32 %v1321, %v1352
        %v1367 = vsub.f32 %v1322, %v1356
        %v1368 = vmul.f32 %v1357, 1.442695
        %v1369 = vpow.pop %v1368
        %v1370 = vmul.f32 %v1358, 1.442695
        %v1371 = vpow.pop %v1370
        %v1372 = vmul.f32 %v1359, 1.442695
        %v1373 = vpow.pop %v1372
        %v1374 = vmul.f32 %v1360, 1.442695
        %v1375 = vpow.pop %v1374
        %v1376 = vmul.f32 %v1361, 1.442695
        %v1377 = vpow.pop %v1376
        %v1378 = vmul.f32 %v1362, 1.442695
        %v1379 = vpow.pop %v1378
        %v1380 = vmul.f32 %v1363, 1.442695
        %v1381 = vpow.pop %v1380
        %v1382 = vmul.f32 %v1364, 1.442695
        %v1383 = vpow.pop %v1382
        %v1384 = vmul.f32 %v1365, 1.442695
        %v1385 = vpow.pop %v1384
        %v1386 = vmul.f32 %v1366, 1.442695
        %v1387 = vpow.pop %v1386
        %v1388 = vmul.f32 %v1367, 1.442695
        %v1389 = vpow.pop %v1388
        %v1390 = vsel %vm1054, %v1369, 0.0
        %1391 = vadd.xlane.f32.xlu0 %v1390
        %v1392 = vpop.xlane.xlu0 %1391
        %v1393 = vsel %vm1054, %v1371, 0.0
        %1394 = vadd.xlane.f32.xlu0 %v1393
        %v1395 = vpop.xlane.xlu0 %1394
        %v1396 = vsel %vm1054, %v1373, 0.0
        %1397 = vadd.xlane.f32.xlu0 %v1396
        %v1398 = vpop.xlane.xlu0 %1397
        %v1399 = vsel %vm1054, %v1375, 0.0
        %1400 = vadd.xlane.f32.xlu0 %v1399
        %v1401 = vpop.xlane.xlu0 %1400
        %v1402 = vsel %vm1054, %v1377, 0.0
        %1403 = vadd.xlane.f32.xlu0 %v1402
        %v1404 = vpop.xlane.xlu0 %1403
        %v1405 = vsel %vm1054, %v1379, 0.0
        %1406 = vadd.xlane.f32.xlu0 %v1405
        %v1407 = vpop.xlane.xlu0 %1406
        %v1408 = vsel %vm1054, %v1381, 0.0
        %1409 = vadd.xlane.f32.xlu0 %v1408
        %v1410 = vpop.xlane.xlu0 %1409
        %v1411 = vsel %vm1054, %v1383, 0.0
        %1412 = vadd.xlane.f32.xlu0 %v1411
        %v1413 = vpop.xlane.xlu0 %1412
        %v1414 = vsel %vm1054, %v1385, 0.0
        %1415 = vadd.xlane.f32.xlu0 %v1414
        %v1416 = vpop.xlane.xlu0 %1415
        %v1417 = vsel %vm1054, %v1387, 0.0
        %1418 = vadd.xlane.f32.xlu0 %v1417
        %v1419 = vpop.xlane.xlu0 %1418
        %v1420 = vsel %vm1353, %v1389, 0.0
        %1421 = vadd.xlane.f32.xlu0 %v1420
        %v1422 = vpop.xlane.xlu0 %1421
        %v1423 = vrcp.pop %v1392
        %v1424 = vmul.f32 1.0, %v1423
        %v1425 = vrcp.pop %v1395
        %v1426 = vmul.f32 1.0, %v1425
        %v1427 = vrcp.pop %v1398
        %v1428 = vmul.f32 1.0, %v1427
        %v1429 = vrcp.pop %v1401
        %v1430 = vmul.f32 1.0, %v1429
        %v1431 = vrcp.pop %v1404
        %v1432 = vmul.f32 1.0, %v1431
        %v1433 = vrcp.pop %v1407
        %v1434 = vmul.f32 1.0, %v1433
        %v1435 = vrcp.pop %v1410
        %v1436 = vmul.f32 1.0, %v1435
        %v1437 = vrcp.pop %v1413
        %v1438 = vmul.f32 1.0, %v1437
        %v1439 = vrcp.pop %v1416
        %v1440 = vmul.f32 1.0, %v1439
        %v1441 = vrcp.pop %v1419
        %v1442 = vmul.f32 1.0, %v1441
        %v1443 = vrcp.pop %v1422
        %v1444 = vmul.f32 1.0, %v1443
        %v1445 = vmul.f32 %v1369, %v1424
        %v1446 = vmul.f32 %v1371, %v1426
        %v1447 = vmul.f32 %v1373, %v1428
        %v1448 = vmul.f32 %v1375, %v1430
        %v1449 = vmul.f32 %v1377, %v1432
        %v1450 = vmul.f32 %v1379, %v1434
        %v1451 = vmul.f32 %v1381, %v1436
        %v1452 = vmul.f32 %v1383, %v1438
        %v1453 = vmul.f32 %v1385, %v1440
        %v1454 = vmul.f32 %v1387, %v1442
        %v1455 = vmul.f32 %v1389, %v1444
        %v1456 = vpack.c.bf16 %v1039, %v1039
        %1458 = vrot.lane.b32.xlu0 %v1053, 64
        %v1459 = vpop.permute.xlu0 %1458
        %v1461 = vsel %vm1054, %v1459, 0
        %vm1463 = vcmask 1043456
        %v1465 = vsel %vm1463, %v1456, 0
        %1467 = vmatprep.subr.bf16.mxu0 0
        %1468 = vmatpush1.bf16.msra.mxu0 %v1465
        %1469 = vmatprep.subr.bf16.mxu0 0
        %1470 = vmatpush1.bf16.msra.mxu0 0
        %1471 = vmatprep.subr.bf16.mxu0 0
        %1472 = vmatpush1.bf16.msra.mxu0 0
        %1473 = vmatprep.subr.bf16.mxu0 0
        %1474 = vmatpush1.bf16.msra.mxu0 0
        %1475 = vmatprep.subr.bf16.mxu0 0
        %1476 = vmatpush1.bf16.msra.mxu0 0
        %1477 = vmatprep.subr.bf16.mxu0 0
        %1478 = vmatpush1.bf16.msra.mxu0 0
        %1479 = vmatprep.subr.bf16.mxu0 0
        %1480 = vmatpush1.bf16.msra.mxu0 0
        %1481 = vmatprep.subr.bf16.mxu0 0
        %1482 = vmatpush1.bf16.msra.mxu0 0
        %1483 = vmatprep.subr.bf16.mxu0 0
        %1484 = vmatpush1.bf16.msra.mxu0 0
        %1485 = vmatprep.subr.bf16.mxu0 0
        %1486 = vmatpush1.bf16.msra.mxu0 0
        %1487 = vmatprep.subr.bf16.mxu0 0
        %1488 = vmatpush1.bf16.msra.mxu0 0
        %1489 = vmatprep.subr.bf16.mxu0 0
        %1490 = vmatpush1.bf16.msra.mxu0 0
        %1491 = vmatprep.subr.bf16.mxu0 0
        %1492 = vmatpush1.bf16.msra.mxu0 0
        %1493 = vmatprep.subr.bf16.mxu0 0
        %1494 = vmatpush1.bf16.msra.mxu0 0
        %1495 = vmatprep.subr.bf16.mxu0 0
        %1496 = vmatpush1.bf16.msra.mxu0 0
        %1497 = vmatprep.subr.bf16.mxu0 0
        %1498 = vmatpush1.bf16.msra.mxu0 0
        %1499 = vmatprep.mubr.bf16.mxu0 0
        %1500 = vmatmul.mubr.bf16.gmra.mrb[0].mxu0 %v1461
        %v1501 = vpop.f32.mrb[0].mxu0
        %v1502 = vadd.f32 0.0, %v1501
        %v1503 = vpop.f32.mrb[0].mxu0
        %v1504 = vpop.f32.mrb[0].mxu0
        %v1505 = vpop.f32.mrb[0].mxu0
        %1506 = vdwg.mxu0
        %1507 = vrot.lane.b32.xlu0 %v1047, 120
        %v1508 = vpop.permute.xlu0 %1507
        %1509 = vrot.lane.b32.xlu0 %v1048, 120
        %v1510 = vpop.permute.xlu0 %1509
        %1511 = vrot.lane.b32.xlu0 %v1049, 120
        %v1512 = vpop.permute.xlu0 %1511
        %1513 = vrot.lane.b32.xlu0 %v1050, 120
        %v1514 = vpop.permute.xlu0 %1513
        %1515 = vrot.lane.b32.xlu0 %v1051, 120
        %v1516 = vpop.permute.xlu0 %1515
        %1517 = vrot.lane.b32.xlu0 %v1052, 120
        %v1518 = vpop.permute.xlu0 %1517
        %1519 = vrot.lane.b32.xlu0 %v1053, 120
        %v1520 = vpop.permute.xlu0 %1519
        %v1522 = vsel %vm1054, %v1508, 0
        %v1525 = vsel %vm1054, %v1510, 0
        %v1528 = vsel %vm1054, %v1512, 0
        %v1531 = vsel %vm1054, %v1514, 0
        %v1534 = vsel %vm1054, %v1516, 0
        %v1537 = vsel %vm1054, %v1518, 0
        %v1540 = vsel %vm1054, %v1520, 0
        %1542 = vmatprep.subr.bf16.mxu0 0
        %1543 = vmatpush1.bf16.xpose.msra.mxu0 %v1540
        %1544 = vmatprep.subr.bf16.mxu0 0
        %1545 = vmatpush1.bf16.xpose.msra.mxu0 0
        %1546 = vmatprep.subr.bf16.mxu0 0
        %1547 = vmatpush1.bf16.xpose.msra.mxu0 0
        %1548 = vmatprep.subr.bf16.mxu0 0
        %1549 = vmatpush1.bf16.xpose.msra.mxu0 0
        %1550 = vmatprep.subr.bf16.mxu0 0
        %1551 = vmatpush1.bf16.xpose.msra.mxu0 0
        %1552 = vmatprep.subr.bf16.mxu0 0
        %1553 = vmatpush1.bf16.xpose.msra.mxu0 0
        %1554 = vmatprep.subr.bf16.mxu0 0
        %1555 = vmatpush1.bf16.xpose.msra.mxu0 0
        %1556 = vmatprep.subr.bf16.mxu0 0
        %1557 = vmatpush1.bf16.xpose.msra.mxu0 0
        %1558 = vmatprep.subr.bf16.mxu0 0
        %1559 = vmatpush1.bf16.xpose.msra.mxu0 0
        %1560 = vmatprep.subr.bf16.mxu0 0
        %1561 = vmatpush1.bf16.xpose.msra.mxu0 0
        %1562 = vmatprep.subr.bf16.mxu0 0
        %1563 = vmatpush1.bf16.xpose.msra.mxu0 0
        %1564 = vmatprep.subr.bf16.mxu0 0
        %1565 = vmatpush1.bf16.xpose.msra.mxu0 0
        %1566 = vmatprep.subr.bf16.mxu0 0
        %1567 = vmatpush1.bf16.xpose.msra.mxu0 0
        %1568 = vmatprep.subr.bf16.mxu0 0
        %1569 = vmatpush1.bf16.xpose.msra.mxu0 0
        %1570 = vmatprep.subr.bf16.mxu0 0
        %1571 = vmatpush1.bf16.xpose.msra.mxu0 0
        %1572 = vmatprep.subr.bf16.mxu0 0
        %1573 = vmatpush1.bf16.xpose.msra.mxu0 0
        %1574 = vmatprep.mubr.bf16.mxu0 0
        %1575 = vmatmul.mubr.bf16.gmra.mrb[0].mxu0 %v1522
        %v1576 = vpop.f32.mrb[0].mxu0
        %v1577 = vadd.f32 0.0, %v1576
        %v1578 = vpop.f32.mrb[0].mxu0
        %v1579 = vpop.f32.mrb[0].mxu0
        %v1580 = vadd.f32 0.0, %v1579
        %v1581 = vpop.f32.mrb[0].mxu0
        %1582 = vmatprep.mubr.bf16.mxu0 0
        %1583 = vmatmul.mubr.bf16.gmra.mrb[0].mxu0 %v1525
        %v1584 = vpop.f32.mrb[0].mxu0
        %v1585 = vadd.f32 0.0, %v1584
        %v1586 = vpop.f32.mrb[0].mxu0
        %v1587 = vpop.f32.mrb[0].mxu0
        %v1588 = vadd.f32 0.0, %v1587
        %v1589 = vpop.f32.mrb[0].mxu0
        %1590 = vmatprep.mubr.bf16.mxu0 0
        %1591 = vmatmul.mubr.bf16.gmra.mrb[0].mxu0 %v1528
        %v1592 = vpop.f32.mrb[0].mxu0
        %v1593 = vadd.f32 0.0, %v1592
        %v1594 = vpop.f32.mrb[0].mxu0
        %v1595 = vpop.f32.mrb[0].mxu0
        %v1596 = vadd.f32 0.0, %v1595
        %v1597 = vpop.f32.mrb[0].mxu0
        %1598 = vmatprep.mubr.bf16.mxu0 0
        %1599 = vmatmul.mubr.bf16.gmra.mrb[0].mxu0 %v1531
        %v1600 = vpop.f32.mrb[0].mxu0
        %v1601 = vadd.f32 0.0, %v1600
        %v1602 = vpop.f32.mrb[0].mxu0
        %v1603 = vpop.f32.mrb[0].mxu0
        %v1604 = vadd.f32 0.0, %v1603
        %v1605 = vpop.f32.mrb[0].mxu0
        %1606 = vmatprep.mubr.bf16.mxu0 0
        %1607 = vmatmul.mubr.bf16.gmra.mrb[0].mxu0 %v1534
        %v1608 = vpop.f32.mrb[0].mxu0
        %v1609 = vadd.f32 0.0, %v1608
        %v1610 = vpop.f32.mrb[0].mxu0
        %v1611 = vpop.f32.mrb[0].mxu0
        %v1612 = vadd.f32 0.0, %v1611
        %v1613 = vpop.f32.mrb[0].mxu0
        %1614 = vmatprep.mubr.bf16.mxu0 0
        %1615 = vmatmul.mubr.bf16.gmra.mrb[0].mxu0 %v1537
        %v1616 = vpop.f32.mrb[0].mxu0
        %v1617 = vadd.f32 0.0, %v1616
        %v1618 = vpop.f32.mrb[0].mxu0
        %v1619 = vpop.f32.mrb[0].mxu0
        %v1620 = vpop.f32.mrb[0].mxu0
        %1621 = vdwg.mxu0
        %v1622 = vmax.f32 %v1577, -50000.0
        %v1623 = vmax.f32 %v1580, -50000.0
        %v1624 = vmax.f32 %v1585, -50000.0
        %v1625 = vmax.f32 %v1588, -50000.0
        %v1626 = vmax.f32 %v1593, -50000.0
        %v1627 = vmax.f32 %v1596, -50000.0
        %v1628 = vmax.f32 %v1601, -50000.0
        %v1629 = vmax.f32 %v1604, -50000.0
        %v1630 = vmax.f32 %v1609, -50000.0
        %v1631 = vmax.f32 %v1612, -50000.0
        %v1632 = vmax.f32 %v1617, -50000.0
        %v1633 = vmin.f32 %v1622, 50000.0
        %v1634 = vmin.f32 %v1623, 50000.0
        %v1635 = vmin.f32 %v1624, 50000.0
        %v1636 = vmin.f32 %v1625, 50000.0
        %v1637 = vmin.f32 %v1626, 50000.0
        %v1638 = vmin.f32 %v1627, 50000.0
        %v1639 = vmin.f32 %v1628, 50000.0
        %v1640 = vmin.f32 %v1629, 50000.0
        %v1641 = vmin.f32 %v1630, 50000.0
        %v1642 = vmin.f32 %v1631, 50000.0
        %v1643 = vmin.f32 %v1632, 50000.0
        %1644 = vmatprep.subr.bf16.mxu0 0
        %1645 = vmatpush1.bf16.xpose.msra.mxu0 %v1522
        %1646 = vmatprep.subr.bf16.mxu0 0
        %1647 = vmatpush1.bf16.xpose.msra.mxu0 %v1525
        %1648 = vmatprep.subr.bf16.mxu0 0
        %1649 = vmatpush1.bf16.xpose.msra.mxu0 %v1528
        %1650 = vmatprep.subr.bf16.mxu0 0
        %1651 = vmatpush1.bf16.xpose.msra.mxu0 %v1531
        %1652 = vmatprep.subr.bf16.mxu0 0
        %1653 = vmatpush1.bf16.xpose.msra.mxu0 %v1534
        %1654 = vmatprep.subr.bf16.mxu0 0
        %1655 = vmatpush1.bf16.xpose.msra.mxu0 %v1537
        %1656 = vmatprep.subr.bf16.mxu0 0
        %1657 = vmatpush1.bf16.xpose.msra.mxu0 0
        %1658 = vmatprep.subr.bf16.mxu0 0
        %1659 = vmatpush1.bf16.xpose.msra.mxu0 0
        %1660 = vmatprep.subr.bf16.mxu0 0
        %1661 = vmatpush1.bf16.xpose.msra.mxu0 0
        %1662 = vmatprep.subr.bf16.mxu0 0
        %1663 = vmatpush1.bf16.xpose.msra.mxu0 0
        %1664 = vmatprep.subr.bf16.mxu0 0
        %1665 = vmatpush1.bf16.xpose.msra.mxu0 0
        %1666 = vmatprep.subr.bf16.mxu0 0
        %1667 = vmatpush1.bf16.xpose.msra.mxu0 0
        %1668 = vmatprep.subr.bf16.mxu0 0
        %1669 = vmatpush1.bf16.xpose.msra.mxu0 0
        %1670 = vmatprep.subr.bf16.mxu0 0
        %1671 = vmatpush1.bf16.xpose.msra.mxu0 0
        %1672 = vmatprep.subr.bf16.mxu0 0
        %1673 = vmatpush1.bf16.xpose.msra.mxu0 0
        %1674 = vmatprep.subr.bf16.mxu0 0
        %1675 = vmatpush1.bf16.xpose.msra.mxu0 0
        %1676 = vmatprep.mubr.bf16.mxu0 0
        %1677 = vmatmul.mubr.bf16.gmra.mrb[0].mxu0 %v1540
        %v1678 = vpop.f32.mrb[0].mxu0
        %v1679 = vadd.f32 0.0, %v1678
        %v1680 = vpop.f32.mrb[0].mxu0
        %v1681 = vpop.f32.mrb[0].mxu0
        %v1682 = vpop.f32.mrb[0].mxu0
        %1683 = vdwg.mxu0
        %v1684 = vmax.f32 %v1679, -50000.0
        %v1685 = vmin.f32 %v1684, 50000.0
        %v1686 = vsel %vm1220, %v1685, -inf
        %1687 = vmax.xlane.f32.xlu0 %v1686
        %v1688 = vpop.xlane.xlu0 %1687
        %v1689 = vsub.f32 %v1685, %v1688
        %v1690 = vmax.f32 %v1689, -50000.0
        %v1691 = vmin.f32 %v1690, 50000.0
        %v1692 = vmul.f32 %v1691, 1.442695
        %v1693 = vpow.pop %v1692
        %v1694 = vsel %vm1220, %v1693, 0.0
        %1695 = vadd.xlane.f32.xlu0 %v1694
        %v1696 = vpop.xlane.xlu0 %1695
        %v1697 = vrcp.pop %v1696
        %v1698 = vmul.f32 1.0, %v1697
        %v1699 = vmul.f32 %v1693, %v1698
        %v1700 = vpack.c.bf16 %v1699, %v1699
        %1701 = vrot.lane.b32.xlu0 %v1047, 56
        %v1702 = vpop.permute.xlu0 %1701
        %1703 = vrot.lane.b32.xlu0 %v1048, 56
        %v1704 = vpop.permute.xlu0 %1703
        %1705 = vrot.lane.b32.xlu0 %v1049, 56
        %v1706 = vpop.permute.xlu0 %1705
        %1707 = vrot.lane.b32.xlu0 %v1050, 56
        %v1708 = vpop.permute.xlu0 %1707
        %1709 = vrot.lane.b32.xlu0 %v1051, 56
        %v1710 = vpop.permute.xlu0 %1709
        %1711 = vrot.lane.b32.xlu0 %v1052, 56
        %v1712 = vpop.permute.xlu0 %1711
        %v1719 = vsel %vm1220, %v1700, 0
        %v1722 = vsel %vm1262, %v1712, 0
        %1724 = vmatprep.subr.bf16.mxu0 0
        %1725 = vmatpush1.bf16.msra.mxu0 %v1702
        %1726 = vmatprep.subr.bf16.mxu0 0
        %1727 = vmatpush1.bf16.msra.mxu0 %v1704
        %1728 = vmatprep.subr.bf16.mxu0 0
        %1729 = vmatpush1.bf16.msra.mxu0 %v1706
        %1730 = vmatprep.subr.bf16.mxu0 0
        %1731 = vmatpush1.bf16.msra.mxu0 %v1708
        %1732 = vmatprep.subr.bf16.mxu0 0
        %1733 = vmatpush1.bf16.msra.mxu0 %v1710
        %1734 = vmatprep.subr.bf16.mxu0 0
        %1735 = vmatpush1.bf16.msra.mxu0 %v1722
        %1736 = vmatprep.subr.bf16.mxu0 0
        %1737 = vmatpush1.bf16.msra.mxu0 0
        %1738 = vmatprep.subr.bf16.mxu0 0
        %1739 = vmatpush1.bf16.msra.mxu0 0
        %1740 = vmatprep.subr.bf16.mxu0 0
        %1741 = vmatpush1.bf16.msra.mxu0 0
        %1742 = vmatprep.subr.bf16.mxu0 0
        %1743 = vmatpush1.bf16.msra.mxu0 0
        %1744 = vmatprep.subr.bf16.mxu0 0
        %1745 = vmatpush1.bf16.msra.mxu0 0
        %1746 = vmatprep.subr.bf16.mxu0 0
        %1747 = vmatpush1.bf16.msra.mxu0 0
        %1748 = vmatprep.subr.bf16.mxu0 0
        %1749 = vmatpush1.bf16.msra.mxu0 0
        %1750 = vmatprep.subr.bf16.mxu0 0
        %1751 = vmatpush1.bf16.msra.mxu0 0
        %1752 = vmatprep.subr.bf16.mxu0 0
        %1753 = vmatpush1.bf16.msra.mxu0 0
        %1754 = vmatprep.subr.bf16.mxu0 0
        %1755 = vmatpush1.bf16.msra.mxu0 0
        %1756 = vmatprep.mubr.bf16.mxu0 0
        %1757 = vmatmul.mubr.bf16.gmra.mrb[0].mxu0 %v1719
        %v1758 = vpop.f32.mrb[0].mxu0
        %v1759 = vadd.f32 0.0, %v1758
        %v1760 = vpop.f32.mrb[0].mxu0
        %v1761 = vpop.f32.mrb[0].mxu0
        %v1762 = vpop.f32.mrb[0].mxu0
        %1763 = vdwg.mxu0
        %v1764 = vadd.f32 %v1633, %v1310
        %v1765 = vadd.f32 %v1634, %v1310
        %v1766 = vadd.f32 %v1635, %v1310
        %v1767 = vadd.f32 %v1636, %v1310
        %v1768 = vadd.f32 %v1637, %v1310
        %v1769 = vadd.f32 %v1638, %v1310
        %v1770 = vadd.f32 %v1639, %v1310
        %v1771 = vadd.f32 %v1640, %v1310
        %v1772 = vadd.f32 %v1641, %v1310
        %v1773 = vadd.f32 %v1642, %v1310
        %v1774 = vadd.f32 %v1643, %v1310
        %v1775 = vsel %vm1054, %v1764, -inf
        %1776 = vmax.xlane.f32.xlu0 %v1775
        %v1777 = vpop.xlane.xlu0 %1776
        %v1778 = vsel %vm1054, %v1765, -inf
        %1779 = vmax.xlane.f32.xlu0 %v1778
        %v1780 = vpop.xlane.xlu0 %1779
        %v1781 = vsel %vm1054, %v1766, -inf
        %1782 = vmax.xlane.f32.xlu0 %v1781
        %v1783 = vpop.xlane.xlu0 %1782
        %v1784 = vsel %vm1054, %v1767, -inf
        %1785 = vmax.xlane.f32.xlu0 %v1784
        %v1786 = vpop.xlane.xlu0 %1785
        %v1787 = vsel %vm1054, %v1768, -inf
        %1788 = vmax.xlane.f32.xlu0 %v1787
        %v1789 = vpop.xlane.xlu0 %1788
        %v1790 = vsel %vm1054, %v1769, -inf
        %1791 = vmax.xlane.f32.xlu0 %v1790
        %v1792 = vpop.xlane.xlu0 %1791
        %v1793 = vsel %vm1054, %v1770, -inf
        %1794 = vmax.xlane.f32.xlu0 %v1793
        %v1795 = vpop.xlane.xlu0 %1794
        %v1796 = vsel %vm1054, %v1771, -inf
        %1797 = vmax.xlane.f32.xlu0 %v1796
        %v1798 = vpop.xlane.xlu0 %1797
        %v1799 = vsel %vm1054, %v1772, -inf
        %1800 = vmax.xlane.f32.xlu0 %v1799
        %v1801 = vpop.xlane.xlu0 %1800
        %v1802 = vsel %vm1054, %v1773, -inf
        %1803 = vmax.xlane.f32.xlu0 %v1802
        %v1804 = vpop.xlane.xlu0 %1803
        %v1805 = vsel %vm1353, %v1774, -inf
        %1806 = vmax.xlane.f32.xlu0 %v1805
        %v1807 = vpop.xlane.xlu0 %1806
        %v1808 = vsub.f32 %v1764, %v1777
        %v1809 = vsub.f32 %v1765, %v1780
        %v1810 = vsub.f32 %v1766, %v1783
        %v1811 = vsub.f32 %v1767, %v1786
        %v1812 = vsub.f32 %v1768, %v1789
        %v1813 = vsub.f32 %v1769, %v1792
        %v1814 = vsub.f32 %v1770, %v1795
        %v1815 = vsub.f32 %v1771, %v1798
        %v1816 = vsub.f32 %v1772, %v1801
        %v1817 = vsub.f32 %v1773, %v1804
        %v1818 = vsub.f32 %v1774, %v1807
        %v1819 = vmul.f32 %v1808, 1.442695
        %v1820 = vpow.pop %v1819
        %v1821 = vmul.f32 %v1809, 1.442695
        %v1822 = vpow.pop %v1821
        %v1823 = vmul.f32 %v1810, 1.442695
        %v1824 = vpow.pop %v1823
        %v1825 = vmul.f32 %v1811, 1.442695
        %v1826 = vpow.pop %v1825
        %v1827 = vmul.f32 %v1812, 1.442695
        %v1828 = vpow.pop %v1827
        %v1829 = vmul.f32 %v1813, 1.442695
        %v1830 = vpow.pop %v1829
        %v1831 = vmul.f32 %v1814, 1.442695
        %v1832 = vpow.pop %v1831
        %v1833 = vmul.f32 %v1815, 1.442695
        %v1834 = vpow.pop %v1833
        %v1835 = vmul.f32 %v1816, 1.442695
        %v1836 = vpow.pop %v1835
        %v1837 = vmul.f32 %v1817, 1.442695
        %v1838 = vpow.pop %v1837
        %v1839 = vmul.f32 %v1818, 1.442695
        %v1840 = vpow.pop %v1839
        %v1841 = vsel %vm1054, %v1820, 0.0
        %1842 = vadd.xlane.f32.xlu0 %v1841
        %v1843 = vpop.xlane.xlu0 %1842
        %v1844 = vsel %vm1054, %v1822, 0.0
        %1845 = vadd.xlane.f32.xlu0 %v1844
        %v1846 = vpop.xlane.xlu0 %1845
        %v1847 = vsel %vm1054, %v1824, 0.0
        %1848 = vadd.xlane.f32.xlu0 %v1847
        %v1849 = vpop.xlane.xlu0 %1848
        %v1850 = vsel %vm1054, %v1826, 0.0
        %1851 = vadd.xlane.f32.xlu0 %v1850
        %v1852 = vpop.xlane.xlu0 %1851
        %v1853 = vsel %vm1054, %v1828, 0.0
        %1854 = vadd.xlane.f32.xlu0 %v1853
        %v1855 = vpop.xlane.xlu0 %1854
        %v1856 = vsel %vm1054, %v1830, 0.0
        %1857 = vadd.xlane.f32.xlu0 %v1856
        %v1858 = vpop.xlane.xlu0 %1857
        %v1859 = vsel %vm1054, %v1832, 0.0
        %1860 = vadd.xlane.f32.xlu0 %v1859
        %v1861 = vpop.xlane.xlu0 %1860
        %v1862 = vsel %vm1054, %v1834, 0.0
        %1863 = vadd.xlane.f32.xlu0 %v1862
        %v1864 = vpop.xlane.xlu0 %1863
        %v1865 = vsel %vm1054, %v1836, 0.0
        %1866 = vadd.xlane.f32.xlu0 %v1865
        %v1867 = vpop.xlane.xlu0 %1866
        %v1868 = vsel %vm1054, %v1838, 0.0
        %1869 = vadd.xlane.f32.xlu0 %v1868
        %v1870 = vpop.xlane.xlu0 %1869
        %v1871 = vsel %vm1353, %v1840, 0.0
        %1872 = vadd.xlane.f32.xlu0 %v1871
        %v1873 = vpop.xlane.xlu0 %1872
        %v1874 = vrcp.pop %v1843
        %v1875 = vmul.f32 1.0, %v1874
        %v1876 = vrcp.pop %v1846
        %v1877 = vmul.f32 1.0, %v1876
        %v1878 = vrcp.pop %v1849
        %v1879 = vmul.f32 1.0, %v1878
        %v1880 = vrcp.pop %v1852
        %v1881 = vmul.f32 1.0, %v1880
        %v1882 = vrcp.pop %v1855
        %v1883 = vmul.f32 1.0, %v1882
        %v1884 = vrcp.pop %v1858
        %v1885 = vmul.f32 1.0, %v1884
        %v1886 = vrcp.pop %v1861
        %v1887 = vmul.f32 1.0, %v1886
        %v1888 = vrcp.pop %v1864
        %v1889 = vmul.f32 1.0, %v1888
        %v1890 = vrcp.pop %v1867
        %v1891 = vmul.f32 1.0, %v1890
        %v1892 = vrcp.pop %v1870
        %v1893 = vmul.f32 1.0, %v1892
        %v1894 = vrcp.pop %v1873
        %v1895 = vmul.f32 1.0, %v1894
        %v1896 = vmul.f32 %v1820, %v1875
        %v1897 = vmul.f32 %v1822, %v1877
        %v1898 = vmul.f32 %v1824, %v1879
        %v1899 = vmul.f32 %v1826, %v1881
        %v1900 = vmul.f32 %v1828, %v1883
        %v1901 = vmul.f32 %v1830, %v1885
        %v1902 = vmul.f32 %v1832, %v1887
        %v1903 = vmul.f32 %v1834, %v1889
        %v1904 = vmul.f32 %v1836, %v1891
        %v1905 = vmul.f32 %v1838, %v1893
        %v1906 = vmul.f32 %v1840, %v1895
        %v1907 = vpack.c.bf16 %v1040, %v1040
        %1908 = vrot.lane.b32.xlu0 %v1053, 56
        %v1909 = vpop.permute.xlu0 %1908
        %v1911 = vsel %vm1054, %v1909, 0
        %v1914 = vsel %vm1463, %v1907, 0
        %1916 = vmatprep.subr.bf16.mxu0 0
        %1917 = vmatpush1.bf16.msra.mxu0 %v1914
        %1918 = vmatprep.subr.bf16.mxu0 0
        %1919 = vmatpush1.bf16.msra.mxu0 0
        %1920 = vmatprep.subr.bf16.mxu0 0
        %1921 = vmatpush1.bf16.msra.mxu0 0
        %1922 = vmatprep.subr.bf16.mxu0 0
        %1923 = vmatpush1.bf16.msra.mxu0 0
        %1924 = vmatprep.subr.bf16.mxu0 0
        %1925 = vmatpush1.bf16.msra.mxu0 0
        %1926 = vmatprep.subr.bf16.mxu0 0
        %1927 = vmatpush1.bf16.msra.mxu0 0
        %1928 = vmatprep.subr.bf16.mxu0 0
        %1929 = vmatpush1.bf16.msra.mxu0 0
        %1930 = vmatprep.subr.bf16.mxu0 0
        %1931 = vmatpush1.bf16.msra.mxu0 0
        %1932 = vmatprep.subr.bf16.mxu0 0
        %1933 = vmatpush1.bf16.msra.mxu0 0
        %1934 = vmatprep.subr.bf16.mxu0 0
        %1935 = vmatpush1.bf16.msra.mxu0 0
        %1936 = vmatprep.subr.bf16.mxu0 0
        %1937 = vmatpush1.bf16.msra.mxu0 0
        %1938 = vmatprep.subr.bf16.mxu0 0
        %1939 = vmatpush1.bf16.msra.mxu0 0
        %1940 = vmatprep.subr.bf16.mxu0 0
        %1941 = vmatpush1.bf16.msra.mxu0 0
        %1942 = vmatprep.subr.bf16.mxu0 0
        %1943 = vmatpush1.bf16.msra.mxu0 0
        %1944 = vmatprep.subr.bf16.mxu0 0
        %1945 = vmatpush1.bf16.msra.mxu0 0
        %1946 = vmatprep.subr.bf16.mxu0 0
        %1947 = vmatpush1.bf16.msra.mxu0 0
        %1948 = vmatprep.mubr.bf16.mxu0 0
        %1949 = vmatmul.mubr.bf16.gmra.mrb[0].mxu0 %v1911
        %v1950 = vpop.f32.mrb[0].mxu0
        %v1951 = vadd.f32 0.0, %v1950
        %v1952 = vpop.f32.mrb[0].mxu0
        %v1953 = vpop.f32.mrb[0].mxu0
        %v1954 = vpop.f32.mrb[0].mxu0
        %1955 = vdwg.mxu0
        %1956 = vrot.lane.b32.xlu0 %v1047, 112
        %v1957 = vpop.permute.xlu0 %1956
        %1958 = vrot.lane.b32.xlu0 %v1048, 112
        %v1959 = vpop.permute.xlu0 %1958
        %1960 = vrot.lane.b32.xlu0 %v1049, 112
        %v1961 = vpop.permute.xlu0 %1960
        %1962 = vrot.lane.b32.xlu0 %v1050, 112
        %v1963 = vpop.permute.xlu0 %1962
        %1964 = vrot.lane.b32.xlu0 %v1051, 112
        %v1965 = vpop.permute.xlu0 %1964
        %1966 = vrot.lane.b32.xlu0 %v1052, 112
        %v1967 = vpop.permute.xlu0 %1966
        %1968 = vrot.lane.b32.xlu0 %v1053, 112
        %v1969 = vpop.permute.xlu0 %1968
        %v1971 = vsel %vm1054, %v1957, 0
        %v1974 = vsel %vm1054, %v1959, 0
        %v1977 = vsel %vm1054, %v1961, 0
        %v1980 = vsel %vm1054, %v1963, 0
        %v1983 = vsel %vm1054, %v1965, 0
        %v1986 = vsel %vm1054, %v1967, 0
        %v1989 = vsel %vm1054, %v1969, 0
        %1991 = vmatprep.subr.bf16.mxu0 0
        %1992 = vmatpush1.bf16.xpose.msra.mxu0 %v1989
        %1993 = vmatprep.subr.bf16.mxu0 0
        %1994 = vmatpush1.bf16.xpose.msra.mxu0 0
        %1995 = vmatprep.subr.bf16.mxu0 0
        %1996 = vmatpush1.bf16.xpose.msra.mxu0 0
        %1997 = vmatprep.subr.bf16.mxu0 0
        %1998 = vmatpush1.bf16.xpose.msra.mxu0 0
        %1999 = vmatprep.subr.bf16.mxu0 0
        %2000 = vmatpush1.bf16.xpose.msra.mxu0 0
        %2001 = vmatprep.subr.bf16.mxu0 0
        %2002 = vmatpush1.bf16.xpose.msra.mxu0 0
        %2003 = vmatprep.subr.bf16.mxu0 0
        %2004 = vmatpush1.bf16.xpose.msra.mxu0 0
        %2005 = vmatprep.subr.bf16.mxu0 0
        %2006 = vmatpush1.bf16.xpose.msra.mxu0 0
        %2007 = vmatprep.subr.bf16.mxu0 0
        %2008 = vmatpush1.bf16.xpose.msra.mxu0 0
        %2009 = vmatprep.subr.bf16.mxu0 0
        %2010 = vmatpush1.bf16.xpose.msra.mxu0 0
        %2011 = vmatprep.subr.bf16.mxu0 0
        %2012 = vmatpush1.bf16.xpose.msra.mxu0 0
        %2013 = vmatprep.subr.bf16.mxu0 0
        %2014 = vmatpush1.bf16.xpose.msra.mxu0 0
        %2015 = vmatprep.subr.bf16.mxu0 0
        %2016 = vmatpush1.bf16.xpose.msra.mxu0 0
        %2017 = vmatprep.subr.bf16.mxu0 0
        %2018 = vmatpush1.bf16.xpose.msra.mxu0 0
        %2019 = vmatprep.subr.bf16.mxu0 0
        %2020 = vmatpush1.bf16.xpose.msra.mxu0 0
        %2021 = vmatprep.subr.bf16.mxu0 0
        %2022 = vmatpush1.bf16.xpose.msra.mxu0 0
        %2023 = vmatprep.mubr.bf16.mxu0 0
        %2024 = vmatmul.mubr.bf16.gmra.mrb[0].mxu0 %v1971
        %v2025 = vpop.f32.mrb[0].mxu0
        %v2026 = vadd.f32 0.0, %v2025
        %v2027 = vpop.f32.mrb[0].mxu0
        %v2028 = vpop.f32.mrb[0].mxu0
        %v2029 = vadd.f32 0.0, %v2028
        %v2030 = vpop.f32.mrb[0].mxu0
        %2031 = vmatprep.mubr.bf16.mxu0 0
        %2032 = vmatmul.mubr.bf16.gmra.mrb[0].mxu0 %v1974
        %v2033 = vpop.f32.mrb[0].mxu0
        %v2034 = vadd.f32 0.0, %v2033
        %v2035 = vpop.f32.mrb[0].mxu0
        %v2036 = vpop.f32.mrb[0].mxu0
        %v2037 = vadd.f32 0.0, %v2036
        %v2038 = vpop.f32.mrb[0].mxu0
        %2039 = vmatprep.mubr.bf16.mxu0 0
        %2040 = vmatmul.mubr.bf16.gmra.mrb[0].mxu0 %v1977
        %v2041 = vpop.f32.mrb[0].mxu0
        %v2042 = vadd.f32 0.0, %v2041
        %v2043 = vpop.f32.mrb[0].mxu0
        %v2044 = vpop.f32.mrb[0].mxu0
        %v2045 = vadd.f32 0.0, %v2044
        %v2046 = vpop.f32.mrb[0].mxu0
        %2047 = vmatprep.mubr.bf16.mxu0 0
        %2048 = vmatmul.mubr.bf16.gmra.mrb[0].mxu0 %v1980
        %v2049 = vpop.f32.mrb[0].mxu0
        %v2050 = vadd.f32 0.0, %v2049
        %v2051 = vpop.f32.mrb[0].mxu0
        %v2052 = vpop.f32.mrb[0].mxu0
        %v2053 = vadd.f32 0.0, %v2052
        %v2054 = vpop.f32.mrb[0].mxu0
        %2055 = vmatprep.mubr.bf16.mxu0 0
        %2056 = vmatmul.mubr.bf16.gmra.mrb[0].mxu0 %v1983
        %v2057 = vpop.f32.mrb[0].mxu0
        %v2058 = vadd.f32 0.0, %v2057
        %v2059 = vpop.f32.mrb[0].mxu0
        %v2060 = vpop.f32.mrb[0].mxu0
        %v2061 = vadd.f32 0.0, %v2060
        %v2062 = vpop.f32.mrb[0].mxu0
        %2063 = vmatprep.mubr.bf16.mxu0 0
        %2064 = vmatmul.mubr.bf16.gmra.mrb[0].mxu0 %v1986
        %v2065 = vpop.f32.mrb[0].mxu0
        %v2066 = vadd.f32 0.0, %v2065
        %v2067 = vpop.f32.mrb[0].mxu0
        %v2068 = vpop.f32.mrb[0].mxu0
        %v2069 = vpop.f32.mrb[0].mxu0
        %2070 = vdwg.mxu0
        %v2071 = vmax.f32 %v2026, -50000.0
        %v2072 = vmax.f32 %v2029, -50000.0
        %v2073 = vmax.f32 %v2034, -50000.0
        %v2074 = vmax.f32 %v2037, -50000.0
        %v2075 = vmax.f32 %v2042, -50000.0
        %v2076 = vmax.f32 %v2045, -50000.0
        %v2077 = vmax.f32 %v2050, -50000.0
        %v2078 = vmax.f32 %v2053, -50000.0
        %v2079 = vmax.f32 %v2058, -50000.0
        %v2080 = vmax.f32 %v2061, -50000.0
        %v2081 = vmax.f32 %v2066, -50000.0
        %v2082 = vmin.f32 %v2071, 50000.0
        %v2083 = vmin.f32 %v2072, 50000.0
        %v2084 = vmin.f32 %v2073, 50000.0
        %v2085 = vmin.f32 %v2074, 50000.0
        %v2086 = vmin.f32 %v2075, 50000.0
        %v2087 = vmin.f32 %v2076, 50000.0
        %v2088 = vmin.f32 %v2077, 50000.0
        %v2089 = vmin.f32 %v2078, 50000.0
        %v2090 = vmin.f32 %v2079, 50000.0
        %v2091 = vmin.f32 %v2080, 50000.0
        %v2092 = vmin.f32 %v2081, 50000.0
        %2093 = vmatprep.subr.bf16.mxu0 0
        %2094 = vmatpush1.bf16.xpose.msra.mxu0 %v1971
        %2095 = vmatprep.subr.bf16.mxu0 0
        %2096 = vmatpush1.bf16.xpose.msra.mxu0 %v1974
        %2097 = vmatprep.subr.bf16.mxu0 0
        %2098 = vmatpush1.bf16.xpose.msra.mxu0 %v1977
        %2099 = vmatprep.subr.bf16.mxu0 0
        %2100 = vmatpush1.bf16.xpose.msra.mxu0 %v1980
        %2101 = vmatprep.subr.bf16.mxu0 0
        %2102 = vmatpush1.bf16.xpose.msra.mxu0 %v1983
        %2103 = vmatprep.subr.bf16.mxu0 0
        %2104 = vmatpush1.bf16.xpose.msra.mxu0 %v1986
        %2105 = vmatprep.subr.bf16.mxu0 0
        %2106 = vmatpush1.bf16.xpose.msra.mxu0 0
        %2107 = vmatprep.subr.bf16.mxu0 0
        %2108 = vmatpush1.bf16.xpose.msra.mxu0 0
        %2109 = vmatprep.subr.bf16.mxu0 0
        %2110 = vmatpush1.bf16.xpose.msra.mxu0 0
        %2111 = vmatprep.subr.bf16.mxu0 0
        %2112 = vmatpush1.bf16.xpose.msra.mxu0 0
        %2113 = vmatprep.subr.bf16.mxu0 0
        %2114 = vmatpush1.bf16.xpose.msra.mxu0 0
        %2115 = vmatprep.subr.bf16.mxu0 0
        %2116 = vmatpush1.bf16.xpose.msra.mxu0 0
        %2117 = vmatprep.subr.bf16.mxu0 0
        %2118 = vmatpush1.bf16.xpose.msra.mxu0 0
        %2119 = vmatprep.subr.bf16.mxu0 0
        %2120 = vmatpush1.bf16.xpose.msra.mxu0 0
        %2121 = vmatprep.subr.bf16.mxu0 0
        %2122 = vmatpush1.bf16.xpose.msra.mxu0 0
        %2123 = vmatprep.subr.bf16.mxu0 0
        %2124 = vmatpush1.bf16.xpose.msra.mxu0 0
        %2125 = vmatprep.mubr.bf16.mxu0 0
        %2126 = vmatmul.mubr.bf16.gmra.mrb[0].mxu0 %v1989
        %v2127 = vpop.f32.mrb[0].mxu0
        %v2128 = vadd.f32 0.0, %v2127
        %v2129 = vpop.f32.mrb[0].mxu0
        %v2130 = vpop.f32.mrb[0].mxu0
        %v2131 = vpop.f32.mrb[0].mxu0
        %2132 = vdwg.mxu0
        %v2133 = vmax.f32 %v2128, -50000.0
        %v2134 = vmin.f32 %v2133, 50000.0
        %v2135 = vsel %vm1220, %v2134, -inf
        %2136 = vmax.xlane.f32.xlu0 %v2135
        %v2137 = vpop.xlane.xlu0 %2136
        %v2138 = vsub.f32 %v2134, %v2137
        %v2139 = vmax.f32 %v2138, -50000.0
        %v2140 = vmin.f32 %v2139, 50000.0
        %v2141 = vmul.f32 %v2140, 1.442695
        %v2142 = vpow.pop %v2141
        %v2143 = vsel %vm1220, %v2142, 0.0
        %2144 = vadd.xlane.f32.xlu0 %v2143
        %v2145 = vpop.xlane.xlu0 %2144
        %v2146 = vrcp.pop %v2145
        %v2147 = vmul.f32 1.0, %v2146
        %v2148 = vmul.f32 %v2142, %v2147
        %v2149 = vpack.c.bf16 %v2148, %v2148
        %2150 = vrot.lane.b32.xlu0 %v1047, 48
        %v2151 = vpop.permute.xlu0 %2150
        %2152 = vrot.lane.b32.xlu0 %v1048, 48
        %v2153 = vpop.permute.xlu0 %2152
        %2154 = vrot.lane.b32.xlu0 %v1049, 48
        %v2155 = vpop.permute.xlu0 %2154
        %2156 = vrot.lane.b32.xlu0 %v1050, 48
        %v2157 = vpop.permute.xlu0 %2156
        %2158 = vrot.lane.b32.xlu0 %v1051, 48
        %v2159 = vpop.permute.xlu0 %2158
        %2160 = vrot.lane.b32.xlu0 %v1052, 48
        %v2161 = vpop.permute.xlu0 %2160
        %v2168 = vsel %vm1220, %v2149, 0
        %v2171 = vsel %vm1262, %v2161, 0
        %2173 = vmatprep.subr.bf16.mxu0 0
        %2174 = vmatpush1.bf16.msra.mxu0 %v2151
        %2175 = vmatprep.subr.bf16.mxu0 0
        %2176 = vmatpush1.bf16.msra.mxu0 %v2153
        %2177 = vmatprep.subr.bf16.mxu0 0
        %2178 = vmatpush1.bf16.msra.mxu0 %v2155
        %2179 = vmatprep.subr.bf16.mxu0 0
        %2180 = vmatpush1.bf16.msra.mxu0 %v2157
        %2181 = vmatprep.subr.bf16.mxu0 0
        %2182 = vmatpush1.bf16.msra.mxu0 %v2159
        %2183 = vmatprep.subr.bf16.mxu0 0
        %2184 = vmatpush1.bf16.msra.mxu0 %v2171
        %2185 = vmatprep.subr.bf16.mxu0 0
        %2186 = vmatpush1.bf16.msra.mxu0 0
        %2187 = vmatprep.subr.bf16.mxu0 0
        %2188 = vmatpush1.bf16.msra.mxu0 0
        %2189 = vmatprep.subr.bf16.mxu0 0
        %2190 = vmatpush1.bf16.msra.mxu0 0
        %2191 = vmatprep.subr.bf16.mxu0 0
        %2192 = vmatpush1.bf16.msra.mxu0 0
        %2193 = vmatprep.subr.bf16.mxu0 0
        %2194 = vmatpush1.bf16.msra.mxu0 0
        %2195 = vmatprep.subr.bf16.mxu0 0
        %2196 = vmatpush1.bf16.msra.mxu0 0
        %2197 = vmatprep.subr.bf16.mxu0 0
        %2198 = vmatpush1.bf16.msra.mxu0 0
        %2199 = vmatprep.subr.bf16.mxu0 0
        %2200 = vmatpush1.bf16.msra.mxu0 0
        %2201 = vmatprep.subr.bf16.mxu0 0
        %2202 = vmatpush1.bf16.msra.mxu0 0
        %2203 = vmatprep.subr.bf16.mxu0 0
        %2204 = vmatpush1.bf16.msra.mxu0 0
        %2205 = vmatprep.mubr.bf16.mxu0 0
        %2206 = vmatmul.mubr.bf16.gmra.mrb[0].mxu0 %v2168
        %v2207 = vpop.f32.mrb[0].mxu0
        %v2208 = vadd.f32 0.0, %v2207
        %v2209 = vpop.f32.mrb[0].mxu0
        %v2210 = vpop.f32.mrb[0].mxu0
        %v2211 = vpop.f32.mrb[0].mxu0
        %2212 = vdwg.mxu0
        %v2213 = vadd.f32 %v2082, %v1310
        %v2214 = vadd.f32 %v2083, %v1310
        %v2215 = vadd.f32 %v2084, %v1310
        %v2216 = vadd.f32 %v2085, %v1310
        %v2217 = vadd.f32 %v2086, %v1310
        %v2218 = vadd.f32 %v2087, %v1310
        %v2219 = vadd.f32 %v2088, %v1310
        %v2220 = vadd.f32 %v2089, %v1310
        %v2221 = vadd.f32 %v2090, %v1310
        %v2222 = vadd.f32 %v2091, %v1310
        %v2223 = vadd.f32 %v2092, %v1310
        %v2224 = vsel %vm1054, %v2213, -inf
        %2225 = vmax.xlane.f32.xlu0 %v2224
        %v2226 = vpop.xlane.xlu0 %2225
        %v2227 = vsel %vm1054, %v2214, -inf
        %2228 = vmax.xlane.f32.xlu0 %v2227
        %v2229 = vpop.xlane.xlu0 %2228
        %v2230 = vsel %vm1054, %v2215, -inf
        %2231 = vmax.xlane.f32.xlu0 %v2230
        %v2232 = vpop.xlane.xlu0 %2231
        %v2233 = vsel %vm1054, %v2216, -inf
        %2234 = vmax.xlane.f32.xlu0 %v2233
        %v2235 = vpop.xlane.xlu0 %2234
        %v2236 = vsel %vm1054, %v2217, -inf
        %2237 = vmax.xlane.f32.xlu0 %v2236
        %v2238 = vpop.xlane.xlu0 %2237
        %v2239 = vsel %vm1054, %v2218, -inf
        %2240 = vmax.xlane.f32.xlu0 %v2239
        %v2241 = vpop.xlane.xlu0 %2240
        %v2242 = vsel %vm1054, %v2219, -inf
        %2243 = vmax.xlane.f32.xlu0 %v2242
        %v2244 = vpop.xlane.xlu0 %2243
        %v2245 = vsel %vm1054, %v2220, -inf
        %2246 = vmax.xlane.f32.xlu0 %v2245
        %v2247 = vpop.xlane.xlu0 %2246
        %v2248 = vsel %vm1054, %v2221, -inf
        %2249 = vmax.xlane.f32.xlu0 %v2248
        %v2250 = vpop.xlane.xlu0 %2249
        %v2251 = vsel %vm1054, %v2222, -inf
        %2252 = vmax.xlane.f32.xlu0 %v2251
        %v2253 = vpop.xlane.xlu0 %2252
        %v2254 = vsel %vm1353, %v2223, -inf
        %2255 = vmax.xlane.f32.xlu0 %v2254
        %v2256 = vpop.xlane.xlu0 %2255
        %v2257 = vsub.f32 %v2213, %v2226
        %v2258 = vsub.f32 %v2214, %v2229
        %v2259 = vsub.f32 %v2215, %v2232
        %v2260 = vsub.f32 %v2216, %v2235
        %v2261 = vsub.f32 %v2217, %v2238
        %v2262 = vsub.f32 %v2218, %v2241
        %v2263 = vsub.f32 %v2219, %v2244
        %v2264 = vsub.f32 %v2220, %v2247
        %v2265 = vsub.f32 %v2221, %v2250
        %v2266 = vsub.f32 %v2222, %v2253
        %v2267 = vsub.f32 %v2223, %v2256
        %v2268 = vmul.f32 %v2257, 1.442695
        %v2269 = vpow.pop %v2268
        %v2270 = vmul.f32 %v2258, 1.442695
        %v2271 = vpow.pop %v2270
        %v2272 = vmul.f32 %v2259, 1.442695
        %v2273 = vpow.pop %v2272
        %v2274 = vmul.f32 %v2260, 1.442695
        %v2275 = vpow.pop %v2274
        %v2276 = vmul.f32 %v2261, 1.442695
        %v2277 = vpow.pop %v2276
        %v2278 = vmul.f32 %v2262, 1.442695
        %v2279 = vpow.pop %v2278
        %v2280 = vmul.f32 %v2263, 1.442695
        %v2281 = vpow.pop %v2280
        %v2282 = vmul.f32 %v2264, 1.442695
        %v2283 = vpow.pop %v2282
        %v2284 = vmul.f32 %v2265, 1.442695
        %v2285 = vpow.pop %v2284
        %v2286 = vmul.f32 %v2266, 1.442695
        %v2287 = vpow.pop %v2286
        %v2288 = vmul.f32 %v2267, 1.442695
        %v2289 = vpow.pop %v2288
        %v2290 = vsel %vm1054, %v2269, 0.0
        %2291 = vadd.xlane.f32.xlu0 %v2290
        %v2292 = vpop.xlane.xlu0 %2291
        %v2293 = vsel %vm1054, %v2271, 0.0
        %2294 = vadd.xlane.f32.xlu0 %v2293
        %v2295 = vpop.xlane.xlu0 %2294
        %v2296 = vsel %vm1054, %v2273, 0.0
        %2297 = vadd.xlane.f32.xlu0 %v2296
        %v2298 = vpop.xlane.xlu0 %2297
        %v2299 = vsel %vm1054, %v2275, 0.0
        %2300 = vadd.xlane.f32.xlu0 %v2299
        %v2301 = vpop.xlane.xlu0 %2300
        %v2302 = vsel %vm1054, %v2277, 0.0
        %2303 = vadd.xlane.f32.xlu0 %v2302
        %v2304 = vpop.xlane.xlu0 %2303
        %v2305 = vsel %vm1054, %v2279, 0.0
        %2306 = vadd.xlane.f32.xlu0 %v2305
        %v2307 = vpop.xlane.xlu0 %2306
        %v2308 = vsel %vm1054, %v2281, 0.0
        %2309 = vadd.xlane.f32.xlu0 %v2308
        %v2310 = vpop.xlane.xlu0 %2309
        %v2311 = vsel %vm1054, %v2283, 0.0
        %2312 = vadd.xlane.f32.xlu0 %v2311
        %v2313 = vpop.xlane.xlu0 %2312
        %v2314 = vsel %vm1054, %v2285, 0.0
        %2315 = vadd.xlane.f32.xlu0 %v2314
        %v2316 = vpop.xlane.xlu0 %2315
        %v2317 = vsel %vm1054, %v2287, 0.0
        %2318 = vadd.xlane.f32.xlu0 %v2317
        %v2319 = vpop.xlane.xlu0 %2318
        %v2320 = vsel %vm1353, %v2289, 0.0
        %2321 = vadd.xlane.f32.xlu0 %v2320
        %v2322 = vpop.xlane.xlu0 %2321
        %v2323 = vrcp.pop %v2292
        %v2324 = vmul.f32 1.0, %v2323
        %v2325 = vrcp.pop %v2295
        %v2326 = vmul.f32 1.0, %v2325
        %v2327 = vrcp.pop %v2298
        %v2328 = vmul.f32 1.0, %v2327
        %v2329 = vrcp.pop %v2301
        %v2330 = vmul.f32 1.0, %v2329
        %v2331 = vrcp.pop %v2304
        %v2332 = vmul.f32 1.0, %v2331
        %v2333 = vrcp.pop %v2307
        %v2334 = vmul.f32 1.0, %v2333
        %v2335 = vrcp.pop %v2310
        %v2336 = vmul.f32 1.0, %v2335
        %v2337 = vrcp.pop %v2313
        %v2338 = vmul.f32 1.0, %v2337
        %v2339 = vrcp.pop %v2316
        %v2340 = vmul.f32 1.0, %v2339
        %v2341 = vrcp.pop %v2319
        %v2342 = vmul.f32 1.0, %v2341
        %v2343 = vrcp.pop %v2322
        %v2344 = vmul.f32 1.0, %v2343
        %v2345 = vmul.f32 %v2269, %v2324
        %v2346 = vmul.f32 %v2271, %v2326
        %v2347 = vmul.f32 %v2273, %v2328
        %v2348 = vmul.f32 %v2275, %v2330
        %v2349 = vmul.f32 %v2277, %v2332
        %v2350 = vmul.f32 %v2279, %v2334
        %v2351 = vmul.f32 %v2281, %v2336
        %v2352 = vmul.f32 %v2283, %v2338
        %v2353 = vmul.f32 %v2285, %v2340
        %v2354 = vmul.f32 %v2287, %v2342
        %v2355 = vmul.f32 %v2289, %v2344
        %v2356 = vpack.c.bf16 %v1041, %v1041
        %2357 = vrot.lane.b32.xlu0 %v1053, 48
        %v2358 = vpop.permute.xlu0 %2357
        %v2360 = vsel %vm1054, %v2358, 0
        %v2363 = vsel %vm1463, %v2356, 0
        %2365 = vmatprep.subr.bf16.mxu0 0
        %2366 = vmatpush1.bf16.msra.mxu0 %v2363
        %2367 = vmatprep.subr.bf16.mxu0 0
        %2368 = vmatpush1.bf16.msra.mxu0 0
        %2369 = vmatprep.subr.bf16.mxu0 0
        %2370 = vmatpush1.bf16.msra.mxu0 0
        %2371 = vmatprep.subr.bf16.mxu0 0
        %2372 = vmatpush1.bf16.msra.mxu0 0
        %2373 = vmatprep.subr.bf16.mxu0 0
        %2374 = vmatpush1.bf16.msra.mxu0 0
        %2375 = vmatprep.subr.bf16.mxu0 0
        %2376 = vmatpush1.bf16.msra.mxu0 0
        %2377 = vmatprep.subr.bf16.mxu0 0
        %2378 = vmatpush1.bf16.msra.mxu0 0
        %2379 = vmatprep.subr.bf16.mxu0 0
        %2380 = vmatpush1.bf16.msra.mxu0 0
        %2381 = vmatprep.subr.bf16.mxu0 0
        %2382 = vmatpush1.bf16.msra.mxu0 0
        %2383 = vmatprep.subr.bf16.mxu0 0
        %2384 = vmatpush1.bf16.msra.mxu0 0
        %2385 = vmatprep.subr.bf16.mxu0 0
        %2386 = vmatpush1.bf16.msra.mxu0 0
        %2387 = vmatprep.subr.bf16.mxu0 0
        %2388 = vmatpush1.bf16.msra.mxu0 0
        %2389 = vmatprep.subr.bf16.mxu0 0
        %2390 = vmatpush1.bf16.msra.mxu0 0
        %2391 = vmatprep.subr.bf16.mxu0 0
        %2392 = vmatpush1.bf16.msra.mxu0 0
        %2393 = vmatprep.subr.bf16.mxu0 0
        %2394 = vmatpush1.bf16.msra.mxu0 0
        %2395 = vmatprep.subr.bf16.mxu0 0
        %2396 = vmatpush1.bf16.msra.mxu0 0
        %2397 = vmatprep.mubr.bf16.mxu0 0
        %2398 = vmatmul.mubr.bf16.gmra.mrb[0].mxu0 %v2360
        %v2399 = vpop.f32.mrb[0].mxu0
        %v2400 = vadd.f32 0.0, %v2399
        %v2401 = vpop.f32.mrb[0].mxu0
        %v2402 = vpop.f32.mrb[0].mxu0
        %v2403 = vpop.f32.mrb[0].mxu0
        %2404 = vdwg.mxu0
        %2405 = vrot.lane.b32.xlu0 %v1047, 104
        %v2406 = vpop.permute.xlu0 %2405
        %2407 = vrot.lane.b32.xlu0 %v1048, 104
        %v2408 = vpop.permute.xlu0 %2407
        %2409 = vrot.lane.b32.xlu0 %v1049, 104
        %v2410 = vpop.permute.xlu0 %2409
        %2411 = vrot.lane.b32.xlu0 %v1050, 104
        %v2412 = vpop.permute.xlu0 %2411
        %2413 = vrot.lane.b32.xlu0 %v1051, 104
        %v2414 = vpop.permute.xlu0 %2413
        %2415 = vrot.lane.b32.xlu0 %v1052, 104
        %v2416 = vpop.permute.xlu0 %2415
        %2417 = vrot.lane.b32.xlu0 %v1053, 104
        %v2418 = vpop.permute.xlu0 %2417
        %v2420 = vsel %vm1054, %v2406, 0
        %v2423 = vsel %vm1054, %v2408, 0
        %v2426 = vsel %vm1054, %v2410, 0
        %v2429 = vsel %vm1054, %v2412, 0
        %v2432 = vsel %vm1054, %v2414, 0
        %v2435 = vsel %vm1054, %v2416, 0
        %v2438 = vsel %vm1054, %v2418, 0
        %2440 = vmatprep.subr.bf16.mxu0 0
        %2441 = vmatpush1.bf16.xpose.msra.mxu0 %v2438
        %2442 = vmatprep.subr.bf16.mxu0 0
        %2443 = vmatpush1.bf16.xpose.msra.mxu0 0
        %2444 = vmatprep.subr.bf16.mxu0 0
        %2445 = vmatpush1.bf16.xpose.msra.mxu0 0
        %2446 = vmatprep.subr.bf16.mxu0 0
        %2447 = vmatpush1.bf16.xpose.msra.mxu0 0
        %2448 = vmatprep.subr.bf16.mxu0 0
        %2449 = vmatpush1.bf16.xpose.msra.mxu0 0
        %2450 = vmatprep.subr.bf16.mxu0 0
        %2451 = vmatpush1.bf16.xpose.msra.mxu0 0
        %2452 = vmatprep.subr.bf16.mxu0 0
        %2453 = vmatpush1.bf16.xpose.msra.mxu0 0
        %2454 = vmatprep.subr.bf16.mxu0 0
        %2455 = vmatpush1.bf16.xpose.msra.mxu0 0
        %2456 = vmatprep.subr.bf16.mxu0 0
        %2457 = vmatpush1.bf16.xpose.msra.mxu0 0
        %2458 = vmatprep.subr.bf16.mxu0 0
        %2459 = vmatpush1.bf16.xpose.msra.mxu0 0
        %2460 = vmatprep.subr.bf16.mxu0 0
        %2461 = vmatpush1.bf16.xpose.msra.mxu0 0
        %2462 = vmatprep.subr.bf16.mxu0 0
        %2463 = vmatpush1.bf16.xpose.msra.mxu0 0
        %2464 = vmatprep.subr.bf16.mxu0 0
        %2465 = vmatpush1.bf16.xpose.msra.mxu0 0
        %2466 = vmatprep.subr.bf16.mxu0 0
        %2467 = vmatpush1.bf16.xpose.msra.mxu0 0
        %2468 = vmatprep.subr.bf16.mxu0 0
        %2469 = vmatpush1.bf16.xpose.msra.mxu0 0
        %2470 = vmatprep.subr.bf16.mxu0 0
        %2471 = vmatpush1.bf16.xpose.msra.mxu0 0
        %2472 = vmatprep.mubr.bf16.mxu0 0
        %2473 = vmatmul.mubr.bf16.gmra.mrb[0].mxu0 %v2420
        %v2474 = vpop.f32.mrb[0].mxu0
        %v2475 = vadd.f32 0.0, %v2474
        %v2476 = vpop.f32.mrb[0].mxu0
        %v2477 = vpop.f32.mrb[0].mxu0
        %v2478 = vadd.f32 0.0, %v2477
        %v2479 = vpop.f32.mrb[0].mxu0
        %2480 = vmatprep.mubr.bf16.mxu0 0
        %2481 = vmatmul.mubr.bf16.gmra.mrb[0].mxu0 %v2423
        %v2482 = vpop.f32.mrb[0].mxu0
        %v2483 = vadd.f32 0.0, %v2482
        %v2484 = vpop.f32.mrb[0].mxu0
        %v2485 = vpop.f32.mrb[0].mxu0
        %v2486 = vadd.f32 0.0, %v2485
        %v2487 = vpop.f32.mrb[0].mxu0
        %2488 = vmatprep.mubr.bf16.mxu0 0
        %2489 = vmatmul.mubr.bf16.gmra.mrb[0].mxu0 %v2426
        %v2490 = vpop.f32.mrb[0].mxu0
        %v2491 = vadd.f32 0.0, %v2490
        %v2492 = vpop.f32.mrb[0].mxu0
        %v2493 = vpop.f32.mrb[0].mxu0
        %v2494 = vadd.f32 0.0, %v2493
        %v2495 = vpop.f32.mrb[0].mxu0
        %2496 = vmatprep.mubr.bf16.mxu0 0
        %2497 = vmatmul.mubr.bf16.gmra.mrb[0].mxu0 %v2429
        %v2498 = vpop.f32.mrb[0].mxu0
        %v2499 = vadd.f32 0.0, %v2498
        %v2500 = vpop.f32.mrb[0].mxu0
        %v2501 = vpop.f32.mrb[0].mxu0
        %v2502 = vadd.f32 0.0, %v2501
        %v2503 = vpop.f32.mrb[0].mxu0
        %2504 = vmatprep.mubr.bf16.mxu0 0
        %2505 = vmatmul.mubr.bf16.gmra.mrb[0].mxu0 %v2432
        %v2506 = vpop.f32.mrb[0].mxu0
        %v2507 = vadd.f32 0.0, %v2506
        %v2508 = vpop.f32.mrb[0].mxu0
        %v2509 = vpop.f32.mrb[0].mxu0
        %v2510 = vadd.f32 0.0, %v2509
        %v2511 = vpop.f32.mrb[0].mxu0
        %2512 = vmatprep.mubr.bf16.mxu0 0
        %2513 = vmatmul.mubr.bf16.gmra.mrb[0].mxu0 %v2435
        %v2514 = vpop.f32.mrb[0].mxu0
        %v2515 = vadd.f32 0.0, %v2514
        %v2516 = vpop.f32.mrb[0].mxu0
        %v2517 = vpop.f32.mrb[0].mxu0
        %v2518 = vpop.f32.mrb[0].mxu0
        %2519 = vdwg.mxu0
        %v2520 = vmax.f32 %v2475, -50000.0
        %v2521 = vmax.f32 %v2478, -50000.0
        %v2522 = vmax.f32 %v2483, -50000.0
        %v2523 = vmax.f32 %v2486, -50000.0
        %v2524 = vmax.f32 %v2491, -50000.0
        %v2525 = vmax.f32 %v2494, -50000.0
        %v2526 = vmax.f32 %v2499, -50000.0
        %v2527 = vmax.f32 %v2502, -50000.0
        %v2528 = vmax.f32 %v2507, -50000.0
        %v2529 = vmax.f32 %v2510, -50000.0
        %v2530 = vmax.f32 %v2515, -50000.0
        %v2531 = vmin.f32 %v2520, 50000.0
        %v2532 = vmin.f32 %v2521, 50000.0
        %v2533 = vmin.f32 %v2522, 50000.0
        %v2534 = vmin.f32 %v2523, 50000.0
        %v2535 = vmin.f32 %v2524, 50000.0
        %v2536 = vmin.f32 %v2525, 50000.0
        %v2537 = vmin.f32 %v2526, 50000.0
        %v2538 = vmin.f32 %v2527, 50000.0
        %v2539 = vmin.f32 %v2528, 50000.0
        %v2540 = vmin.f32 %v2529, 50000.0
        %v2541 = vmin.f32 %v2530, 50000.0
        %2542 = vmatprep.subr.bf16.mxu0 0
        %2543 = vmatpush1.bf16.xpose.msra.mxu0 %v2420
        %2544 = vmatprep.subr.bf16.mxu0 0
        %2545 = vmatpush1.bf16.xpose.msra.mxu0 %v2423
        %2546 = vmatprep.subr.bf16.mxu0 0
        %2547 = vmatpush1.bf16.xpose.msra.mxu0 %v2426
        %2548 = vmatprep.subr.bf16.mxu0 0
        %2549 = vmatpush1.bf16.xpose.msra.mxu0 %v2429
        %2550 = vmatprep.subr.bf16.mxu0 0
        %2551 = vmatpush1.bf16.xpose.msra.mxu0 %v2432
        %2552 = vmatprep.subr.bf16.mxu0 0
        %2553 = vmatpush1.bf16.xpose.msra.mxu0 %v2435
        %2554 = vmatprep.subr.bf16.mxu0 0
        %2555 = vmatpush1.bf16.xpose.msra.mxu0 0
        %2556 = vmatprep.subr.bf16.mxu0 0
        %2557 = vmatpush1.bf16.xpose.msra.mxu0 0
        %2558 = vmatprep.subr.bf16.mxu0 0
        %2559 = vmatpush1.bf16.xpose.msra.mxu0 0
        %2560 = vmatprep.subr.bf16.mxu0 0
        %2561 = vmatpush1.bf16.xpose.msra.mxu0 0
        %2562 = vmatprep.subr.bf16.mxu0 0
        %2563 = vmatpush1.bf16.xpose.msra.mxu0 0
        %2564 = vmatprep.subr.bf16.mxu0 0
        %2565 = vmatpush1.bf16.xpose.msra.mxu0 0
        %2566 = vmatprep.subr.bf16.mxu0 0
        %2567 = vmatpush1.bf16.xpose.msra.mxu0 0
        %2568 = vmatprep.subr.bf16.mxu0 0
        %2569 = vmatpush1.bf16.xpose.msra.mxu0 0
        %2570 = vmatprep.subr.bf16.mxu0 0
        %2571 = vmatpush1.bf16.xpose.msra.mxu0 0
        %2572 = vmatprep.subr.bf16.mxu0 0
        %2573 = vmatpush1.bf16.xpose.msra.mxu0 0
        %2574 = vmatprep.mubr.bf16.mxu0 0
        %2575 = vmatmul.mubr.bf16.gmra.mrb[0].mxu0 %v2438
        %v2576 = vpop.f32.mrb[0].mxu0
        %v2577 = vadd.f32 0.0, %v2576
        %v2578 = vpop.f32.mrb[0].mxu0
        %v2579 = vpop.f32.mrb[0].mxu0
        %v2580 = vpop.f32.mrb[0].mxu0
        %2581 = vdwg.mxu0
        %v2582 = vmax.f32 %v2577, -50000.0
        %v2583 = vmin.f32 %v2582, 50000.0
        %v2584 = vsel %vm1220, %v2583, -inf
        %2585 = vmax.xlane.f32.xlu0 %v2584
        %v2586 = vpop.xlane.xlu0 %2585
        %v2587 = vsub.f32 %v2583, %v2586
        %v2588 = vmax.f32 %v2587, -50000.0
        %v2589 = vmin.f32 %v2588, 50000.0
        %v2590 = vmul.f32 %v2589, 1.442695
        %v2591 = vpow.pop %v2590
        %v2592 = vsel %vm1220, %v2591, 0.0
        %2593 = vadd.xlane.f32.xlu0 %v2592
        %v2594 = vpop.xlane.xlu0 %2593
        %v2595 = vrcp.pop %v2594
        %v2596 = vmul.f32 1.0, %v2595
        %v2597 = vmul.f32 %v2591, %v2596
        %v2598 = vpack.c.bf16 %v2597, %v2597
        %2599 = vrot.lane.b32.xlu0 %v1047, 40
        %v2600 = vpop.permute.xlu0 %2599
        %2601 = vrot.lane.b32.xlu0 %v1048, 40
        %v2602 = vpop.permute.xlu0 %2601
        %2603 = vrot.lane.b32.xlu0 %v1049, 40
        %v2604 = vpop.permute.xlu0 %2603
        %2605 = vrot.lane.b32.xlu0 %v1050, 40
        %v2606 = vpop.permute.xlu0 %2605
        %2607 = vrot.lane.b32.xlu0 %v1051, 40
        %v2608 = vpop.permute.xlu0 %2607
        %2609 = vrot.lane.b32.xlu0 %v1052, 40
        %v2610 = vpop.permute.xlu0 %2609
        %v2617 = vsel %vm1220, %v2598, 0
        %v2620 = vsel %vm1262, %v2610, 0
        %2622 = vmatprep.subr.bf16.mxu0 0
        %2623 = vmatpush1.bf16.msra.mxu0 %v2600
        %2624 = vmatprep.subr.bf16.mxu0 0
        %2625 = vmatpush1.bf16.msra.mxu0 %v2602
        %2626 = vmatprep.subr.bf16.mxu0 0
        %2627 = vmatpush1.bf16.msra.mxu0 %v2604
        %2628 = vmatprep.subr.bf16.mxu0 0
        %2629 = vmatpush1.bf16.msra.mxu0 %v2606
        %2630 = vmatprep.subr.bf16.mxu0 0
        %2631 = vmatpush1.bf16.msra.mxu0 %v2608
        %2632 = vmatprep.subr.bf16.mxu0 0
        %2633 = vmatpush1.bf16.msra.mxu0 %v2620
        %2634 = vmatprep.subr.bf16.mxu0 0
        %2635 = vmatpush1.bf16.msra.mxu0 0
        %2636 = vmatprep.subr.bf16.mxu0 0
        %2637 = vmatpush1.bf16.msra.mxu0 0
        %2638 = vmatprep.subr.bf16.mxu0 0
        %2639 = vmatpush1.bf16.msra.mxu0 0
        %2640 = vmatprep.subr.bf16.mxu0 0
        %2641 = vmatpush1.bf16.msra.mxu0 0
        %2642 = vmatprep.subr.bf16.mxu0 0
        %2643 = vmatpush1.bf16.msra.mxu0 0
        %2644 = vmatprep.subr.bf16.mxu0 0
        %2645 = vmatpush1.bf16.msra.mxu0 0
        %2646 = vmatprep.subr.bf16.mxu0 0
        %2647 = vmatpush1.bf16.msra.mxu0 0
        %2648 = vmatprep.subr.bf16.mxu0 0
        %2649 = vmatpush1.bf16.msra.mxu0 0
        %2650 = vmatprep.subr.bf16.mxu0 0
        %2651 = vmatpush1.bf16.msra.mxu0 0
        %2652 = vmatprep.subr.bf16.mxu0 0
        %2653 = vmatpush1.bf16.msra.mxu0 0
        %2654 = vmatprep.mubr.bf16.mxu0 0
        %2655 = vmatmul.mubr.bf16.gmra.mrb[0].mxu0 %v2617
        %v2656 = vpop.f32.mrb[0].mxu0
        %v2657 = vadd.f32 0.0, %v2656
        %v2658 = vpop.f32.mrb[0].mxu0
        %v2659 = vpop.f32.mrb[0].mxu0
        %v2660 = vpop.f32.mrb[0].mxu0
        %2661 = vdwg.mxu0
        %v2662 = vadd.f32 %v2531, %v1310
        %v2663 = vadd.f32 %v2532, %v1310
        %v2664 = vadd.f32 %v2533, %v1310
        %v2665 = vadd.f32 %v2534, %v1310
        %v2666 = vadd.f32 %v2535, %v1310
        %v2667 = vadd.f32 %v2536, %v1310
        %v2668 = vadd.f32 %v2537, %v1310
        %v2669 = vadd.f32 %v2538, %v1310
        %v2670 = vadd.f32 %v2539, %v1310
        %v2671 = vadd.f32 %v2540, %v1310
        %v2672 = vadd.f32 %v2541, %v1310
        %v2673 = vsel %vm1054, %v2662, -inf
        %2674 = vmax.xlane.f32.xlu0 %v2673
        %v2675 = vpop.xlane.xlu0 %2674
        %v2676 = vsel %vm1054, %v2663, -inf
        %2677 = vmax.xlane.f32.xlu0 %v2676
        %v2678 = vpop.xlane.xlu0 %2677
        %v2679 = vsel %vm1054, %v2664, -inf
        %2680 = vmax.xlane.f32.xlu0 %v2679
        %v2681 = vpop.xlane.xlu0 %2680
        %v2682 = vsel %vm1054, %v2665, -inf
        %2683 = vmax.xlane.f32.xlu0 %v2682
        %v2684 = vpop.xlane.xlu0 %2683
        %v2685 = vsel %vm1054, %v2666, -inf
        %2686 = vmax.xlane.f32.xlu0 %v2685
        %v2687 = vpop.xlane.xlu0 %2686
        %v2688 = vsel %vm1054, %v2667, -inf
        %2689 = vmax.xlane.f32.xlu0 %v2688
        %v2690 = vpop.xlane.xlu0 %2689
        %v2691 = vsel %vm1054, %v2668, -inf
        %2692 = vmax.xlane.f32.xlu0 %v2691
        %v2693 = vpop.xlane.xlu0 %2692
        %v2694 = vsel %vm1054, %v2669, -inf
        %2695 = vmax.xlane.f32.xlu0 %v2694
        %v2696 = vpop.xlane.xlu0 %2695
        %v2697 = vsel %vm1054, %v2670, -inf
        %2698 = vmax.xlane.f32.xlu0 %v2697
        %v2699 = vpop.xlane.xlu0 %2698
        %v2700 = vsel %vm1054, %v2671, -inf
        %2701 = vmax.xlane.f32.xlu0 %v2700
        %v2702 = vpop.xlane.xlu0 %2701
        %v2703 = vsel %vm1353, %v2672, -inf
        %2704 = vmax.xlane.f32.xlu0 %v2703
        %v2705 = vpop.xlane.xlu0 %2704
        %v2706 = vsub.f32 %v2662, %v2675
        %v2707 = vsub.f32 %v2663, %v2678
        %v2708 = vsub.f32 %v2664, %v2681
        %v2709 = vsub.f32 %v2665, %v2684
        %v2710 = vsub.f32 %v2666, %v2687
        %v2711 = vsub.f32 %v2667, %v2690
        %v2712 = vsub.f32 %v2668, %v2693
        %v2713 = vsub.f32 %v2669, %v2696
        %v2714 = vsub.f32 %v2670, %v2699
        %v2715 = vsub.f32 %v2671, %v2702
        %v2716 = vsub.f32 %v2672, %v2705
        %v2717 = vmul.f32 %v2706, 1.442695
        %v2718 = vpow.pop %v2717
        %v2719 = vmul.f32 %v2707, 1.442695
        %v2720 = vpow.pop %v2719
        %v2721 = vmul.f32 %v2708, 1.442695
        %v2722 = vpow.pop %v2721
        %v2723 = vmul.f32 %v2709, 1.442695
        %v2724 = vpow.pop %v2723
        %v2725 = vmul.f32 %v2710, 1.442695
        %v2726 = vpow.pop %v2725
        %v2727 = vmul.f32 %v2711, 1.442695
        %v2728 = vpow.pop %v2727
        %v2729 = vmul.f32 %v2712, 1.442695
        %v2730 = vpow.pop %v2729
        %v2731 = vmul.f32 %v2713, 1.442695
        %v2732 = vpow.pop %v2731
        %v2733 = vmul.f32 %v2714, 1.442695
        %v2734 = vpow.pop %v2733
        %v2735 = vmul.f32 %v2715, 1.442695
        %v2736 = vpow.pop %v2735
        %v2737 = vmul.f32 %v2716, 1.442695
        %v2738 = vpow.pop %v2737
        %v2739 = vsel %vm1054, %v2718, 0.0
        %2740 = vadd.xlane.f32.xlu0 %v2739
        %v2741 = vpop.xlane.xlu0 %2740
        %v2742 = vsel %vm1054, %v2720, 0.0
        %2743 = vadd.xlane.f32.xlu0 %v2742
        %v2744 = vpop.xlane.xlu0 %2743
        %v2745 = vsel %vm1054, %v2722, 0.0
        %2746 = vadd.xlane.f32.xlu0 %v2745
        %v2747 = vpop.xlane.xlu0 %2746
        %v2748 = vsel %vm1054, %v2724, 0.0
        %2749 = vadd.xlane.f32.xlu0 %v2748
        %v2750 = vpop.xlane.xlu0 %2749
        %v2751 = vsel %vm1054, %v2726, 0.0
        %2752 = vadd.xlane.f32.xlu0 %v2751
        %v2753 = vpop.xlane.xlu0 %2752
        %v2754 = vsel %vm1054, %v2728, 0.0
        %2755 = vadd.xlane.f32.xlu0 %v2754
        %v2756 = vpop.xlane.xlu0 %2755
        %v2757 = vsel %vm1054, %v2730, 0.0
        %2758 = vadd.xlane.f32.xlu0 %v2757
        %v2759 = vpop.xlane.xlu0 %2758
        %v2760 = vsel %vm1054, %v2732, 0.0
        %2761 = vadd.xlane.f32.xlu0 %v2760
        %v2762 = vpop.xlane.xlu0 %2761
        %v2763 = vsel %vm1054, %v2734, 0.0
        %2764 = vadd.xlane.f32.xlu0 %v2763
        %v2765 = vpop.xlane.xlu0 %2764
        %v2766 = vsel %vm1054, %v2736, 0.0
        %2767 = vadd.xlane.f32.xlu0 %v2766
        %v2768 = vpop.xlane.xlu0 %2767
        %v2769 = vsel %vm1353, %v2738, 0.0
        %2770 = vadd.xlane.f32.xlu0 %v2769
        %v2771 = vpop.xlane.xlu0 %2770
        %v2772 = vrcp.pop %v2741
        %v2773 = vmul.f32 1.0, %v2772
        %v2774 = vrcp.pop %v2744
        %v2775 = vmul.f32 1.0, %v2774
        %v2776 = vrcp.pop %v2747
        %v2777 = vmul.f32 1.0, %v2776
        %v2778 = vrcp.pop %v2750
        %v2779 = vmul.f32 1.0, %v2778
        %v2780 = vrcp.pop %v2753
        %v2781 = vmul.f32 1.0, %v2780
        %v2782 = vrcp.pop %v2756
        %v2783 = vmul.f32 1.0, %v2782
        %v2784 = vrcp.pop %v2759
        %v2785 = vmul.f32 1.0, %v2784
        %v2786 = vrcp.pop %v2762
        %v2787 = vmul.f32 1.0, %v2786
        %v2788 = vrcp.pop %v2765
        %v2789 = vmul.f32 1.0, %v2788
        %v2790 = vrcp.pop %v2768
        %v2791 = vmul.f32 1.0, %v2790
        %v2792 = vrcp.pop %v2771
        %v2793 = vmul.f32 1.0, %v2792
        %v2794 = vmul.f32 %v2718, %v2773
        %v2795 = vmul.f32 %v2720, %v2775
        %v2796 = vmul.f32 %v2722, %v2777
        %v2797 = vmul.f32 %v2724, %v2779
        %v2798 = vmul.f32 %v2726, %v2781
        %v2799 = vmul.f32 %v2728, %v2783
        %v2800 = vmul.f32 %v2730, %v2785
        %v2801 = vmul.f32 %v2732, %v2787
        %v2802 = vmul.f32 %v2734, %v2789
        %v2803 = vmul.f32 %v2736, %v2791
        %v2804 = vmul.f32 %v2738, %v2793
        %v2805 = vpack.c.bf16 %v1042, %v1042
        %2806 = vrot.lane.b32.xlu0 %v1053, 40
        %v2807 = vpop.permute.xlu0 %2806
        %v2809 = vsel %vm1054, %v2807, 0
        %v2812 = vsel %vm1463, %v2805, 0
        %2814 = vmatprep.subr.bf16.mxu0 0
        %2815 = vmatpush1.bf16.msra.mxu0 %v2812
        %2816 = vmatprep.subr.bf16.mxu0 0
        %2817 = vmatpush1.bf16.msra.mxu0 0
        %2818 = vmatprep.subr.bf16.mxu0 0
        %2819 = vmatpush1.bf16.msra.mxu0 0
        %2820 = vmatprep.subr.bf16.mxu0 0
        %2821 = vmatpush1.bf16.msra.mxu0 0
        %2822 = vmatprep.subr.bf16.mxu0 0
        %2823 = vmatpush1.bf16.msra.mxu0 0
        %2824 = vmatprep.subr.bf16.mxu0 0
        %2825 = vmatpush1.bf16.msra.mxu0 0
        %2826 = vmatprep.subr.bf16.mxu0 0
        %2827 = vmatpush1.bf16.msra.mxu0 0
        %2828 = vmatprep.subr.bf16.mxu0 0
        %2829 = vmatpush1.bf16.msra.mxu0 0
        %2830 = vmatprep.subr.bf16.mxu0 0
        %2831 = vmatpush1.bf16.msra.mxu0 0
        %2832 = vmatprep.subr.bf16.mxu0 0
        %2833 = vmatpush1.bf16.msra.mxu0 0
        %2834 = vmatprep.subr.bf16.mxu0 0
        %2835 = vmatpush1.bf16.msra.mxu0 0
        %2836 = vmatprep.subr.bf16.mxu0 0
        %2837 = vmatpush1.bf16.msra.mxu0 0
        %2838 = vmatprep.subr.bf16.mxu0 0
        %2839 = vmatpush1.bf16.msra.mxu0 0
        %2840 = vmatprep.subr.bf16.mxu0 0
        %2841 = vmatpush1.bf16.msra.mxu0 0
        %2842 = vmatprep.subr.bf16.mxu0 0
        %2843 = vmatpush1.bf16.msra.mxu0 0
        %2844 = vmatprep.subr.bf16.mxu0 0
        %2845 = vmatpush1.bf16.msra.mxu0 0
        %2846 = vmatprep.mubr.bf16.mxu0 0
        %2847 = vmatmul.mubr.bf16.gmra.mrb[0].mxu0 %v2809
        %v2848 = vpop.f32.mrb[0].mxu0
        %v2849 = vadd.f32 0.0, %v2848
        %v2850 = vpop.f32.mrb[0].mxu0
        %v2851 = vpop.f32.mrb[0].mxu0
        %v2852 = vpop.f32.mrb[0].mxu0
        %2853 = vdwg.mxu0
        %2854 = vrot.lane.b32.xlu0 %v1047, 96
        %v2855 = vpop.permute.xlu0 %2854
        %2856 = vrot.lane.b32.xlu0 %v1048, 96
        %v2857 = vpop.permute.xlu0 %2856
        %2858 = vrot.lane.b32.xlu0 %v1049, 96
        %v2859 = vpop.permute.xlu0 %2858
        %2860 = vrot.lane.b32.xlu0 %v1050, 96
        %v2861 = vpop.permute.xlu0 %2860
        %2862 = vrot.lane.b32.xlu0 %v1051, 96
        %v2863 = vpop.permute.xlu0 %2862
        %2864 = vrot.lane.b32.xlu0 %v1052, 96
        %v2865 = vpop.permute.xlu0 %2864
        %2866 = vrot.lane.b32.xlu0 %v1053, 96
        %v2867 = vpop.permute.xlu0 %2866
        %v2869 = vsel %vm1054, %v2855, 0
        %v2872 = vsel %vm1054, %v2857, 0
        %v2875 = vsel %vm1054, %v2859, 0
        %v2878 = vsel %vm1054, %v2861, 0
        %v2881 = vsel %vm1054, %v2863, 0
        %v2884 = vsel %vm1054, %v2865, 0
        %v2887 = vsel %vm1054, %v2867, 0
        %2889 = vmatprep.subr.bf16.mxu0 0
        %2890 = vmatpush1.bf16.xpose.msra.mxu0 %v2887
        %2891 = vmatprep.subr.bf16.mxu0 0
        %2892 = vmatpush1.bf16.xpose.msra.mxu0 0
        %2893 = vmatprep.subr.bf16.mxu0 0
        %2894 = vmatpush1.bf16.xpose.msra.mxu0 0
        %2895 = vmatprep.subr.bf16.mxu0 0
        %2896 = vmatpush1.bf16.xpose.msra.mxu0 0
        %2897 = vmatprep.subr.bf16.mxu0 0
        %2898 = vmatpush1.bf16.xpose.msra.mxu0 0
        %2899 = vmatprep.subr.bf16.mxu0 0
        %2900 = vmatpush1.bf16.xpose.msra.mxu0 0
        %2901 = vmatprep.subr.bf16.mxu0 0
        %2902 = vmatpush1.bf16.xpose.msra.mxu0 0
        %2903 = vmatprep.subr.bf16.mxu0 0
        %2904 = vmatpush1.bf16.xpose.msra.mxu0 0
        %2905 = vmatprep.subr.bf16.mxu0 0
        %2906 = vmatpush1.bf16.xpose.msra.mxu0 0
        %2907 = vmatprep.subr.bf16.mxu0 0
        %2908 = vmatpush1.bf16.xpose.msra.mxu0 0
        %2909 = vmatprep.subr.bf16.mxu0 0
        %2910 = vmatpush1.bf16.xpose.msra.mxu0 0
        %2911 = vmatprep.subr.bf16.mxu0 0
        %2912 = vmatpush1.bf16.xpose.msra.mxu0 0
        %2913 = vmatprep.subr.bf16.mxu0 0
        %2914 = vmatpush1.bf16.xpose.msra.mxu0 0
        %2915 = vmatprep.subr.bf16.mxu0 0
        %2916 = vmatpush1.bf16.xpose.msra.mxu0 0
        %2917 = vmatprep.subr.bf16.mxu0 0
        %2918 = vmatpush1.bf16.xpose.msra.mxu0 0
        %2919 = vmatprep.subr.bf16.mxu0 0
        %2920 = vmatpush1.bf16.xpose.msra.mxu0 0
        %2921 = vmatprep.mubr.bf16.mxu0 0
        %2922 = vmatmul.mubr.bf16.gmra.mrb[0].mxu0 %v2869
        %v2923 = vpop.f32.mrb[0].mxu0
        %v2924 = vadd.f32 0.0, %v2923
        %v2925 = vpop.f32.mrb[0].mxu0
        %v2926 = vpop.f32.mrb[0].mxu0
        %v2927 = vadd.f32 0.0, %v2926
        %v2928 = vpop.f32.mrb[0].mxu0
        %2929 = vmatprep.mubr.bf16.mxu0 0
        %2930 = vmatmul.mubr.bf16.gmra.mrb[0].mxu0 %v2872
        %v2931 = vpop.f32.mrb[0].mxu0
        %v2932 = vadd.f32 0.0, %v2931
        %v2933 = vpop.f32.mrb[0].mxu0
        %v2934 = vpop.f32.mrb[0].mxu0
        %v2935 = vadd.f32 0.0, %v2934
        %v2936 = vpop.f32.mrb[0].mxu0
        %2937 = vmatprep.mubr.bf16.mxu0 0
        %2938 = vmatmul.mubr.bf16.gmra.mrb[0].mxu0 %v2875
        %v2939 = vpop.f32.mrb[0].mxu0
        %v2940 = vadd.f32 0.0, %v2939
        %v2941 = vpop.f32.mrb[0].mxu0
        %v2942 = vpop.f32.mrb[0].mxu0
        %v2943 = vadd.f32 0.0, %v2942
        %v2944 = vpop.f32.mrb[0].mxu0
        %2945 = vmatprep.mubr.bf16.mxu0 0
        %2946 = vmatmul.mubr.bf16.gmra.mrb[0].mxu0 %v2878
        %v2947 = vpop.f32.mrb[0].mxu0
        %v2948 = vadd.f32 0.0, %v2947
        %v2949 = vpop.f32.mrb[0].mxu0
        %v2950 = vpop.f32.mrb[0].mxu0
        %v2951 = vadd.f32 0.0, %v2950
        %v2952 = vpop.f32.mrb[0].mxu0
        %2953 = vmatprep.mubr.bf16.mxu0 0
        %2954 = vmatmul.mubr.bf16.gmra.mrb[0].mxu0 %v2881
        %v2955 = vpop.f32.mrb[0].mxu0
        %v2956 = vadd.f32 0.0, %v2955
        %v2957 = vpop.f32.mrb[0].mxu0
        %v2958 = vpop.f32.mrb[0].mxu0
        %v2959 = vadd.f32 0.0, %v2958
        %v2960 = vpop.f32.mrb[0].mxu0
        %2961 = vmatprep.mubr.bf16.mxu0 0
        %2962 = vmatmul.mubr.bf16.gmra.mrb[0].mxu0 %v2884
        %v2963 = vpop.f32.mrb[0].mxu0
        %v2964 = vadd.f32 0.0, %v2963
        %v2965 = vpop.f32.mrb[0].mxu0
        %v2966 = vpop.f32.mrb[0].mxu0
        %v2967 = vpop.f32.mrb[0].mxu0
        %2968 = vdwg.mxu0
        %v2969 = vmax.f32 %v2924, -50000.0
        %v2970 = vmax.f32 %v2927, -50000.0
        %v2971 = vmax.f32 %v2932, -50000.0
        %v2972 = vmax.f32 %v2935, -50000.0
        %v2973 = vmax.f32 %v2940, -50000.0
        %v2974 = vmax.f32 %v2943, -50000.0
        %v2975 = vmax.f32 %v2948, -50000.0
        %v2976 = vmax.f32 %v2951, -50000.0
        %v2977 = vmax.f32 %v2956, -50000.0
        %v2978 = vmax.f32 %v2959, -50000.0
        %v2979 = vmax.f32 %v2964, -50000.0
        %v2980 = vmin.f32 %v2969, 50000.0
        %v2981 = vmin.f32 %v2970, 50000.0
        %v2982 = vmin.f32 %v2971, 50000.0
        %v2983 = vmin.f32 %v2972, 50000.0
        %v2984 = vmin.f32 %v2973, 50000.0
        %v2985 = vmin.f32 %v2974, 50000.0
        %v2986 = vmin.f32 %v2975, 50000.0
        %v2987 = vmin.f32 %v2976, 50000.0
        %v2988 = vmin.f32 %v2977, 50000.0
        %v2989 = vmin.f32 %v2978, 50000.0
        %v2990 = vmin.f32 %v2979, 50000.0
        %2991 = vmatprep.subr.bf16.mxu0 0
        %2992 = vmatpush1.bf16.xpose.msra.mxu0 %v2869
        %2993 = vmatprep.subr.bf16.mxu0 0
        %2994 = vmatpush1.bf16.xpose.msra.mxu0 %v2872
        %2995 = vmatprep.subr.bf16.mxu0 0
        %2996 = vmatpush1.bf16.xpose.msra.mxu0 %v2875
        %2997 = vmatprep.subr.bf16.mxu0 0
        %2998 = vmatpush1.bf16.xpose.msra.mxu0 %v2878
        %2999 = vmatprep.subr.bf16.mxu0 0
        %3000 = vmatpush1.bf16.xpose.msra.mxu0 %v2881
        %3001 = vmatprep.subr.bf16.mxu0 0
        %3002 = vmatpush1.bf16.xpose.msra.mxu0 %v2884
        %3003 = vmatprep.subr.bf16.mxu0 0
        %3004 = vmatpush1.bf16.xpose.msra.mxu0 0
        %3005 = vmatprep.subr.bf16.mxu0 0
        %3006 = vmatpush1.bf16.xpose.msra.mxu0 0
        %3007 = vmatprep.subr.bf16.mxu0 0
        %3008 = vmatpush1.bf16.xpose.msra.mxu0 0
        %3009 = vmatprep.subr.bf16.mxu0 0
        %3010 = vmatpush1.bf16.xpose.msra.mxu0 0
        %3011 = vmatprep.subr.bf16.mxu0 0
        %3012 = vmatpush1.bf16.xpose.msra.mxu0 0
        %3013 = vmatprep.subr.bf16.mxu0 0
        %3014 = vmatpush1.bf16.xpose.msra.mxu0 0
        %3015 = vmatprep.subr.bf16.mxu0 0
        %3016 = vmatpush1.bf16.xpose.msra.mxu0 0
        %3017 = vmatprep.subr.bf16.mxu0 0
        %3018 = vmatpush1.bf16.xpose.msra.mxu0 0
        %3019 = vmatprep.subr.bf16.mxu0 0
        %3020 = vmatpush1.bf16.xpose.msra.mxu0 0
        %3021 = vmatprep.subr.bf16.mxu0 0
        %3022 = vmatpush1.bf16.xpose.msra.mxu0 0
        %3023 = vmatprep.mubr.bf16.mxu0 0
        %3024 = vmatmul.mubr.bf16.gmra.mrb[0].mxu0 %v2887
        %v3025 = vpop.f32.mrb[0].mxu0
        %v3026 = vadd.f32 0.0, %v3025
        %v3027 = vpop.f32.mrb[0].mxu0
        %v3028 = vpop.f32.mrb[0].mxu0
        %v3029 = vpop.f32.mrb[0].mxu0
        %3030 = vdwg.mxu0
        %v3031 = vmax.f32 %v3026, -50000.0
        %v3032 = vmin.f32 %v3031, 50000.0
        %v3033 = vsel %vm1220, %v3032, -inf
        %3034 = vmax.xlane.f32.xlu0 %v3033
        %v3035 = vpop.xlane.xlu0 %3034
        %v3036 = vsub.f32 %v3032, %v3035
        %v3037 = vmax.f32 %v3036, -50000.0
        %v3038 = vmin.f32 %v3037, 50000.0
        %v3039 = vmul.f32 %v3038, 1.442695
        %v3040 = vpow.pop %v3039
        %v3041 = vsel %vm1220, %v3040, 0.0
        %3042 = vadd.xlane.f32.xlu0 %v3041
        %v3043 = vpop.xlane.xlu0 %3042
        %v3044 = vrcp.pop %v3043
        %v3045 = vmul.f32 1.0, %v3044
        %v3046 = vmul.f32 %v3040, %v3045
        %v3047 = vpack.c.bf16 %v3046, %v3046
        %3048 = vrot.lane.b32.xlu0 %v1047, 32
        %v3049 = vpop.permute.xlu0 %3048
        %3050 = vrot.lane.b32.xlu0 %v1048, 32
        %v3051 = vpop.permute.xlu0 %3050
        %3052 = vrot.lane.b32.xlu0 %v1049, 32
        %v3053 = vpop.permute.xlu0 %3052
        %3054 = vrot.lane.b32.xlu0 %v1050, 32
        %v3055 = vpop.permute.xlu0 %3054
        %3056 = vrot.lane.b32.xlu0 %v1051, 32
        %v3057 = vpop.permute.xlu0 %3056
        %3058 = vrot.lane.b32.xlu0 %v1052, 32
        %v3059 = vpop.permute.xlu0 %3058
        %v3066 = vsel %vm1220, %v3047, 0
        %v3069 = vsel %vm1262, %v3059, 0
        %3071 = vmatprep.subr.bf16.mxu0 0
        %3072 = vmatpush1.bf16.msra.mxu0 %v3049
        %3073 = vmatprep.subr.bf16.mxu0 0
        %3074 = vmatpush1.bf16.msra.mxu0 %v3051
        %3075 = vmatprep.subr.bf16.mxu0 0
        %3076 = vmatpush1.bf16.msra.mxu0 %v3053
        %3077 = vmatprep.subr.bf16.mxu0 0
        %3078 = vmatpush1.bf16.msra.mxu0 %v3055
        %3079 = vmatprep.subr.bf16.mxu0 0
        %3080 = vmatpush1.bf16.msra.mxu0 %v3057
        %3081 = vmatprep.subr.bf16.mxu0 0
        %3082 = vmatpush1.bf16.msra.mxu0 %v3069
        %3083 = vmatprep.subr.bf16.mxu0 0
        %3084 = vmatpush1.bf16.msra.mxu0 0
        %3085 = vmatprep.subr.bf16.mxu0 0
        %3086 = vmatpush1.bf16.msra.mxu0 0
        %3087 = vmatprep.subr.bf16.mxu0 0
        %3088 = vmatpush1.bf16.msra.mxu0 0
        %3089 = vmatprep.subr.bf16.mxu0 0
        %3090 = vmatpush1.bf16.msra.mxu0 0
        %3091 = vmatprep.subr.bf16.mxu0 0
        %3092 = vmatpush1.bf16.msra.mxu0 0
        %3093 = vmatprep.subr.bf16.mxu0 0
        %3094 = vmatpush1.bf16.msra.mxu0 0
        %3095 = vmatprep.subr.bf16.mxu0 0
        %3096 = vmatpush1.bf16.msra.mxu0 0
        %3097 = vmatprep.subr.bf16.mxu0 0
        %3098 = vmatpush1.bf16.msra.mxu0 0
        %3099 = vmatprep.subr.bf16.mxu0 0
        %3100 = vmatpush1.bf16.msra.mxu0 0
        %3101 = vmatprep.subr.bf16.mxu0 0
        %3102 = vmatpush1.bf16.msra.mxu0 0
        %3103 = vmatprep.mubr.bf16.mxu0 0
        %3104 = vmatmul.mubr.bf16.gmra.mrb[0].mxu0 %v3066
        %v3105 = vpop.f32.mrb[0].mxu0
        %v3106 = vadd.f32 0.0, %v3105
        %v3107 = vpop.f32.mrb[0].mxu0
        %v3108 = vpop.f32.mrb[0].mxu0
        %v3109 = vpop.f32.mrb[0].mxu0
        %3110 = vdwg.mxu0
        %v3111 = vadd.f32 %v2980, %v1310
        %v3112 = vadd.f32 %v2981, %v1310
        %v3113 = vadd.f32 %v2982, %v1310
        %v3114 = vadd.f32 %v2983, %v1310
        %v3115 = vadd.f32 %v2984, %v1310
        %v3116 = vadd.f32 %v2985, %v1310
        %v3117 = vadd.f32 %v2986, %v1310
        %v3118 = vadd.f32 %v2987, %v1310
        %v3119 = vadd.f32 %v2988, %v1310
        %v3120 = vadd.f32 %v2989, %v1310
        %v3121 = vadd.f32 %v2990, %v1310
        %v3122 = vsel %vm1054, %v3111, -inf
        %3123 = vmax.xlane.f32.xlu0 %v3122
        %v3124 = vpop.xlane.xlu0 %3123
        %v3125 = vsel %vm1054, %v3112, -inf
        %3126 = vmax.xlane.f32.xlu0 %v3125
        %v3127 = vpop.xlane.xlu0 %3126
        %v3128 = vsel %vm1054, %v3113, -inf
        %3129 = vmax.xlane.f32.xlu0 %v3128
        %v3130 = vpop.xlane.xlu0 %3129
        %v3131 = vsel %vm1054, %v3114, -inf
        %3132 = vmax.xlane.f32.xlu0 %v3131
        %v3133 = vpop.xlane.xlu0 %3132
        %v3134 = vsel %vm1054, %v3115, -inf
        %3135 = vmax.xlane.f32.xlu0 %v3134
        %v3136 = vpop.xlane.xlu0 %3135
        %v3137 = vsel %vm1054, %v3116, -inf
        %3138 = vmax.xlane.f32.xlu0 %v3137
        %v3139 = vpop.xlane.xlu0 %3138
        %v3140 = vsel %vm1054, %v3117, -inf
        %3141 = vmax.xlane.f32.xlu0 %v3140
        %v3142 = vpop.xlane.xlu0 %3141
        %v3143 = vsel %vm1054, %v3118, -inf
        %3144 = vmax.xlane.f32.xlu0 %v3143
        %v3145 = vpop.xlane.xlu0 %3144
        %v3146 = vsel %vm1054, %v3119, -inf
        %3147 = vmax.xlane.f32.xlu0 %v3146
        %v3148 = vpop.xlane.xlu0 %3147
        %v3149 = vsel %vm1054, %v3120, -inf
        %3150 = vmax.xlane.f32.xlu0 %v3149
        %v3151 = vpop.xlane.xlu0 %3150
        %v3152 = vsel %vm1353, %v3121, -inf
        %3153 = vmax.xlane.f32.xlu0 %v3152
        %v3154 = vpop.xlane.xlu0 %3153
        %v3155 = vsub.f32 %v3111, %v3124
        %v3156 = vsub.f32 %v3112, %v3127
        %v3157 = vsub.f32 %v3113, %v3130
        %v3158 = vsub.f32 %v3114, %v3133
        %v3159 = vsub.f32 %v3115, %v3136
        %v3160 = vsub.f32 %v3116, %v3139
        %v3161 = vsub.f32 %v3117, %v3142
        %v3162 = vsub.f32 %v3118, %v3145
        %v3163 = vsub.f32 %v3119, %v3148
        %v3164 = vsub.f32 %v3120, %v3151
        %v3165 = vsub.f32 %v3121, %v3154
        %v3166 = vmul.f32 %v3155, 1.442695
        %v3167 = vpow.pop %v3166
        %v3168 = vmul.f32 %v3156, 1.442695
        %v3169 = vpow.pop %v3168
        %v3170 = vmul.f32 %v3157, 1.442695
        %v3171 = vpow.pop %v3170
        %v3172 = vmul.f32 %v3158, 1.442695
        %v3173 = vpow.pop %v3172
        %v3174 = vmul.f32 %v3159, 1.442695
        %v3175 = vpow.pop %v3174
        %v3176 = vmul.f32 %v3160, 1.442695
        %v3177 = vpow.pop %v3176
        %v3178 = vmul.f32 %v3161, 1.442695
        %v3179 = vpow.pop %v3178
        %v3180 = vmul.f32 %v3162, 1.442695
        %v3181 = vpow.pop %v3180
        %v3182 = vmul.f32 %v3163, 1.442695
        %v3183 = vpow.pop %v3182
        %v3184 = vmul.f32 %v3164, 1.442695
        %v3185 = vpow.pop %v3184
        %v3186 = vmul.f32 %v3165, 1.442695
        %v3187 = vpow.pop %v3186
        %v3188 = vsel %vm1054, %v3167, 0.0
        %3189 = vadd.xlane.f32.xlu0 %v3188
        %v3190 = vpop.xlane.xlu0 %3189
        %v3191 = vsel %vm1054, %v3169, 0.0
        %3192 = vadd.xlane.f32.xlu0 %v3191
        %v3193 = vpop.xlane.xlu0 %3192
        %v3194 = vsel %vm1054, %v3171, 0.0
        %3195 = vadd.xlane.f32.xlu0 %v3194
        %v3196 = vpop.xlane.xlu0 %3195
        %v3197 = vsel %vm1054, %v3173, 0.0
        %3198 = vadd.xlane.f32.xlu0 %v3197
        %v3199 = vpop.xlane.xlu0 %3198
        %v3200 = vsel %vm1054, %v3175, 0.0
        %3201 = vadd.xlane.f32.xlu0 %v3200
        %v3202 = vpop.xlane.xlu0 %3201
        %v3203 = vsel %vm1054, %v3177, 0.0
        %3204 = vadd.xlane.f32.xlu0 %v3203
        %v3205 = vpop.xlane.xlu0 %3204
        %v3206 = vsel %vm1054, %v3179, 0.0
        %3207 = vadd.xlane.f32.xlu0 %v3206
        %v3208 = vpop.xlane.xlu0 %3207
        %v3209 = vsel %vm1054, %v3181, 0.0
        %3210 = vadd.xlane.f32.xlu0 %v3209
        %v3211 = vpop.xlane.xlu0 %3210
        %v3212 = vsel %vm1054, %v3183, 0.0
        %3213 = vadd.xlane.f32.xlu0 %v3212
        %v3214 = vpop.xlane.xlu0 %3213
        %v3215 = vsel %vm1054, %v3185, 0.0
        %3216 = vadd.xlane.f32.xlu0 %v3215
        %v3217 = vpop.xlane.xlu0 %3216
        %v3218 = vsel %vm1353, %v3187, 0.0
        %3219 = vadd.xlane.f32.xlu0 %v3218
        %v3220 = vpop.xlane.xlu0 %3219
        %v3221 = vrcp.pop %v3190
        %v3222 = vmul.f32 1.0, %v3221
        %v3223 = vrcp.pop %v3193
        %v3224 = vmul.f32 1.0, %v3223
        %v3225 = vrcp.pop %v3196
        %v3226 = vmul.f32 1.0, %v3225
        %v3227 = vrcp.pop %v3199
        %v3228 = vmul.f32 1.0, %v3227
        %v3229 = vrcp.pop %v3202
        %v3230 = vmul.f32 1.0, %v3229
        %v3231 = vrcp.pop %v3205
        %v3232 = vmul.f32 1.0, %v3231
        %v3233 = vrcp.pop %v3208
        %v3234 = vmul.f32 1.0, %v3233
        %v3235 = vrcp.pop %v3211
        %v3236 = vmul.f32 1.0, %v3235
        %v3237 = vrcp.pop %v3214
        %v3238 = vmul.f32 1.0, %v3237
        %v3239 = vrcp.pop %v3217
        %v3240 = vmul.f32 1.0, %v3239
        %v3241 = vrcp.pop %v3220
        %v3242 = vmul.f32 1.0, %v3241
        %v3243 = vmul.f32 %v3167, %v3222
        %v3244 = vmul.f32 %v3169, %v3224
        %v3245 = vmul.f32 %v3171, %v3226
        %v3246 = vmul.f32 %v3173, %v3228
        %v3247 = vmul.f32 %v3175, %v3230
        %v3248 = vmul.f32 %v3177, %v3232
        %v3249 = vmul.f32 %v3179, %v3234
        %v3250 = vmul.f32 %v3181, %v3236
        %v3251 = vmul.f32 %v3183, %v3238
        %v3252 = vmul.f32 %v3185, %v3240
        %v3253 = vmul.f32 %v3187, %v3242
        %v3254 = vpack.c.bf16 %v1043, %v1043
        %3255 = vrot.lane.b32.xlu0 %v1053, 32
        %v3256 = vpop.permute.xlu0 %3255
        %v3258 = vsel %vm1054, %v3256, 0
        %v3261 = vsel %vm1463, %v3254, 0
        %3263 = vmatprep.subr.bf16.mxu0 0
        %3264 = vmatpush1.bf16.msra.mxu0 %v3261
        %3265 = vmatprep.subr.bf16.mxu0 0
        %3266 = vmatpush1.bf16.msra.mxu0 0
        %3267 = vmatprep.subr.bf16.mxu0 0
        %3268 = vmatpush1.bf16.msra.mxu0 0
        %3269 = vmatprep.subr.bf16.mxu0 0
        %3270 = vmatpush1.bf16.msra.mxu0 0
        %3271 = vmatprep.subr.bf16.mxu0 0
        %3272 = vmatpush1.bf16.msra.mxu0 0
        %3273 = vmatprep.subr.bf16.mxu0 0
        %3274 = vmatpush1.bf16.msra.mxu0 0
        %3275 = vmatprep.subr.bf16.mxu0 0
        %3276 = vmatpush1.bf16.msra.mxu0 0
        %3277 = vmatprep.subr.bf16.mxu0 0
        %3278 = vmatpush1.bf16.msra.mxu0 0
        %3279 = vmatprep.subr.bf16.mxu0 0
        %3280 = vmatpush1.bf16.msra.mxu0 0
        %3281 = vmatprep.subr.bf16.mxu0 0
        %3282 = vmatpush1.bf16.msra.mxu0 0
        %3283 = vmatprep.subr.bf16.mxu0 0
        %3284 = vmatpush1.bf16.msra.mxu0 0
        %3285 = vmatprep.subr.bf16.mxu0 0
        %3286 = vmatpush1.bf16.msra.mxu0 0
        %3287 = vmatprep.subr.bf16.mxu0 0
        %3288 = vmatpush1.bf16.msra.mxu0 0
        %3289 = vmatprep.subr.bf16.mxu0 0
        %3290 = vmatpush1.bf16.msra.mxu0 0
        %3291 = vmatprep.subr.bf16.mxu0 0
        %3292 = vmatpush1.bf16.msra.mxu0 0
        %3293 = vmatprep.subr.bf16.mxu0 0
        %3294 = vmatpush1.bf16.msra.mxu0 0
        %3295 = vmatprep.mubr.bf16.mxu0 0
        %3296 = vmatmul.mubr.bf16.gmra.mrb[0].mxu0 %v3258
        %v3297 = vpop.f32.mrb[0].mxu0
        %v3298 = vadd.f32 0.0, %v3297
        %v3299 = vpop.f32.mrb[0].mxu0
        %v3300 = vpop.f32.mrb[0].mxu0
        %v3301 = vpop.f32.mrb[0].mxu0
        %3302 = vdwg.mxu0
        %3303 = vrot.lane.b32.xlu0 %v1047, 88
        %v3304 = vpop.permute.xlu0 %3303
        %3305 = vrot.lane.b32.xlu0 %v1048, 88
        %v3306 = vpop.permute.xlu0 %3305
        %3307 = vrot.lane.b32.xlu0 %v1049, 88
        %v3308 = vpop.permute.xlu0 %3307
        %3309 = vrot.lane.b32.xlu0 %v1050, 88
        %v3310 = vpop.permute.xlu0 %3309
        %3311 = vrot.lane.b32.xlu0 %v1051, 88
        %v3312 = vpop.permute.xlu0 %3311
        %3313 = vrot.lane.b32.xlu0 %v1052, 88
        %v3314 = vpop.permute.xlu0 %3313
        %3315 = vrot.lane.b32.xlu0 %v1053, 88
        %v3316 = vpop.permute.xlu0 %3315
        %v3318 = vsel %vm1054, %v3304, 0
        %v3321 = vsel %vm1054, %v3306, 0
        %v3324 = vsel %vm1054, %v3308, 0
        %v3327 = vsel %vm1054, %v3310, 0
        %v3330 = vsel %vm1054, %v3312, 0
        %v3333 = vsel %vm1054, %v3314, 0
        %v3336 = vsel %vm1054, %v3316, 0
        %3338 = vmatprep.subr.bf16.mxu0 0
        %3339 = vmatpush1.bf16.xpose.msra.mxu0 %v3336
        %3340 = vmatprep.subr.bf16.mxu0 0
        %3341 = vmatpush1.bf16.xpose.msra.mxu0 0
        %3342 = vmatprep.subr.bf16.mxu0 0
        %3343 = vmatpush1.bf16.xpose.msra.mxu0 0
        %3344 = vmatprep.subr.bf16.mxu0 0
        %3345 = vmatpush1.bf16.xpose.msra.mxu0 0
        %3346 = vmatprep.subr.bf16.mxu0 0
        %3347 = vmatpush1.bf16.xpose.msra.mxu0 0
        %3348 = vmatprep.subr.bf16.mxu0 0
        %3349 = vmatpush1.bf16.xpose.msra.mxu0 0
        %3350 = vmatprep.subr.bf16.mxu0 0
        %3351 = vmatpush1.bf16.xpose.msra.mxu0 0
        %3352 = vmatprep.subr.bf16.mxu0 0
        %3353 = vmatpush1.bf16.xpose.msra.mxu0 0
        %3354 = vmatprep.subr.bf16.mxu0 0
        %3355 = vmatpush1.bf16.xpose.msra.mxu0 0
        %3356 = vmatprep.subr.bf16.mxu0 0
        %3357 = vmatpush1.bf16.xpose.msra.mxu0 0
        %3358 = vmatprep.subr.bf16.mxu0 0
        %3359 = vmatpush1.bf16.xpose.msra.mxu0 0
        %3360 = vmatprep.subr.bf16.mxu0 0
        %3361 = vmatpush1.bf16.xpose.msra.mxu0 0
        %3362 = vmatprep.subr.bf16.mxu0 0
        %3363 = vmatpush1.bf16.xpose.msra.mxu0 0
        %3364 = vmatprep.subr.bf16.mxu0 0
        %3365 = vmatpush1.bf16.xpose.msra.mxu0 0
        %3366 = vmatprep.subr.bf16.mxu0 0
        %3367 = vmatpush1.bf16.xpose.msra.mxu0 0
        %3368 = vmatprep.subr.bf16.mxu0 0
        %3369 = vmatpush1.bf16.xpose.msra.mxu0 0
        %3370 = vmatprep.mubr.bf16.mxu0 0
        %3371 = vmatmul.mubr.bf16.gmra.mrb[0].mxu0 %v3318
        %v3372 = vpop.f32.mrb[0].mxu0
        %v3373 = vadd.f32 0.0, %v3372
        %v3374 = vpop.f32.mrb[0].mxu0
        %v3375 = vpop.f32.mrb[0].mxu0
        %v3376 = vadd.f32 0.0, %v3375
        %v3377 = vpop.f32.mrb[0].mxu0
        %3378 = vmatprep.mubr.bf16.mxu0 0
        %3379 = vmatmul.mubr.bf16.gmra.mrb[0].mxu0 %v3321
        %v3380 = vpop.f32.mrb[0].mxu0
        %v3381 = vadd.f32 0.0, %v3380
        %v3382 = vpop.f32.mrb[0].mxu0
        %v3383 = vpop.f32.mrb[0].mxu0
        %v3384 = vadd.f32 0.0, %v3383
        %v3385 = vpop.f32.mrb[0].mxu0
        %3386 = vmatprep.mubr.bf16.mxu0 0
        %3387 = vmatmul.mubr.bf16.gmra.mrb[0].mxu0 %v3324
        %v3388 = vpop.f32.mrb[0].mxu0
        %v3389 = vadd.f32 0.0, %v3388
        %v3390 = vpop.f32.mrb[0].mxu0
        %v3391 = vpop.f32.mrb[0].mxu0
        %v3392 = vadd.f32 0.0, %v3391
        %v3393 = vpop.f32.mrb[0].mxu0
        %3394 = vmatprep.mubr.bf16.mxu0 0
        %3395 = vmatmul.mubr.bf16.gmra.mrb[0].mxu0 %v3327
        %v3396 = vpop.f32.mrb[0].mxu0
        %v3397 = vadd.f32 0.0, %v3396
        %v3398 = vpop.f32.mrb[0].mxu0
        %v3399 = vpop.f32.mrb[0].mxu0
        %v3400 = vadd.f32 0.0, %v3399
        %v3401 = vpop.f32.mrb[0].mxu0
        %3402 = vmatprep.mubr.bf16.mxu0 0
        %3403 = vmatmul.mubr.bf16.gmra.mrb[0].mxu0 %v3330
        %v3404 = vpop.f32.mrb[0].mxu0
        %v3405 = vadd.f32 0.0, %v3404
        %v3406 = vpop.f32.mrb[0].mxu0
        %v3407 = vpop.f32.mrb[0].mxu0
        %v3408 = vadd.f32 0.0, %v3407
        %v3409 = vpop.f32.mrb[0].mxu0
        %3410 = vmatprep.mubr.bf16.mxu0 0
        %3411 = vmatmul.mubr.bf16.gmra.mrb[0].mxu0 %v3333
        %v3412 = vpop.f32.mrb[0].mxu0
        %v3413 = vadd.f32 0.0, %v3412
        %v3414 = vpop.f32.mrb[0].mxu0
        %v3415 = vpop.f32.mrb[0].mxu0
        %v3416 = vpop.f32.mrb[0].mxu0
        %3417 = vdwg.mxu0
        %v3418 = vmax.f32 %v3373, -50000.0
        %v3419 = vmax.f32 %v3376, -50000.0
        %v3420 = vmax.f32 %v3381, -50000.0
        %v3421 = vmax.f32 %v3384, -50000.0
        %v3422 = vmax.f32 %v3389, -50000.0
        %v3423 = vmax.f32 %v3392, -50000.0
        %v3424 = vmax.f32 %v3397, -50000.0
        %v3425 = vmax.f32 %v3400, -50000.0
        %v3426 = vmax.f32 %v3405, -50000.0
        %v3427 = vmax.f32 %v3408, -50000.0
        %v3428 = vmax.f32 %v3413, -50000.0
        %v3429 = vmin.f32 %v3418, 50000.0
        %v3430 = vmin.f32 %v3419, 50000.0
        %v3431 = vmin.f32 %v3420, 50000.0
        %v3432 = vmin.f32 %v3421, 50000.0
        %v3433 = vmin.f32 %v3422, 50000.0
        %v3434 = vmin.f32 %v3423, 50000.0
        %v3435 = vmin.f32 %v3424, 50000.0
        %v3436 = vmin.f32 %v3425, 50000.0
        %v3437 = vmin.f32 %v3426, 50000.0
        %v3438 = vmin.f32 %v3427, 50000.0
        %v3439 = vmin.f32 %v3428, 50000.0
        %3440 = vmatprep.subr.bf16.mxu0 0
        %3441 = vmatpush1.bf16.xpose.msra.mxu0 %v3318
        %3442 = vmatprep.subr.bf16.mxu0 0
        %3443 = vmatpush1.bf16.xpose.msra.mxu0 %v3321
        %3444 = vmatprep.subr.bf16.mxu0 0
        %3445 = vmatpush1.bf16.xpose.msra.mxu0 %v3324
        %3446 = vmatprep.subr.bf16.mxu0 0
        %3447 = vmatpush1.bf16.xpose.msra.mxu0 %v3327
        %3448 = vmatprep.subr.bf16.mxu0 0
        %3449 = vmatpush1.bf16.xpose.msra.mxu0 %v3330
        %3450 = vmatprep.subr.bf16.mxu0 0
        %3451 = vmatpush1.bf16.xpose.msra.mxu0 %v3333
        %3452 = vmatprep.subr.bf16.mxu0 0
        %3453 = vmatpush1.bf16.xpose.msra.mxu0 0
        %3454 = vmatprep.subr.bf16.mxu0 0
        %3455 = vmatpush1.bf16.xpose.msra.mxu0 0
        %3456 = vmatprep.subr.bf16.mxu0 0
        %3457 = vmatpush1.bf16.xpose.msra.mxu0 0
        %3458 = vmatprep.subr.bf16.mxu0 0
        %3459 = vmatpush1.bf16.xpose.msra.mxu0 0
        %3460 = vmatprep.subr.bf16.mxu0 0
        %3461 = vmatpush1.bf16.xpose.msra.mxu0 0
        %3462 = vmatprep.subr.bf16.mxu0 0
        %3463 = vmatpush1.bf16.xpose.msra.mxu0 0
        %3464 = vmatprep.subr.bf16.mxu0 0
        %3465 = vmatpush1.bf16.xpose.msra.mxu0 0
        %3466 = vmatprep.subr.bf16.mxu0 0
        %3467 = vmatpush1.bf16.xpose.msra.mxu0 0
        %3468 = vmatprep.subr.bf16.mxu0 0
        %3469 = vmatpush1.bf16.xpose.msra.mxu0 0
        %3470 = vmatprep.subr.bf16.mxu0 0
        %3471 = vmatpush1.bf16.xpose.msra.mxu0 0
        %3472 = vmatprep.mubr.bf16.mxu0 0
        %3473 = vmatmul.mubr.bf16.gmra.mrb[0].mxu0 %v3336
        %v3474 = vpop.f32.mrb[0].mxu0
        %v3475 = vadd.f32 0.0, %v3474
        %v3476 = vpop.f32.mrb[0].mxu0
        %v3477 = vpop.f32.mrb[0].mxu0
        %v3478 = vpop.f32.mrb[0].mxu0
        %3479 = vdwg.mxu0
        %v3480 = vmax.f32 %v3475, -50000.0
        %v3481 = vmin.f32 %v3480, 50000.0
        %v3482 = vsel %vm1220, %v3481, -inf
        %3483 = vmax.xlane.f32.xlu0 %v3482
        %v3484 = vpop.xlane.xlu0 %3483
        %v3485 = vsub.f32 %v3481, %v3484
        %v3486 = vmax.f32 %v3485, -50000.0
        %v3487 = vmin.f32 %v3486, 50000.0
        %v3488 = vmul.f32 %v3487, 1.442695
        %v3489 = vpow.pop %v3488
        %v3490 = vsel %vm1220, %v3489, 0.0
        %3491 = vadd.xlane.f32.xlu0 %v3490
        %v3492 = vpop.xlane.xlu0 %3491
        %v3493 = vrcp.pop %v3492
        %v3494 = vmul.f32 1.0, %v3493
        %v3495 = vmul.f32 %v3489, %v3494
        %v3496 = vpack.c.bf16 %v3495, %v3495
        %3497 = vrot.lane.b32.xlu0 %v1047, 24
        %v3498 = vpop.permute.xlu0 %3497
        %3499 = vrot.lane.b32.xlu0 %v1048, 24
        %v3500 = vpop.permute.xlu0 %3499
        %3501 = vrot.lane.b32.xlu0 %v1049, 24
        %v3502 = vpop.permute.xlu0 %3501
        %3503 = vrot.lane.b32.xlu0 %v1050, 24
        %v3504 = vpop.permute.xlu0 %3503
        %3505 = vrot.lane.b32.xlu0 %v1051, 24
        %v3506 = vpop.permute.xlu0 %3505
        %3507 = vrot.lane.b32.xlu0 %v1052, 24
        %v3508 = vpop.permute.xlu0 %3507
        %v3515 = vsel %vm1220, %v3496, 0
        %v3518 = vsel %vm1262, %v3508, 0
        %3520 = vmatprep.subr.bf16.mxu0 0
        %3521 = vmatpush1.bf16.msra.mxu0 %v3498
        %3522 = vmatprep.subr.bf16.mxu0 0
        %3523 = vmatpush1.bf16.msra.mxu0 %v3500
        %3524 = vmatprep.subr.bf16.mxu0 0
        %3525 = vmatpush1.bf16.msra.mxu0 %v3502
        %3526 = vmatprep.subr.bf16.mxu0 0
        %3527 = vmatpush1.bf16.msra.mxu0 %v3504
        %3528 = vmatprep.subr.bf16.mxu0 0
        %3529 = vmatpush1.bf16.msra.mxu0 %v3506
        %3530 = vmatprep.subr.bf16.mxu0 0
        %3531 = vmatpush1.bf16.msra.mxu0 %v3518
        %3532 = vmatprep.subr.bf16.mxu0 0
        %3533 = vmatpush1.bf16.msra.mxu0 0
        %3534 = vmatprep.subr.bf16.mxu0 0
        %3535 = vmatpush1.bf16.msra.mxu0 0
        %3536 = vmatprep.subr.bf16.mxu0 0
        %3537 = vmatpush1.bf16.msra.mxu0 0
        %3538 = vmatprep.subr.bf16.mxu0 0
        %3539 = vmatpush1.bf16.msra.mxu0 0
        %3540 = vmatprep.subr.bf16.mxu0 0
        %3541 = vmatpush1.bf16.msra.mxu0 0
        %3542 = vmatprep.subr.bf16.mxu0 0
        %3543 = vmatpush1.bf16.msra.mxu0 0
        %3544 = vmatprep.subr.bf16.mxu0 0
        %3545 = vmatpush1.bf16.msra.mxu0 0
        %3546 = vmatprep.subr.bf16.mxu0 0
        %3547 = vmatpush1.bf16.msra.mxu0 0
        %3548 = vmatprep.subr.bf16.mxu0 0
        %3549 = vmatpush1.bf16.msra.mxu0 0
        %3550 = vmatprep.subr.bf16.mxu0 0
        %3551 = vmatpush1.bf16.msra.mxu0 0
        %3552 = vmatprep.mubr.bf16.mxu0 0
        %3553 = vmatmul.mubr.bf16.gmra.mrb[0].mxu0 %v3515
        %v3554 = vpop.f32.mrb[0].mxu0
        %v3555 = vadd.f32 0.0, %v3554
        %v3556 = vpop.f32.mrb[0].mxu0
        %v3557 = vpop.f32.mrb[0].mxu0
        %v3558 = vpop.f32.mrb[0].mxu0
        %3559 = vdwg.mxu0
        %v3560 = vadd.f32 %v3429, %v1310
        %v3561 = vadd.f32 %v3430, %v1310
        %v3562 = vadd.f32 %v3431, %v1310
        %v3563 = vadd.f32 %v3432, %v1310
        %v3564 = vadd.f32 %v3433, %v1310
        %v3565 = vadd.f32 %v3434, %v1310
        %v3566 = vadd.f32 %v3435, %v1310
        %v3567 = vadd.f32 %v3436, %v1310
        %v3568 = vadd.f32 %v3437, %v1310
        %v3569 = vadd.f32 %v3438, %v1310
        %v3570 = vadd.f32 %v3439, %v1310
        %v3571 = vsel %vm1054, %v3560, -inf
        %3572 = vmax.xlane.f32.xlu0 %v3571
        %v3573 = vpop.xlane.xlu0 %3572
        %v3574 = vsel %vm1054, %v3561, -inf
        %3575 = vmax.xlane.f32.xlu0 %v3574
        %v3576 = vpop.xlane.xlu0 %3575
        %v3577 = vsel %vm1054, %v3562, -inf
        %3578 = vmax.xlane.f32.xlu0 %v3577
        %v3579 = vpop.xlane.xlu0 %3578
        %v3580 = vsel %vm1054, %v3563, -inf
        %3581 = vmax.xlane.f32.xlu0 %v3580
        %v3582 = vpop.xlane.xlu0 %3581
        %v3583 = vsel %vm1054, %v3564, -inf
        %3584 = vmax.xlane.f32.xlu0 %v3583
        %v3585 = vpop.xlane.xlu0 %3584
        %v3586 = vsel %vm1054, %v3565, -inf
        %3587 = vmax.xlane.f32.xlu0 %v3586
        %v3588 = vpop.xlane.xlu0 %3587
        %v3589 = vsel %vm1054, %v3566, -inf
        %3590 = vmax.xlane.f32.xlu0 %v3589
        %v3591 = vpop.xlane.xlu0 %3590
        %v3592 = vsel %vm1054, %v3567, -inf
        %3593 = vmax.xlane.f32.xlu0 %v3592
        %v3594 = vpop.xlane.xlu0 %3593
        %v3595 = vsel %vm1054, %v3568, -inf
        %3596 = vmax.xlane.f32.xlu0 %v3595
        %v3597 = vpop.xlane.xlu0 %3596
        %v3598 = vsel %vm1054, %v3569, -inf
        %3599 = vmax.xlane.f32.xlu0 %v3598
        %v3600 = vpop.xlane.xlu0 %3599
        %v3601 = vsel %vm1353, %v3570, -inf
        %3602 = vmax.xlane.f32.xlu0 %v3601
        %v3603 = vpop.xlane.xlu0 %3602
        %v3604 = vsub.f32 %v3560, %v3573
        %v3605 = vsub.f32 %v3561, %v3576
        %v3606 = vsub.f32 %v3562, %v3579
        %v3607 = vsub.f32 %v3563, %v3582
        %v3608 = vsub.f32 %v3564, %v3585
        %v3609 = vsub.f32 %v3565, %v3588
        %v3610 = vsub.f32 %v3566, %v3591
        %v3611 = vsub.f32 %v3567, %v3594
        %v3612 = vsub.f32 %v3568, %v3597
        %v3613 = vsub.f32 %v3569, %v3600
        %v3614 = vsub.f32 %v3570, %v3603
        %v3615 = vmul.f32 %v3604, 1.442695
        %v3616 = vpow.pop %v3615
        %v3617 = vmul.f32 %v3605, 1.442695
        %v3618 = vpow.pop %v3617
        %v3619 = vmul.f32 %v3606, 1.442695
        %v3620 = vpow.pop %v3619
        %v3621 = vmul.f32 %v3607, 1.442695
        %v3622 = vpow.pop %v3621
        %v3623 = vmul.f32 %v3608, 1.442695
        %v3624 = vpow.pop %v3623
        %v3625 = vmul.f32 %v3609, 1.442695
        %v3626 = vpow.pop %v3625
        %v3627 = vmul.f32 %v3610, 1.442695
        %v3628 = vpow.pop %v3627
        %v3629 = vmul.f32 %v3611, 1.442695
        %v3630 = vpow.pop %v3629
        %v3631 = vmul.f32 %v3612, 1.442695
        %v3632 = vpow.pop %v3631
        %v3633 = vmul.f32 %v3613, 1.442695
        %v3634 = vpow.pop %v3633
        %v3635 = vmul.f32 %v3614, 1.442695
        %v3636 = vpow.pop %v3635
        %v3637 = vsel %vm1054, %v3616, 0.0
        %3638 = vadd.xlane.f32.xlu0 %v3637
        %v3639 = vpop.xlane.xlu0 %3638
        %v3640 = vsel %vm1054, %v3618, 0.0
        %3641 = vadd.xlane.f32.xlu0 %v3640
        %v3642 = vpop.xlane.xlu0 %3641
        %v3643 = vsel %vm1054, %v3620, 0.0
        %3644 = vadd.xlane.f32.xlu0 %v3643
        %v3645 = vpop.xlane.xlu0 %3644
        %v3646 = vsel %vm1054, %v3622, 0.0
        %3647 = vadd.xlane.f32.xlu0 %v3646
        %v3648 = vpop.xlane.xlu0 %3647
        %v3649 = vsel %vm1054, %v3624, 0.0
        %3650 = vadd.xlane.f32.xlu0 %v3649
        %v3651 = vpop.xlane.xlu0 %3650
        %v3652 = vsel %vm1054, %v3626, 0.0
        %3653 = vadd.xlane.f32.xlu0 %v3652
        %v3654 = vpop.xlane.xlu0 %3653
        %v3655 = vsel %vm1054, %v3628, 0.0
        %3656 = vadd.xlane.f32.xlu0 %v3655
        %v3657 = vpop.xlane.xlu0 %3656
        %v3658 = vsel %vm1054, %v3630, 0.0
        %3659 = vadd.xlane.f32.xlu0 %v3658
        %v3660 = vpop.xlane.xlu0 %3659
        %v3661 = vsel %vm1054, %v3632, 0.0
        %3662 = vadd.xlane.f32.xlu0 %v3661
        %v3663 = vpop.xlane.xlu0 %3662
        %v3664 = vsel %vm1054, %v3634, 0.0
        %3665 = vadd.xlane.f32.xlu0 %v3664
        %v3666 = vpop.xlane.xlu0 %3665
        %v3667 = vsel %vm1353, %v3636, 0.0
        %3668 = vadd.xlane.f32.xlu0 %v3667
        %v3669 = vpop.xlane.xlu0 %3668
        %v3670 = vrcp.pop %v3639
        %v3671 = vmul.f32 1.0, %v3670
        %v3672 = vrcp.pop %v3642
        %v3673 = vmul.f32 1.0, %v3672
        %v3674 = vrcp.pop %v3645
        %v3675 = vmul.f32 1.0, %v3674
        %v3676 = vrcp.pop %v3648
        %v3677 = vmul.f32 1.0, %v3676
        %v3678 = vrcp.pop %v3651
        %v3679 = vmul.f32 1.0, %v3678
        %v3680 = vrcp.pop %v3654
        %v3681 = vmul.f32 1.0, %v3680
        %v3682 = vrcp.pop %v3657
        %v3683 = vmul.f32 1.0, %v3682
        %v3684 = vrcp.pop %v3660
        %v3685 = vmul.f32 1.0, %v3684
        %v3686 = vrcp.pop %v3663
        %v3687 = vmul.f32 1.0, %v3686
        %v3688 = vrcp.pop %v3666
        %v3689 = vmul.f32 1.0, %v3688
        %v3690 = vrcp.pop %v3669
        %v3691 = vmul.f32 1.0, %v3690
        %v3692 = vmul.f32 %v3616, %v3671
        %v3693 = vmul.f32 %v3618, %v3673
        %v3694 = vmul.f32 %v3620, %v3675
        %v3695 = vmul.f32 %v3622, %v3677
        %v3696 = vmul.f32 %v3624, %v3679
        %v3697 = vmul.f32 %v3626, %v3681
        %v3698 = vmul.f32 %v3628, %v3683
        %v3699 = vmul.f32 %v3630, %v3685
        %v3700 = vmul.f32 %v3632, %v3687
        %v3701 = vmul.f32 %v3634, %v3689
        %v3702 = vmul.f32 %v3636, %v3691
        %v3703 = vpack.c.bf16 %v1044, %v1044
        %3704 = vrot.lane.b32.xlu0 %v1053, 24
        %v3705 = vpop.permute.xlu0 %3704
        %v3707 = vsel %vm1054, %v3705, 0
        %v3710 = vsel %vm1463, %v3703, 0
        %3712 = vmatprep.subr.bf16.mxu0 0
        %3713 = vmatpush1.bf16.msra.mxu0 %v3710
        %3714 = vmatprep.subr.bf16.mxu0 0
        %3715 = vmatpush1.bf16.msra.mxu0 0
        %3716 = vmatprep.subr.bf16.mxu0 0
        %3717 = vmatpush1.bf16.msra.mxu0 0
        %3718 = vmatprep.subr.bf16.mxu0 0
        %3719 = vmatpush1.bf16.msra.mxu0 0
        %3720 = vmatprep.subr.bf16.mxu0 0
        %3721 = vmatpush1.bf16.msra.mxu0 0
        %3722 = vmatprep.subr.bf16.mxu0 0
        %3723 = vmatpush1.bf16.msra.mxu0 0
        %3724 = vmatprep.subr.bf16.mxu0 0
        %3725 = vmatpush1.bf16.msra.mxu0 0
        %3726 = vmatprep.subr.bf16.mxu0 0
        %3727 = vmatpush1.bf16.msra.mxu0 0
        %3728 = vmatprep.subr.bf16.mxu0 0
        %3729 = vmatpush1.bf16.msra.mxu0 0
        %3730 = vmatprep.subr.bf16.mxu0 0
        %3731 = vmatpush1.bf16.msra.mxu0 0
        %3732 = vmatprep.subr.bf16.mxu0 0
        %3733 = vmatpush1.bf16.msra.mxu0 0
        %3734 = vmatprep.subr.bf16.mxu0 0
        %3735 = vmatpush1.bf16.msra.mxu0 0
        %3736 = vmatprep.subr.bf16.mxu0 0
        %3737 = vmatpush1.bf16.msra.mxu0 0
        %3738 = vmatprep.subr.bf16.mxu0 0
        %3739 = vmatpush1.bf16.msra.mxu0 0
        %3740 = vmatprep.subr.bf16.mxu0 0
        %3741 = vmatpush1.bf16.msra.mxu0 0
        %3742 = vmatprep.subr.bf16.mxu0 0
        %3743 = vmatpush1.bf16.msra.mxu0 0
        %3744 = vmatprep.mubr.bf16.mxu0 0
        %3745 = vmatmul.mubr.bf16.gmra.mrb[0].mxu0 %v3707
        %v3746 = vpop.f32.mrb[0].mxu0
        %v3747 = vadd.f32 0.0, %v3746
        %v3748 = vpop.f32.mrb[0].mxu0
        %v3749 = vpop.f32.mrb[0].mxu0
        %v3750 = vpop.f32.mrb[0].mxu0
        %3751 = vdwg.mxu0
        %3752 = vrot.lane.b32.xlu0 %v1047, 80
        %v3753 = vpop.permute.xlu0 %3752
        %3754 = vrot.lane.b32.xlu0 %v1048, 80
        %v3755 = vpop.permute.xlu0 %3754
        %3756 = vrot.lane.b32.xlu0 %v1049, 80
        %v3757 = vpop.permute.xlu0 %3756
        %3758 = vrot.lane.b32.xlu0 %v1050, 80
        %v3759 = vpop.permute.xlu0 %3758
        %3760 = vrot.lane.b32.xlu0 %v1051, 80
        %v3761 = vpop.permute.xlu0 %3760
        %3762 = vrot.lane.b32.xlu0 %v1052, 80
        %v3763 = vpop.permute.xlu0 %3762
        %3764 = vrot.lane.b32.xlu0 %v1053, 80
        %v3765 = vpop.permute.xlu0 %3764
        %v3767 = vsel %vm1054, %v3753, 0
        %v3770 = vsel %vm1054, %v3755, 0
        %v3773 = vsel %vm1054, %v3757, 0
        %v3776 = vsel %vm1054, %v3759, 0
        %v3779 = vsel %vm1054, %v3761, 0
        %v3782 = vsel %vm1054, %v3763, 0
        %v3785 = vsel %vm1054, %v3765, 0
        %3787 = vmatprep.subr.bf16.mxu0 0
        %3788 = vmatpush1.bf16.xpose.msra.mxu0 %v3785
        %3789 = vmatprep.subr.bf16.mxu0 0
        %3790 = vmatpush1.bf16.xpose.msra.mxu0 0
        %3791 = vmatprep.subr.bf16.mxu0 0
        %3792 = vmatpush1.bf16.xpose.msra.mxu0 0
        %3793 = vmatprep.subr.bf16.mxu0 0
        %3794 = vmatpush1.bf16.xpose.msra.mxu0 0
        %3795 = vmatprep.subr.bf16.mxu0 0
        %3796 = vmatpush1.bf16.xpose.msra.mxu0 0
        %3797 = vmatprep.subr.bf16.mxu0 0
        %3798 = vmatpush1.bf16.xpose.msra.mxu0 0
        %3799 = vmatprep.subr.bf16.mxu0 0
        %3800 = vmatpush1.bf16.xpose.msra.mxu0 0
        %3801 = vmatprep.subr.bf16.mxu0 0
        %3802 = vmatpush1.bf16.xpose.msra.mxu0 0
        %3803 = vmatprep.subr.bf16.mxu0 0
        %3804 = vmatpush1.bf16.xpose.msra.mxu0 0
        %3805 = vmatprep.subr.bf16.mxu0 0
        %3806 = vmatpush1.bf16.xpose.msra.mxu0 0
        %3807 = vmatprep.subr.bf16.mxu0 0
        %3808 = vmatpush1.bf16.xpose.msra.mxu0 0
        %3809 = vmatprep.subr.bf16.mxu0 0
        %3810 = vmatpush1.bf16.xpose.msra.mxu0 0
        %3811 = vmatprep.subr.bf16.mxu0 0
        %3812 = vmatpush1.bf16.xpose.msra.mxu0 0
        %3813 = vmatprep.subr.bf16.mxu0 0
        %3814 = vmatpush1.bf16.xpose.msra.mxu0 0
        %3815 = vmatprep.subr.bf16.mxu0 0
        %3816 = vmatpush1.bf16.xpose.msra.mxu0 0
        %3817 = vmatprep.subr.bf16.mxu0 0
        %3818 = vmatpush1.bf16.xpose.msra.mxu0 0
        %3819 = vmatprep.mubr.bf16.mxu0 0
        %3820 = vmatmul.mubr.bf16.gmra.mrb[0].mxu0 %v3767
        %v3821 = vpop.f32.mrb[0].mxu0
        %v3822 = vadd.f32 0.0, %v3821
        %v3823 = vpop.f32.mrb[0].mxu0
        %v3824 = vpop.f32.mrb[0].mxu0
        %v3825 = vadd.f32 0.0, %v3824
        %v3826 = vpop.f32.mrb[0].mxu0
        %3827 = vmatprep.mubr.bf16.mxu0 0
        %3828 = vmatmul.mubr.bf16.gmra.mrb[0].mxu0 %v3770
        %v3829 = vpop.f32.mrb[0].mxu0
        %v3830 = vadd.f32 0.0, %v3829
        %v3831 = vpop.f32.mrb[0].mxu0
        %v3832 = vpop.f32.mrb[0].mxu0
        %v3833 = vadd.f32 0.0, %v3832
        %v3834 = vpop.f32.mrb[0].mxu0
        %3835 = vmatprep.mubr.bf16.mxu0 0
        %3836 = vmatmul.mubr.bf16.gmra.mrb[0].mxu0 %v3773
        %v3837 = vpop.f32.mrb[0].mxu0
        %v3838 = vadd.f32 0.0, %v3837
        %v3839 = vpop.f32.mrb[0].mxu0
        %v3840 = vpop.f32.mrb[0].mxu0
        %v3841 = vadd.f32 0.0, %v3840
        %v3842 = vpop.f32.mrb[0].mxu0
        %3843 = vmatprep.mubr.bf16.mxu0 0
        %3844 = vmatmul.mubr.bf16.gmra.mrb[0].mxu0 %v3776
        %v3845 = vpop.f32.mrb[0].mxu0
        %v3846 = vadd.f32 0.0, %v3845
        %v3847 = vpop.f32.mrb[0].mxu0
        %v3848 = vpop.f32.mrb[0].mxu0
        %v3849 = vadd.f32 0.0, %v3848
        %v3850 = vpop.f32.mrb[0].mxu0
        %3851 = vmatprep.mubr.bf16.mxu0 0
        %3852 = vmatmul.mubr.bf16.gmra.mrb[0].mxu0 %v3779
        %v3853 = vpop.f32.mrb[0].mxu0
        %v3854 = vadd.f32 0.0, %v3853
        %v3855 = vpop.f32.mrb[0].mxu0
        %v3856 = vpop.f32.mrb[0].mxu0
        %v3857 = vadd.f32 0.0, %v3856
        %v3858 = vpop.f32.mrb[0].mxu0
        %3859 = vmatprep.mubr.bf16.mxu0 0
        %3860 = vmatmul.mubr.bf16.gmra.mrb[0].mxu0 %v3782
        %v3861 = vpop.f32.mrb[0].mxu0
        %v3862 = vadd.f32 0.0, %v3861
        %v3863 = vpop.f32.mrb[0].mxu0
        %v3864 = vpop.f32.mrb[0].mxu0
        %v3865 = vpop.f32.mrb[0].mxu0
        %3866 = vdwg.mxu0
        %v3867 = vmax.f32 %v3822, -50000.0
        %v3868 = vmax.f32 %v3825, -50000.0
        %v3869 = vmax.f32 %v3830, -50000.0
        %v3870 = vmax.f32 %v3833, -50000.0
        %v3871 = vmax.f32 %v3838, -50000.0
        %v3872 = vmax.f32 %v3841, -50000.0
        %v3873 = vmax.f32 %v3846, -50000.0
        %v3874 = vmax.f32 %v3849, -50000.0
        %v3875 = vmax.f32 %v3854, -50000.0
        %v3876 = vmax.f32 %v3857, -50000.0
        %v3877 = vmax.f32 %v3862, -50000.0
        %v3878 = vmin.f32 %v3867, 50000.0
        %v3879 = vmin.f32 %v3868, 50000.0
        %v3880 = vmin.f32 %v3869, 50000.0
        %v3881 = vmin.f32 %v3870, 50000.0
        %v3882 = vmin.f32 %v3871, 50000.0
        %v3883 = vmin.f32 %v3872, 50000.0
        %v3884 = vmin.f32 %v3873, 50000.0
        %v3885 = vmin.f32 %v3874, 50000.0
        %v3886 = vmin.f32 %v3875, 50000.0
        %v3887 = vmin.f32 %v3876, 50000.0
        %v3888 = vmin.f32 %v3877, 50000.0
        %3889 = vmatprep.subr.bf16.mxu0 0
        %3890 = vmatpush1.bf16.xpose.msra.mxu0 %v3767
        %3891 = vmatprep.subr.bf16.mxu0 0
        %3892 = vmatpush1.bf16.xpose.msra.mxu0 %v3770
        %3893 = vmatprep.subr.bf16.mxu0 0
        %3894 = vmatpush1.bf16.xpose.msra.mxu0 %v3773
        %3895 = vmatprep.subr.bf16.mxu0 0
        %3896 = vmatpush1.bf16.xpose.msra.mxu0 %v3776
        %3897 = vmatprep.subr.bf16.mxu0 0
        %3898 = vmatpush1.bf16.xpose.msra.mxu0 %v3779
        %3899 = vmatprep.subr.bf16.mxu0 0
        %3900 = vmatpush1.bf16.xpose.msra.mxu0 %v3782
        %3901 = vmatprep.subr.bf16.mxu0 0
        %3902 = vmatpush1.bf16.xpose.msra.mxu0 0
        %3903 = vmatprep.subr.bf16.mxu0 0
        %3904 = vmatpush1.bf16.xpose.msra.mxu0 0
        %3905 = vmatprep.subr.bf16.mxu0 0
        %3906 = vmatpush1.bf16.xpose.msra.mxu0 0
        %3907 = vmatprep.subr.bf16.mxu0 0
        %3908 = vmatpush1.bf16.xpose.msra.mxu0 0
        %3909 = vmatprep.subr.bf16.mxu0 0
        %3910 = vmatpush1.bf16.xpose.msra.mxu0 0
        %3911 = vmatprep.subr.bf16.mxu0 0
        %3912 = vmatpush1.bf16.xpose.msra.mxu0 0
        %3913 = vmatprep.subr.bf16.mxu0 0
        %3914 = vmatpush1.bf16.xpose.msra.mxu0 0
        %3915 = vmatprep.subr.bf16.mxu0 0
        %3916 = vmatpush1.bf16.xpose.msra.mxu0 0
        %3917 = vmatprep.subr.bf16.mxu0 0
        %3918 = vmatpush1.bf16.xpose.msra.mxu0 0
        %3919 = vmatprep.subr.bf16.mxu0 0
        %3920 = vmatpush1.bf16.xpose.msra.mxu0 0
        %3921 = vmatprep.mubr.bf16.mxu0 0
        %3922 = vmatmul.mubr.bf16.gmra.mrb[0].mxu0 %v3785
        %v3923 = vpop.f32.mrb[0].mxu0
        %v3924 = vadd.f32 0.0, %v3923
        %v3925 = vpop.f32.mrb[0].mxu0
        %v3926 = vpop.f32.mrb[0].mxu0
        %v3927 = vpop.f32.mrb[0].mxu0
        %3928 = vdwg.mxu0
        %v3929 = vmax.f32 %v3924, -50000.0
        %v3930 = vmin.f32 %v3929, 50000.0
        %v3931 = vsel %vm1220, %v3930, -inf
        %3932 = vmax.xlane.f32.xlu0 %v3931
        %v3933 = vpop.xlane.xlu0 %3932
        %v3934 = vsub.f32 %v3930, %v3933
        %v3935 = vmax.f32 %v3934, -50000.0
        %v3936 = vmin.f32 %v3935, 50000.0
        %v3937 = vmul.f32 %v3936, 1.442695
        %v3938 = vpow.pop %v3937
        %v3939 = vsel %vm1220, %v3938, 0.0
        %3940 = vadd.xlane.f32.xlu0 %v3939
        %v3941 = vpop.xlane.xlu0 %3940
        %v3942 = vrcp.pop %v3941
        %v3943 = vmul.f32 1.0, %v3942
        %v3944 = vmul.f32 %v3938, %v3943
        %v3945 = vpack.c.bf16 %v3944, %v3944
        %3946 = vrot.lane.b32.xlu0 %v1047, 16
        %v3947 = vpop.permute.xlu0 %3946
        %3948 = vrot.lane.b32.xlu0 %v1048, 16
        %v3949 = vpop.permute.xlu0 %3948
        %3950 = vrot.lane.b32.xlu0 %v1049, 16
        %v3951 = vpop.permute.xlu0 %3950
        %3952 = vrot.lane.b32.xlu0 %v1050, 16
        %v3953 = vpop.permute.xlu0 %3952
        %3954 = vrot.lane.b32.xlu0 %v1051, 16
        %v3955 = vpop.permute.xlu0 %3954
        %3956 = vrot.lane.b32.xlu0 %v1052, 16
        %v3957 = vpop.permute.xlu0 %3956
        %v3964 = vsel %vm1220, %v3945, 0
        %v3967 = vsel %vm1262, %v3957, 0
        %3969 = vmatprep.subr.bf16.mxu0 0
        %3970 = vmatpush1.bf16.msra.mxu0 %v3947
        %3971 = vmatprep.subr.bf16.mxu0 0
        %3972 = vmatpush1.bf16.msra.mxu0 %v3949
        %3973 = vmatprep.subr.bf16.mxu0 0
        %3974 = vmatpush1.bf16.msra.mxu0 %v3951
        %3975 = vmatprep.subr.bf16.mxu0 0
        %3976 = vmatpush1.bf16.msra.mxu0 %v3953
        %3977 = vmatprep.subr.bf16.mxu0 0
        %3978 = vmatpush1.bf16.msra.mxu0 %v3955
        %3979 = vmatprep.subr.bf16.mxu0 0
        %3980 = vmatpush1.bf16.msra.mxu0 %v3967
        %3981 = vmatprep.subr.bf16.mxu0 0
        %3982 = vmatpush1.bf16.msra.mxu0 0
        %3983 = vmatprep.subr.bf16.mxu0 0
        %3984 = vmatpush1.bf16.msra.mxu0 0
        %3985 = vmatprep.subr.bf16.mxu0 0
        %3986 = vmatpush1.bf16.msra.mxu0 0
        %3987 = vmatprep.subr.bf16.mxu0 0
        %3988 = vmatpush1.bf16.msra.mxu0 0
        %3989 = vmatprep.subr.bf16.mxu0 0
        %3990 = vmatpush1.bf16.msra.mxu0 0
        %3991 = vmatprep.subr.bf16.mxu0 0
        %3992 = vmatpush1.bf16.msra.mxu0 0
        %3993 = vmatprep.subr.bf16.mxu0 0
        %3994 = vmatpush1.bf16.msra.mxu0 0
        %3995 = vmatprep.subr.bf16.mxu0 0
        %3996 = vmatpush1.bf16.msra.mxu0 0
        %3997 = vmatprep.subr.bf16.mxu0 0
        %3998 = vmatpush1.bf16.msra.mxu0 0
        %3999 = vmatprep.subr.bf16.mxu0 0
        %4000 = vmatpush1.bf16.msra.mxu0 0
        %4001 = vmatprep.mubr.bf16.mxu0 0
        %4002 = vmatmul.mubr.bf16.gmra.mrb[0].mxu0 %v3964
        %v4003 = vpop.f32.mrb[0].mxu0
        %v4004 = vadd.f32 0.0, %v4003
        %v4005 = vpop.f32.mrb[0].mxu0
        %v4006 = vpop.f32.mrb[0].mxu0
        %v4007 = vpop.f32.mrb[0].mxu0
        %4008 = vdwg.mxu0
        %v4009 = vadd.f32 %v3878, %v1310
        %v4010 = vadd.f32 %v3879, %v1310
        %v4011 = vadd.f32 %v3880, %v1310
        %v4012 = vadd.f32 %v3881, %v1310
        %v4013 = vadd.f32 %v3882, %v1310
        %v4014 = vadd.f32 %v3883, %v1310
        %v4015 = vadd.f32 %v3884, %v1310
        %v4016 = vadd.f32 %v3885, %v1310
        %v4017 = vadd.f32 %v3886, %v1310
        %v4018 = vadd.f32 %v3887, %v1310
        %v4019 = vadd.f32 %v3888, %v1310
        %v4020 = vsel %vm1054, %v4009, -inf
        %4021 = vmax.xlane.f32.xlu0 %v4020
        %v4022 = vpop.xlane.xlu0 %4021
        %v4023 = vsel %vm1054, %v4010, -inf
        %4024 = vmax.xlane.f32.xlu0 %v4023
        %v4025 = vpop.xlane.xlu0 %4024
        %v4026 = vsel %vm1054, %v4011, -inf
        %4027 = vmax.xlane.f32.xlu0 %v4026
        %v4028 = vpop.xlane.xlu0 %4027
        %v4029 = vsel %vm1054, %v4012, -inf
        %4030 = vmax.xlane.f32.xlu0 %v4029
        %v4031 = vpop.xlane.xlu0 %4030
        %v4032 = vsel %vm1054, %v4013, -inf
        %4033 = vmax.xlane.f32.xlu0 %v4032
        %v4034 = vpop.xlane.xlu0 %4033
        %v4035 = vsel %vm1054, %v4014, -inf
        %4036 = vmax.xlane.f32.xlu0 %v4035
        %v4037 = vpop.xlane.xlu0 %4036
        %v4038 = vsel %vm1054, %v4015, -inf
        %4039 = vmax.xlane.f32.xlu0 %v4038
        %v4040 = vpop.xlane.xlu0 %4039
        %v4041 = vsel %vm1054, %v4016, -inf
        %4042 = vmax.xlane.f32.xlu0 %v4041
        %v4043 = vpop.xlane.xlu0 %4042
        %v4044 = vsel %vm1054, %v4017, -inf
        %4045 = vmax.xlane.f32.xlu0 %v4044
        %v4046 = vpop.xlane.xlu0 %4045
        %v4047 = vsel %vm1054, %v4018, -inf
        %4048 = vmax.xlane.f32.xlu0 %v4047
        %v4049 = vpop.xlane.xlu0 %4048
        %v4050 = vsel %vm1353, %v4019, -inf
        %4051 = vmax.xlane.f32.xlu0 %v4050
        %v4052 = vpop.xlane.xlu0 %4051
        %v4053 = vsub.f32 %v4009, %v4022
        %v4054 = vsub.f32 %v4010, %v4025
        %v4055 = vsub.f32 %v4011, %v4028
        %v4056 = vsub.f32 %v4012, %v4031
        %v4057 = vsub.f32 %v4013, %v4034
        %v4058 = vsub.f32 %v4014, %v4037
        %v4059 = vsub.f32 %v4015, %v4040
        %v4060 = vsub.f32 %v4016, %v4043
        %v4061 = vsub.f32 %v4017, %v4046
        %v4062 = vsub.f32 %v4018, %v4049
        %v4063 = vsub.f32 %v4019, %v4052
        %v4064 = vmul.f32 %v4053, 1.442695
        %v4065 = vpow.pop %v4064
        %v4066 = vmul.f32 %v4054, 1.442695
        %v4067 = vpow.pop %v4066
        %v4068 = vmul.f32 %v4055, 1.442695
        %v4069 = vpow.pop %v4068
        %v4070 = vmul.f32 %v4056, 1.442695
        %v4071 = vpow.pop %v4070
        %v4072 = vmul.f32 %v4057, 1.442695
        %v4073 = vpow.pop %v4072
        %v4074 = vmul.f32 %v4058, 1.442695
        %v4075 = vpow.pop %v4074
        %v4076 = vmul.f32 %v4059, 1.442695
        %v4077 = vpow.pop %v4076
        %v4078 = vmul.f32 %v4060, 1.442695
        %v4079 = vpow.pop %v4078
        %v4080 = vmul.f32 %v4061, 1.442695
        %v4081 = vpow.pop %v4080
        %v4082 = vmul.f32 %v4062, 1.442695
        %v4083 = vpow.pop %v4082
        %v4084 = vmul.f32 %v4063, 1.442695
        %v4085 = vpow.pop %v4084
        %v4086 = vsel %vm1054, %v4065, 0.0
        %4087 = vadd.xlane.f32.xlu0 %v4086
        %v4088 = vpop.xlane.xlu0 %4087
        %v4089 = vsel %vm1054, %v4067, 0.0
        %4090 = vadd.xlane.f32.xlu0 %v4089
        %v4091 = vpop.xlane.xlu0 %4090
        %v4092 = vsel %vm1054, %v4069, 0.0
        %4093 = vadd.xlane.f32.xlu0 %v4092
        %v4094 = vpop.xlane.xlu0 %4093
        %v4095 = vsel %vm1054, %v4071, 0.0
        %4096 = vadd.xlane.f32.xlu0 %v4095
        %v4097 = vpop.xlane.xlu0 %4096
        %v4098 = vsel %vm1054, %v4073, 0.0
        %4099 = vadd.xlane.f32.xlu0 %v4098
        %v4100 = vpop.xlane.xlu0 %4099
        %v4101 = vsel %vm1054, %v4075, 0.0
        %4102 = vadd.xlane.f32.xlu0 %v4101
        %v4103 = vpop.xlane.xlu0 %4102
        %v4104 = vsel %vm1054, %v4077, 0.0
        %4105 = vadd.xlane.f32.xlu0 %v4104
        %v4106 = vpop.xlane.xlu0 %4105
        %v4107 = vsel %vm1054, %v4079, 0.0
        %4108 = vadd.xlane.f32.xlu0 %v4107
        %v4109 = vpop.xlane.xlu0 %4108
        %v4110 = vsel %vm1054, %v4081, 0.0
        %4111 = vadd.xlane.f32.xlu0 %v4110
        %v4112 = vpop.xlane.xlu0 %4111
        %v4113 = vsel %vm1054, %v4083, 0.0
        %4114 = vadd.xlane.f32.xlu0 %v4113
        %v4115 = vpop.xlane.xlu0 %4114
        %v4116 = vsel %vm1353, %v4085, 0.0
        %4117 = vadd.xlane.f32.xlu0 %v4116
        %v4118 = vpop.xlane.xlu0 %4117
        %v4119 = vrcp.pop %v4088
        %v4120 = vmul.f32 1.0, %v4119
        %v4121 = vrcp.pop %v4091
        %v4122 = vmul.f32 1.0, %v4121
        %v4123 = vrcp.pop %v4094
        %v4124 = vmul.f32 1.0, %v4123
        %v4125 = vrcp.pop %v4097
        %v4126 = vmul.f32 1.0, %v4125
        %v4127 = vrcp.pop %v4100
        %v4128 = vmul.f32 1.0, %v4127
        %v4129 = vrcp.pop %v4103
        %v4130 = vmul.f32 1.0, %v4129
        %v4131 = vrcp.pop %v4106
        %v4132 = vmul.f32 1.0, %v4131
        %v4133 = vrcp.pop %v4109
        %v4134 = vmul.f32 1.0, %v4133
        %v4135 = vrcp.pop %v4112
        %v4136 = vmul.f32 1.0, %v4135
        %v4137 = vrcp.pop %v4115
        %v4138 = vmul.f32 1.0, %v4137
        %v4139 = vrcp.pop %v4118
        %v4140 = vmul.f32 1.0, %v4139
        %v4141 = vmul.f32 %v4065, %v4120
        %v4142 = vmul.f32 %v4067, %v4122
        %v4143 = vmul.f32 %v4069, %v4124
        %v4144 = vmul.f32 %v4071, %v4126
        %v4145 = vmul.f32 %v4073, %v4128
        %v4146 = vmul.f32 %v4075, %v4130
        %v4147 = vmul.f32 %v4077, %v4132
        %v4148 = vmul.f32 %v4079, %v4134
        %v4149 = vmul.f32 %v4081, %v4136
        %v4150 = vmul.f32 %v4083, %v4138
        %v4151 = vmul.f32 %v4085, %v4140
        %v4152 = vpack.c.bf16 %v1045, %v1045
        %4153 = vrot.lane.b32.xlu0 %v1053, 16
        %v4154 = vpop.permute.xlu0 %4153
        %v4156 = vsel %vm1054, %v4154, 0
        %v4159 = vsel %vm1463, %v4152, 0
        %4161 = vmatprep.subr.bf16.mxu0 0
        %4162 = vmatpush1.bf16.msra.mxu0 %v4159
        %4163 = vmatprep.subr.bf16.mxu0 0
        %4164 = vmatpush1.bf16.msra.mxu0 0
        %4165 = vmatprep.subr.bf16.mxu0 0
        %4166 = vmatpush1.bf16.msra.mxu0 0
        %4167 = vmatprep.subr.bf16.mxu0 0
        %4168 = vmatpush1.bf16.msra.mxu0 0
        %4169 = vmatprep.subr.bf16.mxu0 0
        %4170 = vmatpush1.bf16.msra.mxu0 0
        %4171 = vmatprep.subr.bf16.mxu0 0
        %4172 = vmatpush1.bf16.msra.mxu0 0
        %4173 = vmatprep.subr.bf16.mxu0 0
        %4174 = vmatpush1.bf16.msra.mxu0 0
        %4175 = vmatprep.subr.bf16.mxu0 0
        %4176 = vmatpush1.bf16.msra.mxu0 0
        %4177 = vmatprep.subr.bf16.mxu0 0
        %4178 = vmatpush1.bf16.msra.mxu0 0
        %4179 = vmatprep.subr.bf16.mxu0 0
        %4180 = vmatpush1.bf16.msra.mxu0 0
        %4181 = vmatprep.subr.bf16.mxu0 0
        %4182 = vmatpush1.bf16.msra.mxu0 0
        %4183 = vmatprep.subr.bf16.mxu0 0
        %4184 = vmatpush1.bf16.msra.mxu0 0
        %4185 = vmatprep.subr.bf16.mxu0 0
        %4186 = vmatpush1.bf16.msra.mxu0 0
        %4187 = vmatprep.subr.bf16.mxu0 0
        %4188 = vmatpush1.bf16.msra.mxu0 0
        %4189 = vmatprep.subr.bf16.mxu0 0
        %4190 = vmatpush1.bf16.msra.mxu0 0
        %4191 = vmatprep.subr.bf16.mxu0 0
        %4192 = vmatpush1.bf16.msra.mxu0 0
        %4193 = vmatprep.mubr.bf16.mxu0 0
        %4194 = vmatmul.mubr.bf16.gmra.mrb[0].mxu0 %v4156
        %v4195 = vpop.f32.mrb[0].mxu0
        %v4196 = vadd.f32 0.0, %v4195
        %v4197 = vpop.f32.mrb[0].mxu0
        %v4198 = vpop.f32.mrb[0].mxu0
        %v4199 = vpop.f32.mrb[0].mxu0
        %4200 = vdwg.mxu0
        %4201 = vrot.lane.b32.xlu0 %v1047, 72
        %v4202 = vpop.permute.xlu0 %4201
        %4203 = vrot.lane.b32.xlu0 %v1048, 72
        %v4204 = vpop.permute.xlu0 %4203
        %4205 = vrot.lane.b32.xlu0 %v1049, 72
        %v4206 = vpop.permute.xlu0 %4205
        %4207 = vrot.lane.b32.xlu0 %v1050, 72
        %v4208 = vpop.permute.xlu0 %4207
        %4209 = vrot.lane.b32.xlu0 %v1051, 72
        %v4210 = vpop.permute.xlu0 %4209
        %4211 = vrot.lane.b32.xlu0 %v1052, 72
        %v4212 = vpop.permute.xlu0 %4211
        %4213 = vrot.lane.b32.xlu0 %v1053, 72
        %v4214 = vpop.permute.xlu0 %4213
        %v4216 = vsel %vm1054, %v4202, 0
        %v4219 = vsel %vm1054, %v4204, 0
        %v4222 = vsel %vm1054, %v4206, 0
        %v4225 = vsel %vm1054, %v4208, 0
        %v4228 = vsel %vm1054, %v4210, 0
        %v4231 = vsel %vm1054, %v4212, 0
        %v4234 = vsel %vm1054, %v4214, 0
        %4236 = vmatprep.subr.bf16.mxu0 0
        %4237 = vmatpush1.bf16.xpose.msra.mxu0 %v4234
        %4238 = vmatprep.subr.bf16.mxu0 0
        %4239 = vmatpush1.bf16.xpose.msra.mxu0 0
        %4240 = vmatprep.subr.bf16.mxu0 0
        %4241 = vmatpush1.bf16.xpose.msra.mxu0 0
        %4242 = vmatprep.subr.bf16.mxu0 0
        %4243 = vmatpush1.bf16.xpose.msra.mxu0 0
        %4244 = vmatprep.subr.bf16.mxu0 0
        %4245 = vmatpush1.bf16.xpose.msra.mxu0 0
        %4246 = vmatprep.subr.bf16.mxu0 0
        %4247 = vmatpush1.bf16.xpose.msra.mxu0 0
        %4248 = vmatprep.subr.bf16.mxu0 0
        %4249 = vmatpush1.bf16.xpose.msra.mxu0 0
        %4250 = vmatprep.subr.bf16.mxu0 0
        %4251 = vmatpush1.bf16.xpose.msra.mxu0 0
        %4252 = vmatprep.subr.bf16.mxu0 0
        %4253 = vmatpush1.bf16.xpose.msra.mxu0 0
        %4254 = vmatprep.subr.bf16.mxu0 0
        %4255 = vmatpush1.bf16.xpose.msra.mxu0 0
        %4256 = vmatprep.subr.bf16.mxu0 0
        %4257 = vmatpush1.bf16.xpose.msra.mxu0 0
        %4258 = vmatprep.subr.bf16.mxu0 0
        %4259 = vmatpush1.bf16.xpose.msra.mxu0 0
        %4260 = vmatprep.subr.bf16.mxu0 0
        %4261 = vmatpush1.bf16.xpose.msra.mxu0 0
        %4262 = vmatprep.subr.bf16.mxu0 0
        %4263 = vmatpush1.bf16.xpose.msra.mxu0 0
        %4264 = vmatprep.subr.bf16.mxu0 0
        %4265 = vmatpush1.bf16.xpose.msra.mxu0 0
        %4266 = vmatprep.subr.bf16.mxu0 0
        %4267 = vmatpush1.bf16.xpose.msra.mxu0 0
        %4268 = vmatprep.mubr.bf16.mxu0 0
        %4269 = vmatmul.mubr.bf16.gmra.mrb[0].mxu0 %v4216
        %v4270 = vpop.f32.mrb[0].mxu0
        %v4271 = vadd.f32 0.0, %v4270
        %v4272 = vpop.f32.mrb[0].mxu0
        %v4273 = vpop.f32.mrb[0].mxu0
        %v4274 = vadd.f32 0.0, %v4273
        %v4275 = vpop.f32.mrb[0].mxu0
        %4276 = vmatprep.mubr.bf16.mxu0 0
        %4277 = vmatmul.mubr.bf16.gmra.mrb[0].mxu0 %v4219
        %v4278 = vpop.f32.mrb[0].mxu0
        %v4279 = vadd.f32 0.0, %v4278
        %v4280 = vpop.f32.mrb[0].mxu0
        %v4281 = vpop.f32.mrb[0].mxu0
        %v4282 = vadd.f32 0.0, %v4281
        %v4283 = vpop.f32.mrb[0].mxu0
        %4284 = vmatprep.mubr.bf16.mxu0 0
        %4285 = vmatmul.mubr.bf16.gmra.mrb[0].mxu0 %v4222
        %v4286 = vpop.f32.mrb[0].mxu0
        %v4287 = vadd.f32 0.0, %v4286
        %v4288 = vpop.f32.mrb[0].mxu0
        %v4289 = vpop.f32.mrb[0].mxu0
        %v4290 = vadd.f32 0.0, %v4289
        %v4291 = vpop.f32.mrb[0].mxu0
        %4292 = vmatprep.mubr.bf16.mxu0 0
        %4293 = vmatmul.mubr.bf16.gmra.mrb[0].mxu0 %v4225
        %v4294 = vpop.f32.mrb[0].mxu0
        %v4295 = vadd.f32 0.0, %v4294
        %v4296 = vpop.f32.mrb[0].mxu0
        %v4297 = vpop.f32.mrb[0].mxu0
        %v4298 = vadd.f32 0.0, %v4297
        %v4299 = vpop.f32.mrb[0].mxu0
        %4300 = vmatprep.mubr.bf16.mxu0 0
        %4301 = vmatmul.mubr.bf16.gmra.mrb[0].mxu0 %v4228
        %v4302 = vpop.f32.mrb[0].mxu0
        %v4303 = vadd.f32 0.0, %v4302
        %v4304 = vpop.f32.mrb[0].mxu0
        %v4305 = vpop.f32.mrb[0].mxu0
        %v4306 = vadd.f32 0.0, %v4305
        %v4307 = vpop.f32.mrb[0].mxu0
        %4308 = vmatprep.mubr.bf16.mxu0 0
        %4309 = vmatmul.mubr.bf16.gmra.mrb[0].mxu0 %v4231
        %v4310 = vpop.f32.mrb[0].mxu0
        %v4311 = vadd.f32 0.0, %v4310
        %v4312 = vpop.f32.mrb[0].mxu0
        %v4313 = vpop.f32.mrb[0].mxu0
        %v4314 = vpop.f32.mrb[0].mxu0
        %4315 = vdwg.mxu0
        %v4316 = vmax.f32 %v4271, -50000.0
        %v4317 = vmax.f32 %v4274, -50000.0
        %v4318 = vmax.f32 %v4279, -50000.0
        %v4319 = vmax.f32 %v4282, -50000.0
        %v4320 = vmax.f32 %v4287, -50000.0
        %v4321 = vmax.f32 %v4290, -50000.0
        %v4322 = vmax.f32 %v4295, -50000.0
        %v4323 = vmax.f32 %v4298, -50000.0
        %v4324 = vmax.f32 %v4303, -50000.0
        %v4325 = vmax.f32 %v4306, -50000.0
        %v4326 = vmax.f32 %v4311, -50000.0
        %v4327 = vmin.f32 %v4316, 50000.0
        %v4328 = vmin.f32 %v4317, 50000.0
        %v4329 = vmin.f32 %v4318, 50000.0
        %v4330 = vmin.f32 %v4319, 50000.0
        %v4331 = vmin.f32 %v4320, 50000.0
        %v4332 = vmin.f32 %v4321, 50000.0
        %v4333 = vmin.f32 %v4322, 50000.0
        %v4334 = vmin.f32 %v4323, 50000.0
        %v4335 = vmin.f32 %v4324, 50000.0
        %v4336 = vmin.f32 %v4325, 50000.0
        %v4337 = vmin.f32 %v4326, 50000.0
        %4338 = vmatprep.subr.bf16.mxu0 0
        %4339 = vmatpush1.bf16.xpose.msra.mxu0 %v4216
        %4340 = vmatprep.subr.bf16.mxu0 0
        %4341 = vmatpush1.bf16.xpose.msra.mxu0 %v4219
        %4342 = vmatprep.subr.bf16.mxu0 0
        %4343 = vmatpush1.bf16.xpose.msra.mxu0 %v4222
        %4344 = vmatprep.subr.bf16.mxu0 0
        %4345 = vmatpush1.bf16.xpose.msra.mxu0 %v4225
        %4346 = vmatprep.subr.bf16.mxu0 0
        %4347 = vmatpush1.bf16.xpose.msra.mxu0 %v4228
        %4348 = vmatprep.subr.bf16.mxu0 0
        %4349 = vmatpush1.bf16.xpose.msra.mxu0 %v4231
        %4350 = vmatprep.subr.bf16.mxu0 0
        %4351 = vmatpush1.bf16.xpose.msra.mxu0 0
        %4352 = vmatprep.subr.bf16.mxu0 0
        %4353 = vmatpush1.bf16.xpose.msra.mxu0 0
        %4354 = vmatprep.subr.bf16.mxu0 0
        %4355 = vmatpush1.bf16.xpose.msra.mxu0 0
        %4356 = vmatprep.subr.bf16.mxu0 0
        %4357 = vmatpush1.bf16.xpose.msra.mxu0 0
        %4358 = vmatprep.subr.bf16.mxu0 0
        %4359 = vmatpush1.bf16.xpose.msra.mxu0 0
        %4360 = vmatprep.subr.bf16.mxu0 0
        %4361 = vmatpush1.bf16.xpose.msra.mxu0 0
        %4362 = vmatprep.subr.bf16.mxu0 0
        %4363 = vmatpush1.bf16.xpose.msra.mxu0 0
        %4364 = vmatprep.subr.bf16.mxu0 0
        %4365 = vmatpush1.bf16.xpose.msra.mxu0 0
        %4366 = vmatprep.subr.bf16.mxu0 0
        %4367 = vmatpush1.bf16.xpose.msra.mxu0 0
        %4368 = vmatprep.subr.bf16.mxu0 0
        %4369 = vmatpush1.bf16.xpose.msra.mxu0 0
        %4370 = vmatprep.mubr.bf16.mxu0 0
        %4371 = vmatmul.mubr.bf16.gmra.mrb[0].mxu0 %v4234
        %v4372 = vpop.f32.mrb[0].mxu0
        %v4373 = vadd.f32 0.0, %v4372
        %v4374 = vpop.f32.mrb[0].mxu0
        %v4375 = vpop.f32.mrb[0].mxu0
        %v4376 = vpop.f32.mrb[0].mxu0
        %4377 = vdwg.mxu0
        %v4378 = vmax.f32 %v4373, -50000.0
        %v4379 = vmin.f32 %v4378, 50000.0
        %v4380 = vsel %vm1220, %v4379, -inf
        %4381 = vmax.xlane.f32.xlu0 %v4380
        %v4382 = vpop.xlane.xlu0 %4381
        %v4383 = vsub.f32 %v4379, %v4382
        %v4384 = vmax.f32 %v4383, -50000.0
        %v4385 = vmin.f32 %v4384, 50000.0
        %v4386 = vmul.f32 %v4385, 1.442695
        %v4387 = vpow.pop %v4386
        %v4388 = vsel %vm1220, %v4387, 0.0
        %4389 = vadd.xlane.f32.xlu0 %v4388
        %v4390 = vpop.xlane.xlu0 %4389
        %v4391 = vrcp.pop %v4390
        %v4392 = vmul.f32 1.0, %v4391
        %v4393 = vmul.f32 %v4387, %v4392
        %v4394 = vpack.c.bf16 %v4393, %v4393
        %4395 = vrot.lane.b32.xlu0 %v1047, 8
        %v4396 = vpop.permute.xlu0 %4395
        %4397 = vrot.lane.b32.xlu0 %v1048, 8
        %v4398 = vpop.permute.xlu0 %4397
        %4399 = vrot.lane.b32.xlu0 %v1049, 8
        %v4400 = vpop.permute.xlu0 %4399
        %4401 = vrot.lane.b32.xlu0 %v1050, 8
        %v4402 = vpop.permute.xlu0 %4401
        %4403 = vrot.lane.b32.xlu0 %v1051, 8
        %v4404 = vpop.permute.xlu0 %4403
        %4405 = vrot.lane.b32.xlu0 %v1052, 8
        %v4406 = vpop.permute.xlu0 %4405
        %v4413 = vsel %vm1220, %v4394, 0
        %v4416 = vsel %vm1262, %v4406, 0
        %4418 = vmatprep.subr.bf16.mxu0 0
        %4419 = vmatpush1.bf16.msra.mxu0 %v4396
        %4420 = vmatprep.subr.bf16.mxu0 0
        %4421 = vmatpush1.bf16.msra.mxu0 %v4398
        %4422 = vmatprep.subr.bf16.mxu0 0
        %4423 = vmatpush1.bf16.msra.mxu0 %v4400
        %4424 = vmatprep.subr.bf16.mxu0 0
        %4425 = vmatpush1.bf16.msra.mxu0 %v4402
        %4426 = vmatprep.subr.bf16.mxu0 0
        %4427 = vmatpush1.bf16.msra.mxu0 %v4404
        %4428 = vmatprep.subr.bf16.mxu0 0
        %4429 = vmatpush1.bf16.msra.mxu0 %v4416
        %4430 = vmatprep.subr.bf16.mxu0 0
        %4431 = vmatpush1.bf16.msra.mxu0 0
        %4432 = vmatprep.subr.bf16.mxu0 0
        %4433 = vmatpush1.bf16.msra.mxu0 0
        %4434 = vmatprep.subr.bf16.mxu0 0
        %4435 = vmatpush1.bf16.msra.mxu0 0
        %4436 = vmatprep.subr.bf16.mxu0 0
        %4437 = vmatpush1.bf16.msra.mxu0 0
        %4438 = vmatprep.subr.bf16.mxu0 0
        %4439 = vmatpush1.bf16.msra.mxu0 0
        %4440 = vmatprep.subr.bf16.mxu0 0
        %4441 = vmatpush1.bf16.msra.mxu0 0
        %4442 = vmatprep.subr.bf16.mxu0 0
        %4443 = vmatpush1.bf16.msra.mxu0 0
        %4444 = vmatprep.subr.bf16.mxu0 0
        %4445 = vmatpush1.bf16.msra.mxu0 0
        %4446 = vmatprep.subr.bf16.mxu0 0
        %4447 = vmatpush1.bf16.msra.mxu0 0
        %4448 = vmatprep.subr.bf16.mxu0 0
        %4449 = vmatpush1.bf16.msra.mxu0 0
        %4450 = vmatprep.mubr.bf16.mxu0 0
        %4451 = vmatmul.mubr.bf16.gmra.mrb[0].mxu0 %v4413
        %v4452 = vpop.f32.mrb[0].mxu0
        %v4453 = vadd.f32 0.0, %v4452
        %v4454 = vpop.f32.mrb[0].mxu0
        %v4455 = vpop.f32.mrb[0].mxu0
        %v4456 = vpop.f32.mrb[0].mxu0
        %4457 = vdwg.mxu0
        %v4458 = vadd.f32 %v4327, %v1310
        %v4459 = vadd.f32 %v4328, %v1310
        %v4460 = vadd.f32 %v4329, %v1310
        %v4461 = vadd.f32 %v4330, %v1310
        %v4462 = vadd.f32 %v4331, %v1310
        %v4463 = vadd.f32 %v4332, %v1310
        %v4464 = vadd.f32 %v4333, %v1310
        %v4465 = vadd.f32 %v4334, %v1310
        %v4466 = vadd.f32 %v4335, %v1310
        %v4467 = vadd.f32 %v4336, %v1310
        %v4468 = vadd.f32 %v4337, %v1310
        %v4469 = vsel %vm1054, %v4458, -inf
        %4470 = vmax.xlane.f32.xlu0 %v4469
        %v4471 = vpop.xlane.xlu0 %4470
        %v4472 = vsel %vm1054, %v4459, -inf
        %4473 = vmax.xlane.f32.xlu0 %v4472
        %v4474 = vpop.xlane.xlu0 %4473
        %v4475 = vsel %vm1054, %v4460, -inf
        %4476 = vmax.xlane.f32.xlu0 %v4475
        %v4477 = vpop.xlane.xlu0 %4476
        %v4478 = vsel %vm1054, %v4461, -inf
        %4479 = vmax.xlane.f32.xlu0 %v4478
        %v4480 = vpop.xlane.xlu0 %4479
        %v4481 = vsel %vm1054, %v4462, -inf
        %4482 = vmax.xlane.f32.xlu0 %v4481
        %v4483 = vpop.xlane.xlu0 %4482
        %v4484 = vsel %vm1054, %v4463, -inf
        %4485 = vmax.xlane.f32.xlu0 %v4484
        %v4486 = vpop.xlane.xlu0 %4485
        %v4487 = vsel %vm1054, %v4464, -inf
        %4488 = vmax.xlane.f32.xlu0 %v4487
        %v4489 = vpop.xlane.xlu0 %4488
        %v4490 = vsel %vm1054, %v4465, -inf
        %4491 = vmax.xlane.f32.xlu0 %v4490
        %v4492 = vpop.xlane.xlu0 %4491
        %v4493 = vsel %vm1054, %v4466, -inf
        %4494 = vmax.xlane.f32.xlu0 %v4493
        %v4495 = vpop.xlane.xlu0 %4494
        %v4496 = vsel %vm1054, %v4467, -inf
        %4497 = vmax.xlane.f32.xlu0 %v4496
        %v4498 = vpop.xlane.xlu0 %4497
        %v4499 = vsel %vm1353, %v4468, -inf
        %4500 = vmax.xlane.f32.xlu0 %v4499
        %v4501 = vpop.xlane.xlu0 %4500
        %v4502 = vsub.f32 %v4458, %v4471
        %v4503 = vsub.f32 %v4459, %v4474
        %v4504 = vsub.f32 %v4460, %v4477
        %v4505 = vsub.f32 %v4461, %v4480
        %v4506 = vsub.f32 %v4462, %v4483
        %v4507 = vsub.f32 %v4463, %v4486
        %v4508 = vsub.f32 %v4464, %v4489
        %v4509 = vsub.f32 %v4465, %v4492
        %v4510 = vsub.f32 %v4466, %v4495
        %v4511 = vsub.f32 %v4467, %v4498
        %v4512 = vsub.f32 %v4468, %v4501
        %v4513 = vmul.f32 %v4502, 1.442695
        %v4514 = vpow.pop %v4513
        %v4515 = vmul.f32 %v4503, 1.442695
        %v4516 = vpow.pop %v4515
        %v4517 = vmul.f32 %v4504, 1.442695
        %v4518 = vpow.pop %v4517
        %v4519 = vmul.f32 %v4505, 1.442695
        %v4520 = vpow.pop %v4519
        %v4521 = vmul.f32 %v4506, 1.442695
        %v4522 = vpow.pop %v4521
        %v4523 = vmul.f32 %v4507, 1.442695
        %v4524 = vpow.pop %v4523
        %v4525 = vmul.f32 %v4508, 1.442695
        %v4526 = vpow.pop %v4525
        %v4527 = vmul.f32 %v4509, 1.442695
        %v4528 = vpow.pop %v4527
        %v4529 = vmul.f32 %v4510, 1.442695
        %v4530 = vpow.pop %v4529
        %v4531 = vmul.f32 %v4511, 1.442695
        %v4532 = vpow.pop %v4531
        %v4533 = vmul.f32 %v4512, 1.442695
        %v4534 = vpow.pop %v4533
        %v4535 = vsel %vm1054, %v4514, 0.0
        %4536 = vadd.xlane.f32.xlu0 %v4535
        %v4537 = vpop.xlane.xlu0 %4536
        %v4538 = vsel %vm1054, %v4516, 0.0
        %4539 = vadd.xlane.f32.xlu0 %v4538
        %v4540 = vpop.xlane.xlu0 %4539
        %v4541 = vsel %vm1054, %v4518, 0.0
        %4542 = vadd.xlane.f32.xlu0 %v4541
        %v4543 = vpop.xlane.xlu0 %4542
        %v4544 = vsel %vm1054, %v4520, 0.0
        %4545 = vadd.xlane.f32.xlu0 %v4544
        %v4546 = vpop.xlane.xlu0 %4545
        %v4547 = vsel %vm1054, %v4522, 0.0
        %4548 = vadd.xlane.f32.xlu0 %v4547
        %v4549 = vpop.xlane.xlu0 %4548
        %v4550 = vsel %vm1054, %v4524, 0.0
        %4551 = vadd.xlane.f32.xlu0 %v4550
        %v4552 = vpop.xlane.xlu0 %4551
        %v4553 = vsel %vm1054, %v4526, 0.0
        %4554 = vadd.xlane.f32.xlu0 %v4553
        %v4555 = vpop.xlane.xlu0 %4554
        %v4556 = vsel %vm1054, %v4528, 0.0
        %4557 = vadd.xlane.f32.xlu0 %v4556
        %v4558 = vpop.xlane.xlu0 %4557
        %v4559 = vsel %vm1054, %v4530, 0.0
        %4560 = vadd.xlane.f32.xlu0 %v4559
        %v4561 = vpop.xlane.xlu0 %4560
        %v4562 = vsel %vm1054, %v4532, 0.0
        %4563 = vadd.xlane.f32.xlu0 %v4562
        %v4564 = vpop.xlane.xlu0 %4563
        %v4565 = vsel %vm1353, %v4534, 0.0
        %4566 = vadd.xlane.f32.xlu0 %v4565
        %v4567 = vpop.xlane.xlu0 %4566
        %v4568 = vrcp.pop %v4537
        %v4569 = vmul.f32 1.0, %v4568
        %v4570 = vrcp.pop %v4540
        %v4571 = vmul.f32 1.0, %v4570
        %v4572 = vrcp.pop %v4543
        %v4573 = vmul.f32 1.0, %v4572
        %v4574 = vrcp.pop %v4546
        %v4575 = vmul.f32 1.0, %v4574
        %v4576 = vrcp.pop %v4549
        %v4577 = vmul.f32 1.0, %v4576
        %v4578 = vrcp.pop %v4552
        %v4579 = vmul.f32 1.0, %v4578
        %v4580 = vrcp.pop %v4555
        %v4581 = vmul.f32 1.0, %v4580
        %v4582 = vrcp.pop %v4558
        %v4583 = vmul.f32 1.0, %v4582
        %v4584 = vrcp.pop %v4561
        %v4585 = vmul.f32 1.0, %v4584
        %v4586 = vrcp.pop %v4564
        %v4587 = vmul.f32 1.0, %v4586
        %v4588 = vrcp.pop %v4567
        %v4589 = vmul.f32 1.0, %v4588
        %v4590 = vmul.f32 %v4514, %v4569
        %v4591 = vmul.f32 %v4516, %v4571
        %v4592 = vmul.f32 %v4518, %v4573
        %v4593 = vmul.f32 %v4520, %v4575
        %v4594 = vmul.f32 %v4522, %v4577
        %v4595 = vmul.f32 %v4524, %v4579
        %v4596 = vmul.f32 %v4526, %v4581
        %v4597 = vmul.f32 %v4528, %v4583
        %v4598 = vmul.f32 %v4530, %v4585
        %v4599 = vmul.f32 %v4532, %v4587
        %v4600 = vmul.f32 %v4534, %v4589
        %v4601 = vpack.c.bf16 %v1046, %v1046
        %4602 = vrot.lane.b32.xlu0 %v1053, 8
        %v4603 = vpop.permute.xlu0 %4602
        %v4605 = vsel %vm1054, %v4603, 0
        %v4608 = vsel %vm1463, %v4601, 0
        %4610 = vmatprep.subr.bf16.mxu0 0
        %4611 = vmatpush1.bf16.msra.mxu0 %v4608
        %4612 = vmatprep.subr.bf16.mxu0 0
        %4613 = vmatpush1.bf16.msra.mxu0 0
        %4614 = vmatprep.subr.bf16.mxu0 0
        %4615 = vmatpush1.bf16.msra.mxu0 0
        %4616 = vmatprep.subr.bf16.mxu0 0
        %4617 = vmatpush1.bf16.msra.mxu0 0
        %4618 = vmatprep.subr.bf16.mxu0 0
        %4619 = vmatpush1.bf16.msra.mxu0 0
        %4620 = vmatprep.subr.bf16.mxu0 0
        %4621 = vmatpush1.bf16.msra.mxu0 0
        %4622 = vmatprep.subr.bf16.mxu0 0
        %4623 = vmatpush1.bf16.msra.mxu0 0
        %4624 = vmatprep.subr.bf16.mxu0 0
        %4625 = vmatpush1.bf16.msra.mxu0 0
        %4626 = vmatprep.subr.bf16.mxu0 0
        %4627 = vmatpush1.bf16.msra.mxu0 0
        %4628 = vmatprep.subr.bf16.mxu0 0
        %4629 = vmatpush1.bf16.msra.mxu0 0
        %4630 = vmatprep.subr.bf16.mxu0 0
        %4631 = vmatpush1.bf16.msra.mxu0 0
        %4632 = vmatprep.subr.bf16.mxu0 0
        %4633 = vmatpush1.bf16.msra.mxu0 0
        %4634 = vmatprep.subr.bf16.mxu0 0
        %4635 = vmatpush1.bf16.msra.mxu0 0
        %4636 = vmatprep.subr.bf16.mxu0 0
        %4637 = vmatpush1.bf16.msra.mxu0 0
        %4638 = vmatprep.subr.bf16.mxu0 0
        %4639 = vmatpush1.bf16.msra.mxu0 0
        %4640 = vmatprep.subr.bf16.mxu0 0
        %4641 = vmatpush1.bf16.msra.mxu0 0
        %4642 = vmatprep.mubr.bf16.mxu0 0
        %4643 = vmatmul.mubr.bf16.gmra.mrb[0].mxu0 %v4605
        %v4644 = vpop.f32.mrb[0].mxu0
        %v4645 = vadd.f32 0.0, %v4644
        %v4646 = vpop.f32.mrb[0].mxu0
        %v4647 = vpop.f32.mrb[0].mxu0
        %v4648 = vpop.f32.mrb[0].mxu0
        %4649 = vdwg.mxu0
        %4661 = vrot.lane.b32.xlu0 %v1896, 8
        %v4662 = vpop.permute.xlu0 %4661
        %4663 = vrot.lane.b32.xlu0 %v1897, 8
        %v4664 = vpop.permute.xlu0 %4663
        %4665 = vrot.lane.b32.xlu0 %v1898, 8
        %v4666 = vpop.permute.xlu0 %4665
        %4667 = vrot.lane.b32.xlu0 %v1899, 8
        %v4668 = vpop.permute.xlu0 %4667
        %4669 = vrot.lane.b32.xlu0 %v1900, 8
        %v4670 = vpop.permute.xlu0 %4669
        %4671 = vrot.lane.b32.xlu0 %v1901, 8
        %v4672 = vpop.permute.xlu0 %4671
        %4673 = vrot.lane.b32.xlu0 %v1902, 8
        %v4674 = vpop.permute.xlu0 %4673
        %4675 = vrot.lane.b32.xlu0 %v1903, 8
        %v4676 = vpop.permute.xlu0 %4675
        %4677 = vrot.lane.b32.xlu0 %v1904, 8
        %v4678 = vpop.permute.xlu0 %4677
        %4679 = vrot.lane.b32.xlu0 %v1905, 8
        %v4680 = vpop.permute.xlu0 %4679
        %4681 = vrot.lane.b32.xlu0 %v1906, 8
        %v4682 = vpop.permute.xlu0 %4681
        %4705 = vrot.lane.b32.xlu0 %v2345, 16
        %v4706 = vpop.permute.xlu0 %4705
        %4707 = vrot.lane.b32.xlu0 %v2346, 16
        %v4708 = vpop.permute.xlu0 %4707
        %4709 = vrot.lane.b32.xlu0 %v2347, 16
        %v4710 = vpop.permute.xlu0 %4709
        %4711 = vrot.lane.b32.xlu0 %v2348, 16
        %v4712 = vpop.permute.xlu0 %4711
        %4713 = vrot.lane.b32.xlu0 %v2349, 16
        %v4714 = vpop.permute.xlu0 %4713
        %4715 = vrot.lane.b32.xlu0 %v2350, 16
        %v4716 = vpop.permute.xlu0 %4715
        %4717 = vrot.lane.b32.xlu0 %v2351, 16
        %v4718 = vpop.permute.xlu0 %4717
        %4719 = vrot.lane.b32.xlu0 %v2352, 16
        %v4720 = vpop.permute.xlu0 %4719
        %4721 = vrot.lane.b32.xlu0 %v2353, 16
        %v4722 = vpop.permute.xlu0 %4721
        %4723 = vrot.lane.b32.xlu0 %v2354, 16
        %v4724 = vpop.permute.xlu0 %4723
        %4725 = vrot.lane.b32.xlu0 %v2355, 16
        %v4726 = vpop.permute.xlu0 %4725
        %4749 = vrot.lane.b32.xlu0 %v2794, 24
        %v4750 = vpop.permute.xlu0 %4749
        %4751 = vrot.lane.b32.xlu0 %v2795, 24
        %v4752 = vpop.permute.xlu0 %4751
        %4753 = vrot.lane.b32.xlu0 %v2796, 24
        %v4754 = vpop.permute.xlu0 %4753
        %4755 = vrot.lane.b32.xlu0 %v2797, 24
        %v4756 = vpop.permute.xlu0 %4755
        %4757 = vrot.lane.b32.xlu0 %v2798, 24
        %v4758 = vpop.permute.xlu0 %4757
        %4759 = vrot.lane.b32.xlu0 %v2799, 24
        %v4760 = vpop.permute.xlu0 %4759
        %4761 = vrot.lane.b32.xlu0 %v2800, 24
        %v4762 = vpop.permute.xlu0 %4761
        %4763 = vrot.lane.b32.xlu0 %v2801, 24
        %v4764 = vpop.permute.xlu0 %4763
        %4765 = vrot.lane.b32.xlu0 %v2802, 24
        %v4766 = vpop.permute.xlu0 %4765
        %4767 = vrot.lane.b32.xlu0 %v2803, 24
        %v4768 = vpop.permute.xlu0 %4767
        %4769 = vrot.lane.b32.xlu0 %v2804, 24
        %v4770 = vpop.permute.xlu0 %4769
        %4793 = vrot.lane.b32.xlu0 %v3243, 32
        %v4794 = vpop.permute.xlu0 %4793
        %4795 = vrot.lane.b32.xlu0 %v3244, 32
        %v4796 = vpop.permute.xlu0 %4795
        %4797 = vrot.lane.b32.xlu0 %v3245, 32
        %v4798 = vpop.permute.xlu0 %4797
        %4799 = vrot.lane.b32.xlu0 %v3246, 32
        %v4800 = vpop.permute.xlu0 %4799
        %4801 = vrot.lane.b32.xlu0 %v3247, 32
        %v4802 = vpop.permute.xlu0 %4801
        %4803 = vrot.lane.b32.xlu0 %v3248, 32
        %v4804 = vpop.permute.xlu0 %4803
        %4805 = vrot.lane.b32.xlu0 %v3249, 32
        %v4806 = vpop.permute.xlu0 %4805
        %4807 = vrot.lane.b32.xlu0 %v3250, 32
        %v4808 = vpop.permute.xlu0 %4807
        %4809 = vrot.lane.b32.xlu0 %v3251, 32
        %v4810 = vpop.permute.xlu0 %4809
        %4811 = vrot.lane.b32.xlu0 %v3252, 32
        %v4812 = vpop.permute.xlu0 %4811
        %4813 = vrot.lane.b32.xlu0 %v3253, 32
        %v4814 = vpop.permute.xlu0 %4813
        %4837 = vrot.lane.b32.xlu0 %v3692, 40
        %v4838 = vpop.permute.xlu0 %4837
        %4839 = vrot.lane.b32.xlu0 %v3693, 40
        %v4840 = vpop.permute.xlu0 %4839
        %4841 = vrot.lane.b32.xlu0 %v3694, 40
        %v4842 = vpop.permute.xlu0 %4841
        %4843 = vrot.lane.b32.xlu0 %v3695, 40
        %v4844 = vpop.permute.xlu0 %4843
        %4845 = vrot.lane.b32.xlu0 %v3696, 40
        %v4846 = vpop.permute.xlu0 %4845
        %4847 = vrot.lane.b32.xlu0 %v3697, 40
        %v4848 = vpop.permute.xlu0 %4847
        %4849 = vrot.lane.b32.xlu0 %v3698, 40
        %v4850 = vpop.permute.xlu0 %4849
        %4851 = vrot.lane.b32.xlu0 %v3699, 40
        %v4852 = vpop.permute.xlu0 %4851
        %4853 = vrot.lane.b32.xlu0 %v3700, 40
        %v4854 = vpop.permute.xlu0 %4853
        %4855 = vrot.lane.b32.xlu0 %v3701, 40
        %v4856 = vpop.permute.xlu0 %4855
        %4857 = vrot.lane.b32.xlu0 %v3702, 40
        %v4858 = vpop.permute.xlu0 %4857
        %4881 = vrot.lane.b32.xlu0 %v4141, 48
        %v4882 = vpop.permute.xlu0 %4881
        %4883 = vrot.lane.b32.xlu0 %v4142, 48
        %v4884 = vpop.permute.xlu0 %4883
        %4885 = vrot.lane.b32.xlu0 %v4143, 48
        %v4886 = vpop.permute.xlu0 %4885
        %4887 = vrot.lane.b32.xlu0 %v4144, 48
        %v4888 = vpop.permute.xlu0 %4887
        %4889 = vrot.lane.b32.xlu0 %v4145, 48
        %v4890 = vpop.permute.xlu0 %4889
        %4891 = vrot.lane.b32.xlu0 %v4146, 48
        %v4892 = vpop.permute.xlu0 %4891
        %4893 = vrot.lane.b32.xlu0 %v4147, 48
        %v4894 = vpop.permute.xlu0 %4893
        %4895 = vrot.lane.b32.xlu0 %v4148, 48
        %v4896 = vpop.permute.xlu0 %4895
        %4897 = vrot.lane.b32.xlu0 %v4149, 48
        %v4898 = vpop.permute.xlu0 %4897
        %4899 = vrot.lane.b32.xlu0 %v4150, 48
        %v4900 = vpop.permute.xlu0 %4899
        %4901 = vrot.lane.b32.xlu0 %v4151, 48
        %v4902 = vpop.permute.xlu0 %4901
        %4925 = vrot.lane.b32.xlu0 %v4590, 56
        %v4926 = vpop.permute.xlu0 %4925
        %4927 = vrot.lane.b32.xlu0 %v4591, 56
        %v4928 = vpop.permute.xlu0 %4927
        %4929 = vrot.lane.b32.xlu0 %v4592, 56
        %v4930 = vpop.permute.xlu0 %4929
        %4931 = vrot.lane.b32.xlu0 %v4593, 56
        %v4932 = vpop.permute.xlu0 %4931
        %4933 = vrot.lane.b32.xlu0 %v4594, 56
        %v4934 = vpop.permute.xlu0 %4933
        %4935 = vrot.lane.b32.xlu0 %v4595, 56
        %v4936 = vpop.permute.xlu0 %4935
        %4937 = vrot.lane.b32.xlu0 %v4596, 56
        %v4938 = vpop.permute.xlu0 %4937
        %4939 = vrot.lane.b32.xlu0 %v4597, 56
        %v4940 = vpop.permute.xlu0 %4939
        %4941 = vrot.lane.b32.xlu0 %v4598, 56
        %v4942 = vpop.permute.xlu0 %4941
        %4943 = vrot.lane.b32.xlu0 %v4599, 56
        %v4944 = vpop.permute.xlu0 %4943
        %4945 = vrot.lane.b32.xlu0 %v4600, 56
        %v4946 = vpop.permute.xlu0 %4945
        %v4958 = vsel %vm1054, %v1445, %v4662
        %v4959 = vsel %vm1054, %v1446, %v4664
        %v4960 = vsel %vm1054, %v1447, %v4666
        %v4961 = vsel %vm1054, %v1448, %v4668
        %v4962 = vsel %vm1054, %v1449, %v4670
        %v4963 = vsel %vm1054, %v1450, %v4672
        %v4964 = vsel %vm1054, %v1451, %v4674
        %v4965 = vsel %vm1054, %v1452, %v4676
        %v4966 = vsel %vm1054, %v1453, %v4678
        %v4967 = vsel %vm1054, %v1454, %v4680
        %v4968 = vsel %vm1054, %v1455, %v4682
        %vm4969 = vcmask 130048
        %v4970 = vsel %vm4969, %v4958, %v4706
        %v4971 = vsel %vm4969, %v4959, %v4708
        %v4972 = vsel %vm4969, %v4960, %v4710
        %v4973 = vsel %vm4969, %v4961, %v4712
        %v4974 = vsel %vm4969, %v4962, %v4714
        %v4975 = vsel %vm4969, %v4963, %v4716
        %v4976 = vsel %vm4969, %v4964, %v4718
        %v4977 = vsel %vm4969, %v4965, %v4720
        %v4978 = vsel %vm4969, %v4966, %v4722
        %v4979 = vsel %vm4969, %v4967, %v4724
        %v4980 = vsel %vm4969, %v4968, %v4726
        %vm4981 = vcmask 195584
        %v4982 = vsel %vm4981, %v4970, %v4750
        %v4983 = vsel %vm4981, %v4971, %v4752
        %v4984 = vsel %vm4981, %v4972, %v4754
        %v4985 = vsel %vm4981, %v4973, %v4756
        %v4986 = vsel %vm4981, %v4974, %v4758
        %v4987 = vsel %vm4981, %v4975, %v4760
        %v4988 = vsel %vm4981, %v4976, %v4762
        %v4989 = vsel %vm4981, %v4977, %v4764
        %v4990 = vsel %vm4981, %v4978, %v4766
        %v4991 = vsel %vm4981, %v4979, %v4768
        %v4992 = vsel %vm4981, %v4980, %v4770
        %vm4993 = vcmask 261120
        %v4994 = vsel %vm4993, %v4982, %v4794
        %v4995 = vsel %vm4993, %v4983, %v4796
        %v4996 = vsel %vm4993, %v4984, %v4798
        %v4997 = vsel %vm4993, %v4985, %v4800
        %v4998 = vsel %vm4993, %v4986, %v4802
        %v4999 = vsel %vm4993, %v4987, %v4804
        %v5000 = vsel %vm4993, %v4988, %v4806
        %v5001 = vsel %vm4993, %v4989, %v4808
        %v5002 = vsel %vm4993, %v4990, %v4810
        %v5003 = vsel %vm4993, %v4991, %v4812
        %v5004 = vsel %vm4993, %v4992, %v4814
        %vm5005 = vcmask 326656
        %v5006 = vsel %vm5005, %v4994, %v4838
        %v5007 = vsel %vm5005, %v4995, %v4840
        %v5008 = vsel %vm5005, %v4996, %v4842
        %v5009 = vsel %vm5005, %v4997, %v4844
        %v5010 = vsel %vm5005, %v4998, %v4846
        %v5011 = vsel %vm5005, %v4999, %v4848
        %v5012 = vsel %vm5005, %v5000, %v4850
        %v5013 = vsel %vm5005, %v5001, %v4852
        %v5014 = vsel %vm5005, %v5002, %v4854
        %v5015 = vsel %vm5005, %v5003, %v4856
        %v5016 = vsel %vm5005, %v5004, %v4858
        %vm5017 = vcmask 392192
        %v5018 = vsel %vm5017, %v5006, %v4882
        %v5019 = vsel %vm5017, %v5007, %v4884
        %v5020 = vsel %vm5017, %v5008, %v4886
        %v5021 = vsel %vm5017, %v5009, %v4888
        %v5022 = vsel %vm5017, %v5010, %v4890
        %v5023 = vsel %vm5017, %v5011, %v4892
        %v5024 = vsel %vm5017, %v5012, %v4894
        %v5025 = vsel %vm5017, %v5013, %v4896
        %v5026 = vsel %vm5017, %v5014, %v4898
        %v5027 = vsel %vm5017, %v5015, %v4900
        %v5028 = vsel %vm5017, %v5016, %v4902
        %vm5029 = vcmask 457728
        %v5030 = vsel %vm5029, %v5018, %v4926
        %v5031 = vsel %vm5029, %v5019, %v4928
        %v5032 = vsel %vm5029, %v5020, %v4930
        %v5033 = vsel %vm5029, %v5021, %v4932
        %v5034 = vsel %vm5029, %v5022, %v4934
        %v5035 = vsel %vm5029, %v5023, %v4936
        %v5036 = vsel %vm5029, %v5024, %v4938
        %v5037 = vsel %vm5029, %v5025, %v4940
        %v5038 = vsel %vm5029, %v5026, %v4942
        %v5039 = vsel %vm5029, %v5027, %v4944
        %v5040 = vsel %vm5029, %v5028, %v4946
        %v5041 = vpack.c.bf16 %v5031, %v5030
        %v5042 = vpack.c.bf16 %v5033, %v5032
        %v5043 = vpack.c.bf16 %v5035, %v5034
        %v5044 = vpack.c.bf16 %v5037, %v5036
        %v5045 = vpack.c.bf16 %v5039, %v5038
        %v5046 = vpack.c.bf16 %v5040, %v5040
        %v5047 = vpack.c.bf16 %v1951, %v1502
        %v5048 = vpack.c.bf16 %v2849, %v2400
        %v5049 = vpack.c.bf16 %v3747, %v3298
        %v5050 = vpack.c.bf16 %v4645, %v4196
        %v5051 = vld [vmem:[%s12] sm:$0x1]
        %v5053 = vlaneseq
        %v5054 = vshrl.u32 %v5053, 7
        %v5055 = vsub.s32 0, %v5054
        %v5056 = vrot.slane %v5051, %v5055
        %v5059 = vsel %vm633, %v5041, 0
        %v5062 = vsel %vm633, %v5042, 0
        %v5065 = vsel %vm633, %v5043, 0
        %v5068 = vsel %vm633, %v5044, 0
        %v5071 = vsel %vm633, %v5045, 0
        %v5074 = vsel %vm633, %v5046, 0
        %5076 = vmatprep.subr.bf16.mxu0 0
        %5077 = vmatpush1.bf16.msra.mxu0 %v5047
        %5078 = vmatprep.subr.bf16.mxu0 0
        %5079 = vmatpush1.bf16.msra.mxu0 %v5048
        %5080 = vmatprep.subr.bf16.mxu0 0
        %5081 = vmatpush1.bf16.msra.mxu0 %v5049
        %5082 = vmatprep.subr.bf16.mxu0 0
        %5083 = vmatpush1.bf16.msra.mxu0 %v5050
        %5084 = vmatprep.subr.bf16.mxu0 0
        %5085 = vmatpush1.bf16.msra.mxu0 0
        %5086 = vmatprep.subr.bf16.mxu0 0
        %5087 = vmatpush1.bf16.msra.mxu0 0
        %5088 = vmatprep.subr.bf16.mxu0 0
        %5089 = vmatpush1.bf16.msra.mxu0 0
        %5090 = vmatprep.subr.bf16.mxu0 0
        %5091 = vmatpush1.bf16.msra.mxu0 0
        %5092 = vmatprep.subr.bf16.mxu0 0
        %5093 = vmatpush1.bf16.msra.mxu0 0
        %5094 = vmatprep.subr.bf16.mxu0 0
        %5095 = vmatpush1.bf16.msra.mxu0 0
        %5096 = vmatprep.subr.bf16.mxu0 0
        %5097 = vmatpush1.bf16.msra.mxu0 0
        %5098 = vmatprep.subr.bf16.mxu0 0
        %5099 = vmatpush1.bf16.msra.mxu0 0
        %5100 = vmatprep.subr.bf16.mxu0 0
        %5101 = vmatpush1.bf16.msra.mxu0 0
        %5102 = vmatprep.subr.bf16.mxu0 0
        %5103 = vmatpush1.bf16.msra.mxu0 0
        %5104 = vmatprep.subr.bf16.mxu0 0
        %5105 = vmatpush1.bf16.msra.mxu0 0
        %5106 = vmatprep.subr.bf16.mxu0 0
        %5107 = vmatpush1.bf16.msra.mxu0 0
        %5108 = vmatprep.mubr.bf16.mxu0 0
        %5109 = vmatmul.mubr.bf16.gmra.mrb[0].mxu0 %v5059
        %v5110 = vpop.f32.mrb[0].mxu0
        %v5111 = vadd.f32 %v5056, %v5110
        %v5112 = vpop.f32.mrb[0].mxu0
        %v5113 = vpop.f32.mrb[0].mxu0
        %v5114 = vadd.f32 %v5056, %v5113
        %v5115 = vpop.f32.mrb[0].mxu0
        %5116 = vmatprep.mubr.bf16.mxu0 0
        %5117 = vmatmul.mubr.bf16.gmra.mrb[0].mxu0 %v5062
        %v5118 = vpop.f32.mrb[0].mxu0
        %v5119 = vadd.f32 %v5056, %v5118
        %v5120 = vpop.f32.mrb[0].mxu0
        %v5121 = vpop.f32.mrb[0].mxu0
        %v5122 = vadd.f32 %v5056, %v5121
        %v5123 = vpop.f32.mrb[0].mxu0
        %5124 = vmatprep.mubr.bf16.mxu0 0
        %5125 = vmatmul.mubr.bf16.gmra.mrb[0].mxu0 %v5065
        %v5126 = vpop.f32.mrb[0].mxu0
        %v5127 = vadd.f32 %v5056, %v5126
        %v5128 = vpop.f32.mrb[0].mxu0
        %v5129 = vpop.f32.mrb[0].mxu0
        %v5130 = vadd.f32 %v5056, %v5129
        %v5131 = vpop.f32.mrb[0].mxu0
        %5132 = vmatprep.mubr.bf16.mxu0 0
        %5133 = vmatmul.mubr.bf16.gmra.mrb[0].mxu0 %v5068
        %v5134 = vpop.f32.mrb[0].mxu0
        %v5135 = vadd.f32 %v5056, %v5134
        %v5136 = vpop.f32.mrb[0].mxu0
        %v5137 = vpop.f32.mrb[0].mxu0
        %v5138 = vadd.f32 %v5056, %v5137
        %v5139 = vpop.f32.mrb[0].mxu0
        %5140 = vmatprep.mubr.bf16.mxu0 0
        %5141 = vmatmul.mubr.bf16.gmra.mrb[0].mxu0 %v5071
        %v5142 = vpop.f32.mrb[0].mxu0
        %v5143 = vadd.f32 %v5056, %v5142
        %v5144 = vpop.f32.mrb[0].mxu0
        %v5145 = vpop.f32.mrb[0].mxu0
        %v5146 = vadd.f32 %v5056, %v5145
        %v5147 = vpop.f32.mrb[0].mxu0
        %5148 = vmatprep.mubr.bf16.mxu0 0
        %5149 = vmatmul.mubr.bf16.gmra.mrb[0].mxu0 %v5074
        %v5150 = vpop.f32.mrb[0].mxu0
        %v5151 = vadd.f32 %v5056, %v5150
        %v5152 = vpop.f32.mrb[0].mxu0
        %v5153 = vpop.f32.mrb[0].mxu0
        %v5154 = vpop.f32.mrb[0].mxu0
        %5155 = vdwg.mxu0
        %5157 = vrot.lane.b32.xlu0 %v1759, 8
        %v5158 = vpop.permute.xlu0 %5157
        %5161 = vrot.lane.b32.xlu0 %v2208, 16
        %v5162 = vpop.permute.xlu0 %5161
        %5165 = vrot.lane.b32.xlu0 %v2657, 24
        %v5166 = vpop.permute.xlu0 %5165
        %5169 = vrot.lane.b32.xlu0 %v3106, 32
        %v5170 = vpop.permute.xlu0 %5169
        %5173 = vrot.lane.b32.xlu0 %v3555, 40
        %v5174 = vpop.permute.xlu0 %5173
        %5177 = vrot.lane.b32.xlu0 %v4004, 48
        %v5178 = vpop.permute.xlu0 %5177
        %5181 = vrot.lane.b32.xlu0 %v4453, 56
        %v5182 = vpop.permute.xlu0 %5181
        %v5184 = vsel %vm1054, %v1301, %v5158
        %v5185 = vsel %vm4969, %v5184, %v5162
        %v5186 = vsel %vm4981, %v5185, %v5166
        %v5187 = vsel %vm4993, %v5186, %v5170
        %v5188 = vsel %vm5005, %v5187, %v5174
        %v5189 = vsel %vm5017, %v5188, %v5178
        %v5190 = vsel %vm5029, %v5189, %v5182
        %v5191 = vld [vmem:[%s13] sm:$0xff]
        %v5192 = vld [vmem:[%s13 + $0x8] sm:$0xff]
        %v5193 = vld [vmem:[%s13 + $0x10] sm:$0xff]
        %v5194 = vld [vmem:[%s13 + $0x18] sm:$0xff]
        %v5195 = vld [vmem:[%s13 + $0x20] sm:$0xff]
        %v5196 = vld [vmem:[%s13 + $0x28] sm:$0xff]
        %v5197 = vld [vmem:[%s13 + $0x30] sm:$0xff]
        %v5198 = vld [vmem:[%s13 + $0x38] sm:$0xff]
        %v5199 = vpack.c.bf16 %v5190, %v5190
        %v5200 = vpack.c.bf16 %v5192, %v5191
        %v5201 = vpack.c.bf16 %v5194, %v5193
        %v5202 = vpack.c.bf16 %v5196, %v5195
        %v5203 = vpack.c.bf16 %v5198, %v5197
        %v5204 = vld [vmem:[%s14] sm:$0x1]
        %v5206 = vlaneseq
        %v5207 = vshrl.u32 %v5206, 7
        %v5208 = vsub.s32 0, %v5207
        %v5209 = vrot.slane %v5204, %v5208
        %v5212 = vsel %vm633, %v5199, 0
        %5214 = vmatprep.subr.bf16.mxu0 0
        %5215 = vmatpush1.bf16.msra.mxu0 %v5200
        %5216 = vmatprep.subr.bf16.mxu0 0
        %5217 = vmatpush1.bf16.msra.mxu0 %v5201
        %5218 = vmatprep.subr.bf16.mxu0 0
        %5219 = vmatpush1.bf16.msra.mxu0 %v5202
        %5220 = vmatprep.subr.bf16.mxu0 0
        %5221 = vmatpush1.bf16.msra.mxu0 %v5203
        %5222 = vmatprep.subr.bf16.mxu0 0
        %5223 = vmatpush1.bf16.msra.mxu0 0
        %5224 = vmatprep.subr.bf16.mxu0 0
        %5225 = vmatpush1.bf16.msra.mxu0 0
        %5226 = vmatprep.subr.bf16.mxu0 0
        %5227 = vmatpush1.bf16.msra.mxu0 0
        %5228 = vmatprep.subr.bf16.mxu0 0
        %5229 = vmatpush1.bf16.msra.mxu0 0
        %5230 = vmatprep.subr.bf16.mxu0 0
        %5231 = vmatpush1.bf16.msra.mxu0 0
        %5232 = vmatprep.subr.bf16.mxu0 0
        %5233 = vmatpush1.bf16.msra.mxu0 0
        %5234 = vmatprep.subr.bf16.mxu0 0
        %5235 = vmatpush1.bf16.msra.mxu0 0
        %5236 = vmatprep.subr.bf16.mxu0 0
        %5237 = vmatpush1.bf16.msra.mxu0 0
        %5238 = vmatprep.subr.bf16.mxu0 0
        %5239 = vmatpush1.bf16.msra.mxu0 0
        %5240 = vmatprep.subr.bf16.mxu0 0
        %5241 = vmatpush1.bf16.msra.mxu0 0
        %5242 = vmatprep.subr.bf16.mxu0 0
        %5243 = vmatpush1.bf16.msra.mxu0 0
        %5244 = vmatprep.subr.bf16.mxu0 0
        %5245 = vmatpush1.bf16.msra.mxu0 0
        %5246 = vmatprep.mubr.bf16.mxu0 0
        %5247 = vmatmul.mubr.bf16.gmra.mrb[0].mxu0 %v5212
        %v5248 = vpop.f32.mrb[0].mxu0
        %v5249 = vadd.f32 %v5209, %v5248
        %v5250 = vpop.f32.mrb[0].mxu0
        %v5251 = vpop.f32.mrb[0].mxu0
        %v5252 = vpop.f32.mrb[0].mxu0
        %5253 = vdwg.mxu0
        %v5254 = vld [vmem:[%s15] sm:$0x1]
        %v5256 = vlaneseq
        %v5257 = vshrl.u32 %v5256, 7
        %v5258 = vsub.s32 0, %v5257
        %v5259 = vrot.slane %v5254, %v5258
        %v5261 = vmul.f32 %v5259, %v5111
        %v5262 = vmul.f32 %v5259, %v5114
        %v5263 = vmul.f32 %v5259, %v5119
        %v5264 = vmul.f32 %v5259, %v5122
        %v5265 = vmul.f32 %v5259, %v5127
        %v5266 = vmul.f32 %v5259, %v5130
        %v5267 = vmul.f32 %v5259, %v5135
        %v5268 = vmul.f32 %v5259, %v5138
        %v5269 = vmul.f32 %v5259, %v5143
        %v5270 = vmul.f32 %v5259, %v5146
        %v5271 = vmul.f32 %v5259, %v5151
        %v5272 = vadd.f32 %v619, %v5261
        %v5273 = vadd.f32 %v620, %v5262
        %v5274 = vadd.f32 %v621, %v5263
        %v5275 = vadd.f32 %v622, %v5264
        %v5276 = vadd.f32 %v623, %v5265
        %v5277 = vadd.f32 %v624, %v5266
        %v5278 = vadd.f32 %v625, %v5267
        %v5279 = vadd.f32 %v626, %v5268
        %v5280 = vadd.f32 %v627, %v5269
        %v5281 = vadd.f32 %v628, %v5270
        %v5282 = vadd.f32 %v629, %v5271
        %5283 = vst.msk [vmem:[%s617] sm:$0xff] %vm633, %v5272
        %5284 = vst.msk [vmem:[%s617 + $0x8] sm:$0xff] %vm633, %v5273
        %5285 = vst.msk [vmem:[%s617 + $0x10] sm:$0xff] %vm633, %v5274
        %5286 = vst.msk [vmem:[%s617 + $0x18] sm:$0xff] %vm633, %v5275
        %5287 = vst.msk [vmem:[%s617 + $0x20] sm:$0xff] %vm633, %v5276
        %5288 = vst.msk [vmem:[%s617 + $0x28] sm:$0xff] %vm633, %v5277
        %5289 = vst.msk [vmem:[%s617 + $0x30] sm:$0xff] %vm633, %v5278
        %5290 = vst.msk [vmem:[%s617 + $0x38] sm:$0xff] %vm633, %v5279
        %5291 = vst.msk [vmem:[%s617 + $0x40] sm:$0xff] %vm633, %v5280
        %5292 = vst.msk [vmem:[%s617 + $0x48] sm:$0xff] %vm633, %v5281
        %5293 = vst.msk [vmem:[%s617 + $0x50] sm:$0xf] %vm664, %v5282
        %v5294 = vld [vmem:[%s16] sm:$0x1]
        %v5296 = vlaneseq
        %v5297 = vshrl.u32 %v5296, 7
        %v5298 = vsub.s32 0, %v5297
        %v5299 = vrot.slane %v5294, %v5298
        %v5301 = vmul.f32 %v5299, %v5249
        %v5302 = vadd.f32 %v630, %v5301
        %5303 = vst.msk [vmem:[%s600] sm:$0xff] %vm815, %v5302
        %p5304 = scmp.lt.s32.totalorder %s33, 1
        %s5305 = scalar_select %p5304, %s33, 1
        %s5306 = smul.addr %s5305, 11
        %s5307 = smul.addr %s5306, 8
        %s5308 = scalar_lea.vmem %s17, %s5307
        %s5309 = sand.u32 %s439, 1
        %s5310 = scalar_lea.sflag [#allocation3], %s5309
        %s5311 = sand.u32 %s439, 1
        %s5312 = smul.addr %s5311, 8
        %s5313 = scalar_lea.vmem [#allocation2], %s5312
        // Predicated region
        $region89: #{bi_attention_block_forward.1} parent=87 // pred_check
          %p5314 = pneg %p423
        $region90: #{bi_attention_block_forward.1} parent=87 // pred_check_branch
          %5316 = sbr.rel (%p5314) target = $region92
        $region91: #{bi_attention_block_forward.1} parent=87 // pred_region
          _
        $region92: #{bi_attention_block_forward.1} parent=87 // pred_fallthru
          _
        // Predicated region
        $region93: #{bi_attention_block_forward.1} parent=87 // pred_check
          %p5317 = pneg %p449
        $region94: #{bi_attention_block_forward.1} parent=87 // pred_check_branch
          %5319 = sbr.rel (%p5317) target = $region96
        $region95: #{bi_attention_block_forward.1} parent=87 // pred_region
          %s5321 = ssub.s32 128, 128
          %5322 = vsyncadd %s5310, %s5321
          %s5323 = smul.addr %s33, 128
          %s5324 = scalar_lea.hbm %s18, %s5323
          %s5326 = sshll.u32 %s5313, 4
          %s5327 = int_to_ptr.vmem [resolvable:$true] %s5326
          %5329 = dma.vmem_to_hbm [thread:$0]  %s5327, 128, %s5324, %s5310
        $region96: #{bi_attention_block_forward.1} parent=87 // pred_fallthru
          _
      $region88: #{bi_attention_block_forward.1} parent=5 // pred_fallthru
        _
      %p5330 = scmp.le.s32.totalorder 2, %s28
      // Predicated region
      $region97: #{bi_attention_block_forward.1} parent=5 // pred_check
        %p5331 = pneg %p5330
      $region98: #{bi_attention_block_forward.1} parent=5 // pred_check_branch
        %5333 = sbr.rel (%p5331) target = $region100
      $region99: #{bi_attention_block_forward.1} parent=5 // pred_region
        %s5334 = ssub.s32 %s28, 2
        // Predicated region
        $region101: #{bi_attention_block_forward.1} parent=99 // pred_check
          %p5335 = pneg %p429
        $region102: #{bi_attention_block_forward.1} parent=99 // pred_check_branch
          %5337 = sbr.rel (%p5335) target = $region104
        $region103: #{bi_attention_block_forward.1} parent=99 // pred_region
          %p5338 = scmp.lt.s32.totalorder %s34, 1
          %s5339 = scalar_select %p5338, %s34, 1
          %s5340 = smul.addr %s5339, 11
          %s5341 = smul.addr %s5340, 8
          %s5342 = scalar_lea.vmem %s17, %s5341
        $region104: #{bi_attention_block_forward.1} parent=99 // pred_fallthru
          _
        // Predicated region
        $region105: #{bi_attention_block_forward.1} parent=99 // pred_check
          %p5343 = pneg %p455
        $region106: #{bi_attention_block_forward.1} parent=99 // pred_check_branch
          %5345 = sbr.rel (%p5343) target = $region108
        $region107: #{bi_attention_block_forward.1} parent=99 // pred_region
          %s5346 = sand.u32 %s440, 1
          %s5347 = scalar_lea.sflag [#allocation3], %s5346
          %s5348 = sand.u32 %s440, 1
          %s5349 = smul.addr %s5348, 8
          %s5350 = scalar_lea.vmem [#allocation2], %s5349
          %5351 = dma.done %s5347, 128
        $region108: #{bi_attention_block_forward.1} parent=99 // pred_fallthru
          _
      $region100: #{bi_attention_block_forward.1} parent=5 // pred_fallthru
        _
    $region6: #{bi_attention_block_forward.1} parent=1 // loop_footer
      %s32 = sadd.s32 1, %s28
    $region7: #{bi_attention_block_forward.1} parent=1 // loop_footer_branch
      %27 = sbr.rel target = $region3
    $region8: #{bi_attention_block_forward.1} parent=1 // loop_exit
      _
    %5352 = vsyncpa [#allocation3], 1
    %s5353 = scalar_lea.sflag [#allocation3], 1
    %5354 = vsyncpa %s5353, 1

</llo_original>
